<compile_context>
chip_gen: v6e
topology: v6e:2x2x1
jax: 0.10.0
libtpu: 0.0.40
codegen_flags: <defaults>
</compile_context>

<pallas_src>
import functools

import numpy as np
import jax
import jax.numpy as jnp
from jax.experimental import pallas as pl
from jax.experimental.pallas import tpu as pltpu

# ---------------------------------------------------------------- CloudCrop hyper-parameters
NSAMPLE = 16                      # points per cylinder group
SEED_FEAT_DIM = 3                 # CloudCrop is used with features=None -> channels = local xyz
CYLINDER_RADIUS = 0.05
HMIN = -0.02
HMAX_LIST = (0.01, 0.02, 0.03, 0.04)
NUM_DEPTH = len(HMAX_LIST)
MLP_DIMS = (SEED_FEAT_DIM, 64, 128, 256)
BN_EPS = 1e-5

GROUP_TILE = 64                   # groups per Pallas tile -> GROUP_TILE * NSAMPLE = 1024 rows/tile


# ---------------------------------------------------------------- Pallas kernel
def _sharedmlp_maxpool_kernel(x_ref, w1_ref, b1_ref, w2_ref, b2_ref, w3_ref, b3_ref, o_ref,
                              *, groups, nsample):
    # x_ref: (groups * nsample, 3) f32 seed-frame xyz of the grouped points.
    x = x_ref[...]
    w1 = w1_ref[...]                                             # (3, 64) f32, BN scale folded in
    # layer 1 (3 -> 64): K=3 is far too small for the MXU -> three broadcast FMAs on the VPU.
    h1 = (x[:, 0:1] * w1[0:1, :]
          + x[:, 1:2] * w1[1:2, :]
          + x[:, 2:3] * w1[2:3, :]
          + b1_ref[...])
    h1 = jnp.maximum(h1, 0.0)
    # layers 2/3 (64 -> 128 -> 256): bf16 MXU matmuls, f32 accumulation, folded BN shift, ReLU.
    h2 = jnp.dot(h1.astype(jnp.bfloat16), w2_ref[...],
                 preferred_element_type=jnp.float32) + b2_ref[...]
    h2 = jnp.maximum(h2, 0.0)
    h3 = jnp.dot(h2.astype(jnp.bfloat16), w3_ref[...],
                 preferred_element_type=jnp.float32) + b3_ref[...]
    h3 = jnp.maximum(h3, 0.0)                                    # (groups*nsample, 256)
    # fused max-pool over the nsample axis -> lane-dense (groups, 256) output block.
    o_ref[...] = jnp.max(h3.reshape(groups, nsample, h3.shape[-1]), axis=1)


def pallas_sharedmlp_maxpool(grouped_xyz, params, *, group_tile=GROUP_TILE):
    """grouped_xyz: (G, nsample, 3) f32, G = B*num_seed*num_depth. Returns (G, 256) f32."""
    G, ns, cin = grouped_xyz.shape
    cout = MLP_DIMS[-1]
    g_pad = pl.cdiv(G, group_tile) * group_tile
    x = grouped_xyz.reshape(G * ns, cin)
    if g_pad != G:
        x = jnp.concatenate([x, jnp.zeros(((g_pad - G) * ns, cin), x.dtype)], axis=0)
    tm = group_tile * ns
    out = pl.pallas_call(
        functools.partial(_sharedmlp_maxpool_kernel, groups=group_tile, nsample=ns),
        out_shape=jax.ShapeDtypeStruct((g_pad, cout), jnp.float32),
        grid=(g_pad // group_tile,),
        in_specs=[
            pl.BlockSpec((tm, cin), lambda i: (i, 0)),                      # (1024, 3) row tile
            pl.BlockSpec((MLP_DIMS[0], MLP_DIMS[1]), lambda i: (0, 0)),     # resident weights
            pl.BlockSpec((1, MLP_DIMS[1]), lambda i: (0, 0)),
            pl.BlockSpec((MLP_DIMS[1], MLP_DIMS[2]), lambda i: (0, 0)),
            pl.BlockSpec((1, MLP_DIMS[2]), lambda i: (0, 0)),
            pl.BlockSpec((MLP_DIMS[2], MLP_DIMS[3]), lambda i: (0, 0)),
            pl.BlockSpec((1, MLP_DIMS[3]), lambda i: (0, 0)),
        ],
        out_specs=pl.BlockSpec((group_tile, cout), lambda i: (i, 0)),
        compiler_params=pltpu.CompilerParams(
            dimension_semantics=("parallel",),
            vmem_limit_bytes=32 * 1024 * 1024),
    )(x, params['w1'], params['b1'], params['w2'], params['b2'],
      params['w3'], params['b3'])
    return out[:G]


# ---------------------------------------------------------------- JAX glue: cylinder grouping
def cylinder_query_and_group(pointcloud, seed_xyz, vp_rot, *, radius=CYLINDER_RADIUS,
                             hmin=HMIN, hmax_list=HMAX_LIST, nsample=NSAMPLE):
    """CylinderQueryAndGroup (use_xyz=True, rotate_xyz=True, normalize_xyz=False) for all depths.

    Returns grouped seed-frame xyz: (B, num_seed, num_depth, nsample, 3).
    """
    B, N, _ = pointcloud.shape
    S = seed_xyz.shape[1]
    D = len(hmax_list)
    # seed-frame coordinates of every cloud point: (p - seed) @ R
    rel = pointcloud[:, None, :, :] - seed_xyz[:, :, None, :]              # (B, S, N, 3)
    local = jnp.einsum('bsnc,bscd->bsnd', rel, vp_rot)                     # (B, S, N, 3)
    x_rot = local[..., 0]
    radial2 = local[..., 1] ** 2 + local[..., 2] ** 2
    hmax = jnp.asarray(hmax_list, jnp.float32)                             # (D,)
    mask = ((radial2[:, :, None, :] < radius * radius)
            & (x_rot[:, :, None, :] > hmin)
            & (x_rot[:, :, None, :] < hmax[None, None, :, None]))          # (B, S, D, N)
    # First `nsample` hits in index order; empty slots take the first hit; index 0 if no hit.
    # (Matches the serial counter in the CUDA cylinder_query kernel.)
    idx = jnp.arange(N, dtype=jnp.int32)
    keys = jnp.where(mask, idx, jnp.int32(N))
    sel = jnp.sort(keys, axis=-1)[..., :nsample]                           # (B, S, D, nsample)
    first = sel[..., :1]
    fill = jnp.where(first >= N, 0, first)
    sel = jnp.where(sel >= N, fill, sel)
    local_b = jnp.broadcast_to(local[:, :, None, :, :], (B, S, D, N, 3))
    sel_b = jnp.broadcast_to(sel[..., None], (B, S, D, nsample, 3))
    grouped = jnp.take_along_axis(local_b, sel_b, axis=3)                  # (B, S, D, nsample, 3)
    return grouped


# ---------------------------------------------------------------- forward
def cloudcrop_forward(seed_xyz, pointcloud, vp_rot, params):
    """CloudCrop.forward (features=None path). Returns (B, 256, num_seed, num_depth)."""
    # TODO(synk): the `features is not None` concat path and the `ret_points=True` early return
    #             of the torch module are not implemented (GraspNet calls it with features=None).
    B, S, _ = seed_xyz.shape
    grouped = cylinder_query_and_group(pointcloud, seed_xyz, vp_rot)       # (B, S, D, ns, 3)
    grouped_flat = grouped.reshape(B * S * NUM_DEPTH, NSAMPLE, SEED_FEAT_DIM)
    feat = pallas_sharedmlp_maxpool(grouped_flat, params)                  # (B*S*D, 256)
    vp_features = feat.reshape(B, S, NUM_DEPTH, MLP_DIMS[-1]).transpose(0, 3, 1, 2)
    return vp_features                                                     # (B, 256, S, D)


# ---------------------------------------------------------------- params
def init_params(key):
    """Random Conv2d(1x1)+BatchNorm2d params for SharedMLP([3,64,128,256]); the BN scale is folded
    into the conv weight columns, only the shift survives as a per-layer bias."""
    # TODO(synk): training-mode BatchNorm batch statistics are not reproduced (running stats used).
    ks = jax.random.split(key, 3 * 5)
    params = {}
    for li in range(3):
        cin, cout = MLP_DIMS[li], MLP_DIMS[li + 1]
        kw, kg, kb, km, kv = ks[5 * li:5 * li + 5]
        w = jax.random.normal(kw, (cin, cout), jnp.float32) / np.sqrt(cin)
        gamma = 1.0 + 0.1 * jax.random.normal(kg, (cout,), jnp.float32)
        beta = 0.1 * jax.random.normal(kb, (cout,), jnp.float32)
        mean = 0.05 * jax.random.normal(km, (cout,), jnp.float32)
        var = 1.0 + jnp.abs(0.1 * jax.random.normal(kv, (cout,), jnp.float32))
        scale = gamma / jnp.sqrt(var + BN_EPS)
        w_fold = w * scale[None, :]                 # BN scale folded into the conv weights
        b_fold = (beta - scale * mean)[None, :]     # BN shift kept as the only bias
        li1 = li + 1
        if li == 0:
            params[f'w{li1}'] = w_fold                          # f32: first layer is VPU FMAs
        else:
            params[f'w{li1}'] = w_fold.astype(jnp.bfloat16)     # bf16 MXU operand
        params[f'b{li1}'] = b_fold                              # f32 shift
    return params


# ---------------------------------------------------------------- pure-JAX reference (for check)
def reference_sharedmlp_maxpool(grouped_xyz, params):
    x = grouped_xyz.reshape(-1, SEED_FEAT_DIM)
    h1 = jnp.maximum(x @ params['w1'] + params['b1'], 0.0)
    h2 = jnp.maximum(h1 @ params['w2'].astype(jnp.float32) + params['b2'], 0.0)
    h3 = jnp.maximum(h2 @ params['w3'].astype(jnp.float32) + params['b3'], 0.0)
    return jnp.max(h3.reshape(grouped_xyz.shape[0], NSAMPLE, -1), axis=1)


def _approach_to_rotation(towards):
    """Rotation matrices from approach vectors (batch_viewpoint_params_to_matrix with angle=0)."""
    x = towards / (jnp.linalg.norm(towards, axis=-1, keepdims=True) + 1e-8)
    y = jnp.stack([-x[..., 1], x[..., 0], jnp.zeros_like(x[..., 0])], axis=-1)
    deg = jnp.linalg.norm(y, axis=-1, keepdims=True) < 1e-6
    y = jnp.where(deg, jnp.asarray([0.0, 1.0, 0.0], x.dtype), y)
    y = y / jnp.linalg.norm(y, axis=-1, keepdims=True)
    z = jnp.cross(x, y)
    return jnp.stack([x, y, z], axis=-1)          # (..., 3, 3), columns = frame axes


# ---------------------------------------------------------------- main
if __name__ == "__main__":
    B, N, S = 2, 256, 64                          # batch, cloud points, seed points
    key = jax.random.PRNGKey(0)
    k_pc, k_rot, k_par = jax.random.split(key, 3)
    params = init_params(k_par)

    pointcloud = 0.1 * jax.random.normal(k_pc, (B, N, 3), jnp.float32)     # (B, num_points, 3)
    seed_xyz = pointcloud[:, :S, :]                                        # (B, num_seed, 3)
    vp_rot = _approach_to_rotation(jax.random.normal(k_rot, (B, S, 3), jnp.float32))  # (B,S,3,3)

    fwd = jax.jit(lambda sx, pc, rot: cloudcrop_forward(sx, pc, rot, params))
    vp_features = fwd(seed_xyz, pointcloud, vp_rot)
    jax.block_until_ready(vp_features)
    assert vp_features.shape == (B, MLP_DIMS[-1], S, NUM_DEPTH)

    # correctness of the fused Pallas MLP + max-pool against a pure-JAX reference (bf16 tolerance)
    grouped = cylinder_query_and_group(pointcloud, seed_xyz, vp_rot)
    grouped = grouped.reshape(B * S * NUM_DEPTH, NSAMPLE, SEED_FEAT_DIM)
    got = pallas_sharedmlp_maxpool(grouped, params)
    ref = reference_sharedmlp_maxpool(grouped, params)
    np.testing.assert_allclose(np.asarray(got), np.asarray(ref), rtol=5e-2, atol=1e-2)

    print("KERNEL_OK")
</pallas_src>

<mosaic_0001>
module attributes {stable_mosaic.version = 11 : i64} {
  func.func @_sharedmlp_maxpool_kernel(%arg0: i32, %arg1: memref<1024x3xf32, #tpu.memory_space<vmem>>, %arg2: memref<3x64xf32, #tpu.memory_space<vmem>>, %arg3: memref<1x64xf32, #tpu.memory_space<vmem>>, %arg4: memref<64x128xbf16, #tpu.memory_space<vmem>>, %arg5: memref<1x128xf32, #tpu.memory_space<vmem>>, %arg6: memref<128x256xbf16, #tpu.memory_space<vmem>>, %arg7: memref<1x256xf32, #tpu.memory_space<vmem>>, %arg8: memref<64x256xf32, #tpu.memory_space<vmem>>) attributes {dimension_semantics = [#tpu.dimension_semantics<parallel>], iteration_bounds = array<i64: 8>, scalar_prefetch = 0 : i64, scratch_operands = 0 : i64, tpu.core_type = #tpu.core_type<tc>, window_params = [{transform_indices = @transform_0, window_bounds = array<i64: 1024, 3>}, {pipeline_mode = #tpu.pipeline_mode<synchronous>, transform_indices = @transform_1, window_bounds = array<i64: 3, 64>}, {pipeline_mode = #tpu.pipeline_mode<synchronous>, transform_indices = @transform_2, window_bounds = array<i64: 1, 64>}, {pipeline_mode = #tpu.pipeline_mode<synchronous>, transform_indices = @transform_3, window_bounds = array<i64: 64, 128>}, {pipeline_mode = #tpu.pipeline_mode<synchronous>, transform_indices = @transform_4, window_bounds = array<i64: 1, 128>}, {pipeline_mode = #tpu.pipeline_mode<synchronous>, transform_indices = @transform_5, window_bounds = array<i64: 128, 256>}, {pipeline_mode = #tpu.pipeline_mode<synchronous>, transform_indices = @transform_6, window_bounds = array<i64: 1, 256>}, {transform_indices = @transform_7, window_bounds = array<i64: 64, 256>}]} {
    %c0 = arith.constant 0 : index
    %c0_0 = arith.constant 0 : index
    %0 = vector.load %arg1[%c0, %c0_0] : memref<1024x3xf32, #tpu.memory_space<vmem>>, vector<1024x3xf32>
    %c0_1 = arith.constant 0 : index
    %c0_2 = arith.constant 0 : index
    %1 = vector.load %arg2[%c0_1, %c0_2] : memref<3x64xf32, #tpu.memory_space<vmem>>, vector<3x64xf32>
    %2 = vector.extract_strided_slice %0 {offsets = [0, 0], sizes = [1024, 1], strides = [1, 1]} : vector<1024x3xf32> to vector<1024x1xf32>
    %3 = vector.extract_strided_slice %1 {offsets = [0, 0], sizes = [1, 64], strides = [1, 1]} : vector<3x64xf32> to vector<1x64xf32>
    %4 = vector.broadcast %2 : vector<1024x1xf32> to vector<1024x64xf32>
    %5 = vector.broadcast %3 : vector<1x64xf32> to vector<1024x64xf32>
    %6 = arith.mulf %4, %5 : vector<1024x64xf32>
    %7 = vector.extract_strided_slice %0 {offsets = [0, 1], sizes = [1024, 1], strides = [1, 1]} : vector<1024x3xf32> to vector<1024x1xf32>
    %8 = vector.extract_strided_slice %1 {offsets = [1, 0], sizes = [1, 64], strides = [1, 1]} : vector<3x64xf32> to vector<1x64xf32>
    %9 = vector.broadcast %7 : vector<1024x1xf32> to vector<1024x64xf32>
    %10 = vector.broadcast %8 : vector<1x64xf32> to vector<1024x64xf32>
    %11 = arith.mulf %9, %10 : vector<1024x64xf32>
    %12 = arith.addf %6, %11 : vector<1024x64xf32>
    %13 = vector.extract_strided_slice %0 {offsets = [0, 2], sizes = [1024, 1], strides = [1, 1]} : vector<1024x3xf32> to vector<1024x1xf32>
    %14 = vector.extract_strided_slice %1 {offsets = [2, 0], sizes = [1, 64], strides = [1, 1]} : vector<3x64xf32> to vector<1x64xf32>
    %15 = vector.broadcast %13 : vector<1024x1xf32> to vector<1024x64xf32>
    %16 = vector.broadcast %14 : vector<1x64xf32> to vector<1024x64xf32>
    %17 = arith.mulf %15, %16 : vector<1024x64xf32>
    %18 = arith.addf %12, %17 : vector<1024x64xf32>
    %c0_3 = arith.constant 0 : index
    %c0_4 = arith.constant 0 : index
    %19 = vector.load %arg3[%c0_3, %c0_4] : memref<1x64xf32, #tpu.memory_space<vmem>>, vector<1x64xf32>
    %20 = vector.broadcast %19 : vector<1x64xf32> to vector<1024x64xf32>
    %21 = arith.addf %18, %20 : vector<1024x64xf32>
    %cst = arith.constant 0.000000e+00 : f32
    %22 = vector.broadcast %cst : f32 to vector<1024x64xf32>
    %23 = arith.maximumf %21, %22 : vector<1024x64xf32>
    %24 = arith.truncf %23 : vector<1024x64xf32> to vector<1024x64xbf16>
    %c0_5 = arith.constant 0 : index
    %c0_6 = arith.constant 0 : index
    %25 = vector.load %arg4[%c0_5, %c0_6] : memref<64x128xbf16, #tpu.memory_space<vmem>>, vector<64x128xbf16>
    %cst_7 = arith.constant dense<0.000000e+00> : vector<1024x128xf32>
    %26 = tpu.matmul %24, %25, %cst_7 {dimension_numbers = #tpu.dot_dimension_numbers<[1], [0], [0], [1], [0, 0, 1, 1], [], []>} : vector<1024x64xbf16>, vector<64x128xbf16>, vector<1024x128xf32> -> vector<1024x128xf32>
    %c0_8 = arith.constant 0 : index
    %c0_9 = arith.constant 0 : index
    %27 = vector.load %arg5[%c0_8, %c0_9] : memref<1x128xf32, #tpu.memory_space<vmem>>, vector<1x128xf32>
    %28 = vector.broadcast %27 : vector<1x128xf32> to vector<1024x128xf32>
    %29 = arith.addf %26, %28 : vector<1024x128xf32>
    %cst_10 = arith.constant 0.000000e+00 : f32
    %30 = vector.broadcast %cst_10 : f32 to vector<1024x128xf32>
    %31 = arith.maximumf %29, %30 : vector<1024x128xf32>
    %32 = arith.truncf %31 : vector<1024x128xf32> to vector<1024x128xbf16>
    %c0_11 = arith.constant 0 : index
    %c0_12 = arith.constant 0 : index
    %33 = vector.load %arg6[%c0_11, %c0_12] : memref<128x256xbf16, #tpu.memory_space<vmem>>, vector<128x256xbf16>
    %cst_13 = arith.constant dense<0.000000e+00> : vector<1024x256xf32>
    %34 = tpu.matmul %32, %33, %cst_13 {dimension_numbers = #tpu.dot_dimension_numbers<[1], [0], [0], [1], [0, 0, 1, 1], [], []>} : vector<1024x128xbf16>, vector<128x256xbf16>, vector<1024x256xf32> -> vector<1024x256xf32>
    %c0_14 = arith.constant 0 : index
    %c0_15 = arith.constant 0 : index
    %35 = vector.load %arg7[%c0_14, %c0_15] : memref<1x256xf32, #tpu.memory_space<vmem>>, vector<1x256xf32>
    %36 = vector.broadcast %35 : vector<1x256xf32> to vector<1024x256xf32>
    %37 = arith.addf %34, %36 : vector<1024x256xf32>
    %cst_16 = arith.constant 0.000000e+00 : f32
    %38 = vector.broadcast %cst_16 : f32 to vector<1024x256xf32>
    %39 = arith.maximumf %37, %38 : vector<1024x256xf32>
    %40 = vector.shape_cast %39 : vector<1024x256xf32> to vector<64x16x256xf32>
    %cst_17 = arith.constant dense<0xFF800000> : vector<64x256xf32>
    %41 = vector.multi_reduction <maximumf>, %40, %cst_17 [1] : vector<64x16x256xf32> to vector<64x256xf32>
    %c0_18 = arith.constant 0 : index
    %c0_19 = arith.constant 0 : index
    %42 = vector.load %arg8[%c0_18, %c0_19] : memref<64x256xf32, #tpu.memory_space<vmem>>, vector<64x256xf32>
    tpu.vector_store %arg8[%c0_18, %c0_19], %41 {strides = array<i32>} : memref<64x256xf32, #tpu.memory_space<vmem>>, vector<64x256xf32>,
    return
  }
  func.func @transform_0(%arg0: i32) -> (i32, i32) {
    %c0_i32 = arith.constant 0 : i32
    %c0_i32_0 = arith.constant 0 : i32
    return %arg0, %c0_i32 : i32, i32
  }
  func.func @transform_1(%arg0: i32) -> (i32, i32) {
    %c0_i32 = arith.constant 0 : i32
    %c0_i32_0 = arith.constant 0 : i32
    %c0_i32_1 = arith.constant 0 : i32
    return %c0_i32, %c0_i32_0 : i32, i32
  }
  func.func @transform_2(%arg0: i32) -> (i32, i32) {
    %c0_i32 = arith.constant 0 : i32
    %c0_i32_0 = arith.constant 0 : i32
    %c0_i32_1 = arith.constant 0 : i32
    return %c0_i32, %c0_i32_0 : i32, i32
  }
  func.func @transform_3(%arg0: i32) -> (i32, i32) {
    %c0_i32 = arith.constant 0 : i32
    %c0_i32_0 = arith.constant 0 : i32
    %c0_i32_1 = arith.constant 0 : i32
    return %c0_i32, %c0_i32_0 : i32, i32
  }
  func.func @transform_4(%arg0: i32) -> (i32, i32) {
    %c0_i32 = arith.constant 0 : i32
    %c0_i32_0 = arith.constant 0 : i32
    %c0_i32_1 = arith.constant 0 : i32
    return %c0_i32, %c0_i32_0 : i32, i32
  }
  func.func @transform_5(%arg0: i32) -> (i32, i32) {
    %c0_i32 = arith.constant 0 : i32
    %c0_i32_0 = arith.constant 0 : i32
    %c0_i32_1 = arith.constant 0 : i32
    return %c0_i32, %c0_i32_0 : i32, i32
  }
  func.func @transform_6(%arg0: i32) -> (i32, i32) {
    %c0_i32 = arith.constant 0 : i32
    %c0_i32_0 = arith.constant 0 : i32
    %c0_i32_1 = arith.constant 0 : i32
    return %c0_i32, %c0_i32_0 : i32, i32
  }
  func.func @transform_7(%arg0: i32) -> (i32, i32) {
    %c0_i32 = arith.constant 0 : i32
    %c0_i32_0 = arith.constant 0 : i32
    return %arg0, %c0_i32 : i32, i32
  }
}

</mosaic_0001>

<llo_original>
// kernel: _lambda_.1
$region0: #{_lambda_.1}
  #allocation0 [shape = 'u32[]', space=smem, size = 0x4, offset = 0x4, fixed_abs, tag = 'smem constant byte address 0x4 - core index']
  #allocation1 [shape = 'u32[144,128]{1,0:T(1,128)}', space=vmem, size = 0x12000, scoped, tag = 'internal scratch']
  %s0 = inlined_call_operand.vmem [shape: f32[8192,3], index: 0, kind: input, shape index: {}]
  %s1 = inlined_call_operand.vmem [shape: f32[3,64], index: 1, kind: input, shape index: {}]
  %s2 = inlined_call_operand.vmem [shape: f32[1,64], index: 2, kind: input, shape index: {}]
  %s3 = inlined_call_operand.vmem [shape: bf16[64,128], index: 3, kind: input, shape index: {}]
  %s4 = inlined_call_operand.vmem [shape: f32[1,128], index: 4, kind: input, shape index: {}]
  %s5 = inlined_call_operand.vmem [shape: bf16[128,256], index: 5, kind: input, shape index: {}]
  %s6 = inlined_call_operand.vmem [shape: f32[1,256], index: 6, kind: input, shape index: {}]
  %s7 = inlined_call_operand.vmem [shape: f32[512,256], index: 7, kind: output, shape index: {}]
  %s8 = sld [smem:[#allocation0]]
  $region61: #{_lambda_.1} parent=0
    _
  %s10 = ssub.s32 1, %s8
  %s11 = scalar_select 0, %s10, %s8
  loop: start=0, step=1, limit=10
  $region2: #{_lambda_.1} parent=0 // loop_pre_header
    _
  $region3: #{_lambda_.1} parent=0 // loop_header
    %s13 = sphi 0, %s17
    %p14 = scmp.ge.s32.totalorder %s13, 10
    %s23 = sphi 0, %s25
    %s26 = sphi 0, %s23
    %s27 = sphi 0, %s26
    %s43 = sphi 0, %s27
    %s47 = sphi 0, %s47
    %s49 = sphi 0, %s47
    %s50 = sphi 0, %s49
    %s64 = sphi 0, %s50
    %s68 = sphi 0, %s68
    %s70 = sphi 0, %s68
    %s71 = sphi 0, %s70
    %s85 = sphi 0, %s71
    %s89 = sphi 0, %s89
    %s91 = sphi 0, %s89
    %s92 = sphi 0, %s91
    %s106 = sphi 0, %s92
    %s110 = sphi 0, %s110
    %s112 = sphi 0, %s110
    %s113 = sphi 0, %s112
    %s127 = sphi 0, %s113
    %s131 = sphi 0, %s131
    %s133 = sphi 0, %s131
    %s134 = sphi 0, %s133
    %s148 = sphi 0, %s134
    %s152 = sphi 0, %s152
    %s154 = sphi 0, %s152
    %s155 = sphi 0, %s154
    %s169 = sphi 0, %s155
    %s175 = sphi 0, %s177
    %s178 = sphi 0, %s175
    %s179 = sphi 0, %s178
    %s195 = sphi 0, %s179
  $region4: #{_lambda_.1} parent=0 // loop_header_branch
    %16 = sbr.rel (%p14) target = $region8
  $region5: #{_lambda_.1} parent=0 // loop_body
    %s18 = ssub.s32 %s13, 1
    %s19 = ssub.s32 %s13, 2
    %s20 = sadd.s32 %s13, 1
    %s21 = ssub.s32 %s13, %s20
    %p22 = scmp.eq.s32.totalorder %s21, 0
    %s24 = sadd.s32 %s23, 1
    %s25 = scalar_select %p22, %s23, %s24
    %p28 = pneg %p22
    %p29 = scmp.eq.s32.totalorder %s13, 7
    %p30 = por %p28, %p29
    %p31 = scmp.ne.s32.totalorder %s23, %s26
    %p32 = scmp.eq.s32.totalorder %s13, 0
    %p33 = por %p31, %p32
    %p34 = scmp.ne.s32.totalorder %s23, %s26
    %p35 = scmp.eq.s32.totalorder %s18, 7
    %p36 = por %p34, %p35
    %p37 = scmp.ne.s32.totalorder %s26, %s27
    %p38 = scmp.eq.s32.totalorder %s18, 0
    %p39 = por %p37, %p38
    %p40 = scmp.ne.s32.totalorder %s26, %s27
    %p41 = scmp.eq.s32.totalorder %s19, 7
    %p42 = por %p40, %p41
    %p44 = scmp.ne.s32.totalorder %s27, %s43
    %p45 = scmp.eq.s32.totalorder %s19, 0
    %p46 = por %p44, %p45
    %s48 = sadd.s32 %s47, 1
    %p51 = scmp.eq.s32.totalorder %s13, 7
    %p52 = scmp.ne.s32.totalorder %s47, %s49
    %p53 = scmp.eq.s32.totalorder %s13, 0
    %p54 = por %p52, %p53
    %p55 = scmp.ne.s32.totalorder %s47, %s49
    %p56 = scmp.eq.s32.totalorder %s18, 7
    %p57 = por %p55, %p56
    %p58 = scmp.ne.s32.totalorder %s49, %s50
    %p59 = scmp.eq.s32.totalorder %s18, 0
    %p60 = por %p58, %p59
    %p61 = scmp.ne.s32.totalorder %s49, %s50
    %p62 = scmp.eq.s32.totalorder %s19, 7
    %p63 = por %p61, %p62
    %p65 = scmp.ne.s32.totalorder %s50, %s64
    %p66 = scmp.eq.s32.totalorder %s19, 0
    %p67 = por %p65, %p66
    %s69 = sadd.s32 %s68, 1
    %p72 = scmp.eq.s32.totalorder %s13, 7
    %p73 = scmp.ne.s32.totalorder %s68, %s70
    %p74 = scmp.eq.s32.totalorder %s13, 0
    %p75 = por %p73, %p74
    %p76 = scmp.ne.s32.totalorder %s68, %s70
    %p77 = scmp.eq.s32.totalorder %s18, 7
    %p78 = por %p76, %p77
    %p79 = scmp.ne.s32.totalorder %s70, %s71
    %p80 = scmp.eq.s32.totalorder %s18, 0
    %p81 = por %p79, %p80
    %p82 = scmp.ne.s32.totalorder %s70, %s71
    %p83 = scmp.eq.s32.totalorder %s19, 7
    %p84 = por %p82, %p83
    %p86 = scmp.ne.s32.totalorder %s71, %s85
    %p87 = scmp.eq.s32.totalorder %s19, 0
    %p88 = por %p86, %p87
    %s90 = sadd.s32 %s89, 1
    %p93 = scmp.eq.s32.totalorder %s13, 7
    %p94 = scmp.ne.s32.totalorder %s89, %s91
    %p95 = scmp.eq.s32.totalorder %s13, 0
    %p96 = por %p94, %p95
    %p97 = scmp.ne.s32.totalorder %s89, %s91
    %p98 = scmp.eq.s32.totalorder %s18, 7
    %p99 = por %p97, %p98
    %p100 = scmp.ne.s32.totalorder %s91, %s92
    %p101 = scmp.eq.s32.totalorder %s18, 0
    %p102 = por %p100, %p101
    %p103 = scmp.ne.s32.totalorder %s91, %s92
    %p104 = scmp.eq.s32.totalorder %s19, 7
    %p105 = por %p103, %p104
    %p107 = scmp.ne.s32.totalorder %s92, %s106
    %p108 = scmp.eq.s32.totalorder %s19, 0
    %p109 = por %p107, %p108
    %s111 = sadd.s32 %s110, 1
    %p114 = scmp.eq.s32.totalorder %s13, 7
    %p115 = scmp.ne.s32.totalorder %s110, %s112
    %p116 = scmp.eq.s32.totalorder %s13, 0
    %p117 = por %p115, %p116
    %p118 = scmp.ne.s32.totalorder %s110, %s112
    %p119 = scmp.eq.s32.totalorder %s18, 7
    %p120 = por %p118, %p119
    %p121 = scmp.ne.s32.totalorder %s112, %s113
    %p122 = scmp.eq.s32.totalorder %s18, 0
    %p123 = por %p121, %p122
    %p124 = scmp.ne.s32.totalorder %s112, %s113
    %p125 = scmp.eq.s32.totalorder %s19, 7
    %p126 = por %p124, %p125
    %p128 = scmp.ne.s32.totalorder %s113, %s127
    %p129 = scmp.eq.s32.totalorder %s19, 0
    %p130 = por %p128, %p129
    %s132 = sadd.s32 %s131, 1
    %p135 = scmp.eq.s32.totalorder %s13, 7
    %p136 = scmp.ne.s32.totalorder %s131, %s133
    %p137 = scmp.eq.s32.totalorder %s13, 0
    %p138 = por %p136, %p137
    %p139 = scmp.ne.s32.totalorder %s131, %s133
    %p140 = scmp.eq.s32.totalorder %s18, 7
    %p141 = por %p139, %p140
    %p142 = scmp.ne.s32.totalorder %s133, %s134
    %p143 = scmp.eq.s32.totalorder %s18, 0
    %p144 = por %p142, %p143
    %p145 = scmp.ne.s32.totalorder %s133, %s134
    %p146 = scmp.eq.s32.totalorder %s19, 7
    %p147 = por %p145, %p146
    %p149 = scmp.ne.s32.totalorder %s134, %s148
    %p150 = scmp.eq.s32.totalorder %s19, 0
    %p151 = por %p149, %p150
    %s153 = sadd.s32 %s152, 1
    %p156 = scmp.eq.s32.totalorder %s13, 7
    %p157 = scmp.ne.s32.totalorder %s152, %s154
    %p158 = scmp.eq.s32.totalorder %s13, 0
    %p159 = por %p157, %p158
    %p160 = scmp.ne.s32.totalorder %s152, %s154
    %p161 = scmp.eq.s32.totalorder %s18, 7
    %p162 = por %p160, %p161
    %p163 = scmp.ne.s32.totalorder %s154, %s155
    %p164 = scmp.eq.s32.totalorder %s18, 0
    %p165 = por %p163, %p164
    %p166 = scmp.ne.s32.totalorder %s154, %s155
    %p167 = scmp.eq.s32.totalorder %s19, 7
    %p168 = por %p166, %p167
    %p170 = scmp.ne.s32.totalorder %s155, %s169
    %p171 = scmp.eq.s32.totalorder %s19, 0
    %p172 = por %p170, %p171
    %s173 = ssub.s32 %s13, %s20
    %p174 = scmp.eq.s32.totalorder %s173, 0
    %s176 = sadd.s32 %s175, 1
    %s177 = scalar_select %p174, %s175, %s176
    %p180 = pneg %p174
    %p181 = scmp.eq.s32.totalorder %s13, 7
    %p182 = por %p180, %p181
    %p183 = scmp.ne.s32.totalorder %s175, %s178
    %p184 = scmp.eq.s32.totalorder %s13, 0
    %p185 = por %p183, %p184
    %p186 = scmp.ne.s32.totalorder %s175, %s178
    %p187 = scmp.eq.s32.totalorder %s18, 7
    %p188 = por %p186, %p187
    %p189 = scmp.ne.s32.totalorder %s178, %s179
    %p190 = scmp.eq.s32.totalorder %s18, 0
    %p191 = por %p189, %p190
    %p192 = scmp.ne.s32.totalorder %s178, %s179
    %p193 = scmp.eq.s32.totalorder %s19, 7
    %p194 = por %p192, %p193
    %p196 = scmp.ne.s32.totalorder %s179, %s195
    %p197 = scmp.eq.s32.totalorder %s19, 0
    %p198 = por %p196, %p197
    %p199 = scmp.le.s32.totalorder 1, %s13
    %p200 = scmp.lt.s32.totalorder %s13, 9
    %p201 = pnand %p199, %p200
    %p202 = pneg %p201
    // Predicated region
    $region9: #{_lambda_.1} parent=5 // pred_check
      _
    $region10: #{_lambda_.1} parent=5 // pred_check_branch
      %204 = sbr.rel (%p201) target = $region12
    $region11: #{_lambda_.1} parent=5 // pred_region
      %s205 = ssub.s32 %s13, 1
      // Predicated region
      $region13: #{_lambda_.1} parent=11 // pred_check
        %p206 = pneg %p60
      $region14: #{_lambda_.1} parent=11 // pred_check_branch
        %208 = sbr.rel (%p206) target = $region16
      $region15: #{_lambda_.1} parent=11 // pred_region
        _
      $region16: #{_lambda_.1} parent=11 // pred_fallthru
        _
      // Predicated region
      $region17: #{_lambda_.1} parent=11 // pred_check
        %p209 = pneg %p81
      $region18: #{_lambda_.1} parent=11 // pred_check_branch
        %211 = sbr.rel (%p209) target = $region20
      $region19: #{_lambda_.1} parent=11 // pred_region
        _
      $region20: #{_lambda_.1} parent=11 // pred_fallthru
        _
      // Predicated region
      $region21: #{_lambda_.1} parent=11 // pred_check
        %p212 = pneg %p102
      $region22: #{_lambda_.1} parent=11 // pred_check_branch
        %214 = sbr.rel (%p212) target = $region24
      $region23: #{_lambda_.1} parent=11 // pred_region
        _
      $region24: #{_lambda_.1} parent=11 // pred_fallthru
        _
      // Predicated region
      $region25: #{_lambda_.1} parent=11 // pred_check
        %p215 = pneg %p123
      $region26: #{_lambda_.1} parent=11 // pred_check_branch
        %217 = sbr.rel (%p215) target = $region28
      $region27: #{_lambda_.1} parent=11 // pred_region
        _
      $region28: #{_lambda_.1} parent=11 // pred_fallthru
        _
      // Predicated region
      $region29: #{_lambda_.1} parent=11 // pred_check
        %p218 = pneg %p144
      $region30: #{_lambda_.1} parent=11 // pred_check_branch
        %220 = sbr.rel (%p218) target = $region32
      $region31: #{_lambda_.1} parent=11 // pred_region
        _
      $region32: #{_lambda_.1} parent=11 // pred_fallthru
        _
      // Predicated region
      $region33: #{_lambda_.1} parent=11 // pred_check
        %p221 = pneg %p165
      $region34: #{_lambda_.1} parent=11 // pred_check_branch
        %223 = sbr.rel (%p221) target = $region36
      $region35: #{_lambda_.1} parent=11 // pred_region
        _
      $region36: #{_lambda_.1} parent=11 // pred_fallthru
        _
    $region12: #{_lambda_.1} parent=5 // pred_fallthru
      _
    %p224 = scmp.lt.s32.totalorder %s13, 8
    // Predicated region
    $region37: #{_lambda_.1} parent=5 // pred_check
      %p225 = pneg %p224
    $region38: #{_lambda_.1} parent=5 // pred_check_branch
      %227 = sbr.rel (%p225) target = $region40
    $region39: #{_lambda_.1} parent=5 // pred_region
      // Predicated region
      $region41: #{_lambda_.1} parent=39 // pred_check
        %p228 = pneg %p33
      $region42: #{_lambda_.1} parent=39 // pred_check_branch
        %230 = sbr.rel (%p228) target = $region44
      $region43: #{_lambda_.1} parent=39 // pred_region
        %s231 = smul.u32 128, %s13
        %p232 = scmp.lt.s32.totalorder %s231, 1023
        %s233 = scalar_select %p232, %s231, 1023
        %s234 = smul.addr %s233, 8
        %s235 = scalar_lea.vmem %s0, %s234
        %s236 = smul.u32 128, %s13
      $region44: #{_lambda_.1} parent=39 // pred_fallthru
        _
    $region40: #{_lambda_.1} parent=5 // pred_fallthru
      _
    %p237 = scmp.le.s32.totalorder 1, %s13
    %p238 = scmp.lt.s32.totalorder %s13, 9
    %p239 = pnand %p237, %p238
    %p240 = pneg %p239
    // Predicated region
    $region45: #{_lambda_.1} parent=5 // pred_check
      _
    $region46: #{_lambda_.1} parent=5 // pred_check_branch
      %242 = sbr.rel (%p239) target = $region48
    $region47: #{_lambda_.1} parent=5 // pred_region
      %s243 = ssub.s32 %s13, 1
      %s244 = smul.u32 128, %s18
      %p245 = scmp.lt.s32.totalorder %s244, 1023
      %s246 = scalar_select %p245, %s244, 1023
      %s247 = smul.addr %s246, 8
      %s248 = scalar_lea.vmem %s0, %s247
      %p249 = pneg %p39
      %p250 = pneg %p36
      %p251 = pneg %p60
      %p252 = pneg %p57
      %p253 = pneg %p81
      %p254 = pneg %p78
      %p255 = pneg %p102
      %p256 = pneg %p99
      %p257 = pneg %p123
      %p258 = pneg %p120
      %p259 = pneg %p144
      %p260 = pneg %p141
      %p261 = pneg %p165
      %p262 = pneg %p162
      %p263 = pneg %p191
      %p264 = pneg %p188
      %s265 = smul.u32 8, %s18
      %p266 = scmp.lt.s32.totalorder %s265, 63
      %s267 = scalar_select %p266, %s265, 63
      %s268 = smul.addr %s267, 2
      %s269 = smul.addr %s268, 8
      %s270 = scalar_lea.vmem %s7, %s269
      %s271 = smul.u32 128, %s18
      %p272 = scmp.lt.s32.totalorder %s271, 1023
      %s273 = scalar_select %p272, %s271, 1023
      %s274 = smul.addr %s273, 8
      %s275 = scalar_lea.vmem %s0, %s274
      %s276 = smul.u32 128, %s18
      %s277 = smul.u32 8, %s18
      %p278 = scmp.lt.s32.totalorder %s277, 63
      %s279 = scalar_select %p278, %s277, 63
      %s280 = smul.addr %s279, 2
      %s281 = smul.addr %s280, 8
      %s282 = scalar_lea.vmem %s7, %s281
      %s283 = smul.u32 8, %s18
      %v285 = vld [vmem:[%s275] sm:$0xff]
      %v286 = vld [vmem:[%s275 + $0x8] sm:$0xff]
      %v287 = vld [vmem:[%s275 + $0x10] sm:$0xff]
      %v288 = vld [vmem:[%s275 + $0x18] sm:$0xff]
      %v289 = vld [vmem:[%s275 + $0x20] sm:$0xff]
      %v290 = vld [vmem:[%s275 + $0x28] sm:$0xff]
      %v291 = vld [vmem:[%s275 + $0x30] sm:$0xff]
      %v292 = vld [vmem:[%s275 + $0x38] sm:$0xff]
      %v293 = vld [vmem:[%s275 + $0x40] sm:$0xff]
      %v294 = vld [vmem:[%s275 + $0x48] sm:$0xff]
      %v295 = vld [vmem:[%s275 + $0x50] sm:$0xff]
      %v296 = vld [vmem:[%s275 + $0x58] sm:$0xff]
      %v297 = vld [vmem:[%s275 + $0x60] sm:$0xff]
      %v298 = vld [vmem:[%s275 + $0x68] sm:$0xff]
      %v299 = vld [vmem:[%s275 + $0x70] sm:$0xff]
      %v300 = vld [vmem:[%s275 + $0x78] sm:$0xff]
      %v301 = vld [vmem:[%s275 + $0x80] sm:$0xff]
      %v302 = vld [vmem:[%s275 + $0x88] sm:$0xff]
      %v303 = vld [vmem:[%s275 + $0x90] sm:$0xff]
      %v304 = vld [vmem:[%s275 + $0x98] sm:$0xff]
      %v305 = vld [vmem:[%s275 + $0xa0] sm:$0xff]
      %v306 = vld [vmem:[%s275 + $0xa8] sm:$0xff]
      %v307 = vld [vmem:[%s275 + $0xb0] sm:$0xff]
      %v308 = vld [vmem:[%s275 + $0xb8] sm:$0xff]
      %v309 = vld [vmem:[%s275 + $0xc0] sm:$0xff]
      %v310 = vld [vmem:[%s275 + $0xc8] sm:$0xff]
      %v311 = vld [vmem:[%s275 + $0xd0] sm:$0xff]
      %v312 = vld [vmem:[%s275 + $0xd8] sm:$0xff]
      %v313 = vld [vmem:[%s275 + $0xe0] sm:$0xff]
      %v314 = vld [vmem:[%s275 + $0xe8] sm:$0xff]
      %v315 = vld [vmem:[%s275 + $0xf0] sm:$0xff]
      %v316 = vld [vmem:[%s275 + $0xf8] sm:$0xff]
      %v317 = vld [vmem:[%s275 + $0x100] sm:$0xff]
      %v318 = vld [vmem:[%s275 + $0x108] sm:$0xff]
      %v319 = vld [vmem:[%s275 + $0x110] sm:$0xff]
      %v320 = vld [vmem:[%s275 + $0x118] sm:$0xff]
      %v321 = vld [vmem:[%s275 + $0x120] sm:$0xff]
      %v322 = vld [vmem:[%s275 + $0x128] sm:$0xff]
      %v323 = vld [vmem:[%s275 + $0x130] sm:$0xff]
      %v324 = vld [vmem:[%s275 + $0x138] sm:$0xff]
      %v325 = vld [vmem:[%s275 + $0x140] sm:$0xff]
      %v326 = vld [vmem:[%s275 + $0x148] sm:$0xff]
      %v327 = vld [vmem:[%s275 + $0x150] sm:$0xff]
      %v328 = vld [vmem:[%s275 + $0x158] sm:$0xff]
      %v329 = vld [vmem:[%s275 + $0x160] sm:$0xff]
      %v330 = vld [vmem:[%s275 + $0x168] sm:$0xff]
      %v331 = vld [vmem:[%s275 + $0x170] sm:$0xff]
      %v332 = vld [vmem:[%s275 + $0x178] sm:$0xff]
      %v333 = vld [vmem:[%s275 + $0x180] sm:$0xff]
      %v334 = vld [vmem:[%s275 + $0x188] sm:$0xff]
      %v335 = vld [vmem:[%s275 + $0x190] sm:$0xff]
      %v336 = vld [vmem:[%s275 + $0x198] sm:$0xff]
      %v337 = vld [vmem:[%s275 + $0x1a0] sm:$0xff]
      %v338 = vld [vmem:[%s275 + $0x1a8] sm:$0xff]
      %v339 = vld [vmem:[%s275 + $0x1b0] sm:$0xff]
      %v340 = vld [vmem:[%s275 + $0x1b8] sm:$0xff]
      %v341 = vld [vmem:[%s275 + $0x1c0] sm:$0xff]
      %v342 = vld [vmem:[%s275 + $0x1c8] sm:$0xff]
      %v343 = vld [vmem:[%s275 + $0x1d0] sm:$0xff]
      %v344 = vld [vmem:[%s275 + $0x1d8] sm:$0xff]
      %v345 = vld [vmem:[%s275 + $0x1e0] sm:$0xff]
      %v346 = vld [vmem:[%s275 + $0x1e8] sm:$0xff]
      %v347 = vld [vmem:[%s275 + $0x1f0] sm:$0xff]
      %v348 = vld [vmem:[%s275 + $0x1f8] sm:$0xff]
      %v349 = vld [vmem:[%s275 + $0x200] sm:$0xff]
      %v350 = vld [vmem:[%s275 + $0x208] sm:$0xff]
      %v351 = vld [vmem:[%s275 + $0x210] sm:$0xff]
      %v352 = vld [vmem:[%s275 + $0x218] sm:$0xff]
      %v353 = vld [vmem:[%s275 + $0x220] sm:$0xff]
      %v354 = vld [vmem:[%s275 + $0x228] sm:$0xff]
      %v355 = vld [vmem:[%s275 + $0x230] sm:$0xff]
      %v356 = vld [vmem:[%s275 + $0x238] sm:$0xff]
      %v357 = vld [vmem:[%s275 + $0x240] sm:$0xff]
      %v358 = vld [vmem:[%s275 + $0x248] sm:$0xff]
      %v359 = vld [vmem:[%s275 + $0x250] sm:$0xff]
      %v360 = vld [vmem:[%s275 + $0x258] sm:$0xff]
      %v361 = vld [vmem:[%s275 + $0x260] sm:$0xff]
      %v362 = vld [vmem:[%s275 + $0x268] sm:$0xff]
      %v363 = vld [vmem:[%s275 + $0x270] sm:$0xff]
      %v364 = vld [vmem:[%s275 + $0x278] sm:$0xff]
      %v365 = vld [vmem:[%s275 + $0x280] sm:$0xff]
      %v366 = vld [vmem:[%s275 + $0x288] sm:$0xff]
      %v367 = vld [vmem:[%s275 + $0x290] sm:$0xff]
      %v368 = vld [vmem:[%s275 + $0x298] sm:$0xff]
      %v369 = vld [vmem:[%s275 + $0x2a0] sm:$0xff]
      %v370 = vld [vmem:[%s275 + $0x2a8] sm:$0xff]
      %v371 = vld [vmem:[%s275 + $0x2b0] sm:$0xff]
      %v372 = vld [vmem:[%s275 + $0x2b8] sm:$0xff]
      %v373 = vld [vmem:[%s275 + $0x2c0] sm:$0xff]
      %v374 = vld [vmem:[%s275 + $0x2c8] sm:$0xff]
      %v375 = vld [vmem:[%s275 + $0x2d0] sm:$0xff]
      %v376 = vld [vmem:[%s275 + $0x2d8] sm:$0xff]
      %v377 = vld [vmem:[%s275 + $0x2e0] sm:$0xff]
      %v378 = vld [vmem:[%s275 + $0x2e8] sm:$0xff]
      %v379 = vld [vmem:[%s275 + $0x2f0] sm:$0xff]
      %v380 = vld [vmem:[%s275 + $0x2f8] sm:$0xff]
      %v381 = vld [vmem:[%s275 + $0x300] sm:$0xff]
      %v382 = vld [vmem:[%s275 + $0x308] sm:$0xff]
      %v383 = vld [vmem:[%s275 + $0x310] sm:$0xff]
      %v384 = vld [vmem:[%s275 + $0x318] sm:$0xff]
      %v385 = vld [vmem:[%s275 + $0x320] sm:$0xff]
      %v386 = vld [vmem:[%s275 + $0x328] sm:$0xff]
      %v387 = vld [vmem:[%s275 + $0x330] sm:$0xff]
      %v388 = vld [vmem:[%s275 + $0x338] sm:$0xff]
      %v389 = vld [vmem:[%s275 + $0x340] sm:$0xff]
      %v390 = vld [vmem:[%s275 + $0x348] sm:$0xff]
      %v391 = vld [vmem:[%s275 + $0x350] sm:$0xff]
      %v392 = vld [vmem:[%s275 + $0x358] sm:$0xff]
      %v393 = vld [vmem:[%s275 + $0x360] sm:$0xff]
      %v394 = vld [vmem:[%s275 + $0x368] sm:$0xff]
      %v395 = vld [vmem:[%s275 + $0x370] sm:$0xff]
      %v396 = vld [vmem:[%s275 + $0x378] sm:$0xff]
      %v397 = vld [vmem:[%s275 + $0x380] sm:$0xff]
      %v398 = vld [vmem:[%s275 + $0x388] sm:$0xff]
      %v399 = vld [vmem:[%s275 + $0x390] sm:$0xff]
      %v400 = vld [vmem:[%s275 + $0x398] sm:$0xff]
      %v401 = vld [vmem:[%s275 + $0x3a0] sm:$0xff]
      %v402 = vld [vmem:[%s275 + $0x3a8] sm:$0xff]
      %v403 = vld [vmem:[%s275 + $0x3b0] sm:$0xff]
      %v404 = vld [vmem:[%s275 + $0x3b8] sm:$0xff]
      %v405 = vld [vmem:[%s275 + $0x3c0] sm:$0xff]
      %v406 = vld [vmem:[%s275 + $0x3c8] sm:$0xff]
      %v407 = vld [vmem:[%s275 + $0x3d0] sm:$0xff]
      %v408 = vld [vmem:[%s275 + $0x3d8] sm:$0xff]
      %v409 = vld [vmem:[%s275 + $0x3e0] sm:$0xff]
      %v410 = vld [vmem:[%s275 + $0x3e8] sm:$0xff]
      %v411 = vld [vmem:[%s275 + $0x3f0] sm:$0xff]
      %v412 = vld [vmem:[%s275 + $0x3f8] sm:$0xff]
      %v413 = vld [vmem:[%s1] sm:$0x7]
      %415 = vset.pattern.permute.xlu0 0
      %416 = vperm.xlu0 %415, %v285
      %v417 = vpop.permute.xlu0 %416
      %420 = vset.pattern.permute.xlu0 0
      %421 = vperm.xlu0 %420, %v286
      %v422 = vpop.permute.xlu0 %421
      %425 = vset.pattern.permute.xlu0 0
      %426 = vperm.xlu0 %425, %v287
      %v427 = vpop.permute.xlu0 %426
      %430 = vset.pattern.permute.xlu0 0
      %431 = vperm.xlu0 %430, %v288
      %v432 = vpop.permute.xlu0 %431
      %435 = vset.pattern.permute.xlu0 0
      %436 = vperm.xlu0 %435, %v289
      %v437 = vpop.permute.xlu0 %436
      %440 = vset.pattern.permute.xlu0 0
      %441 = vperm.xlu0 %440, %v290
      %v442 = vpop.permute.xlu0 %441
      %445 = vset.pattern.permute.xlu0 0
      %446 = vperm.xlu0 %445, %v291
      %v447 = vpop.permute.xlu0 %446
      %450 = vset.pattern.permute.xlu0 0
      %451 = vperm.xlu0 %450, %v292
      %v452 = vpop.permute.xlu0 %451
      %455 = vset.pattern.permute.xlu0 0
      %456 = vperm.xlu0 %455, %v293
      %v457 = vpop.permute.xlu0 %456
      %460 = vset.pattern.permute.xlu0 0
      %461 = vperm.xlu0 %460, %v294
      %v462 = vpop.permute.xlu0 %461
      %465 = vset.pattern.permute.xlu0 0
      %466 = vperm.xlu0 %465, %v295
      %v467 = vpop.permute.xlu0 %466
      %470 = vset.pattern.permute.xlu0 0
      %471 = vperm.xlu0 %470, %v296
      %v472 = vpop.permute.xlu0 %471
      %475 = vset.pattern.permute.xlu0 0
      %476 = vperm.xlu0 %475, %v297
      %v477 = vpop.permute.xlu0 %476
      %480 = vset.pattern.permute.xlu0 0
      %481 = vperm.xlu0 %480, %v298
      %v482 = vpop.permute.xlu0 %481
      %485 = vset.pattern.permute.xlu0 0
      %486 = vperm.xlu0 %485, %v299
      %v487 = vpop.permute.xlu0 %486
      %490 = vset.pattern.permute.xlu0 0
      %491 = vperm.xlu0 %490, %v300
      %v492 = vpop.permute.xlu0 %491
      %495 = vset.pattern.permute.xlu0 0
      %496 = vperm.xlu0 %495, %v301
      %v497 = vpop.permute.xlu0 %496
      %500 = vset.pattern.permute.xlu0 0
      %501 = vperm.xlu0 %500, %v302
      %v502 = vpop.permute.xlu0 %501
      %505 = vset.pattern.permute.xlu0 0
      %506 = vperm.xlu0 %505, %v303
      %v507 = vpop.permute.xlu0 %506
      %510 = vset.pattern.permute.xlu0 0
      %511 = vperm.xlu0 %510, %v304
      %v512 = vpop.permute.xlu0 %511
      %515 = vset.pattern.permute.xlu0 0
      %516 = vperm.xlu0 %515, %v305
      %v517 = vpop.permute.xlu0 %516
      %520 = vset.pattern.permute.xlu0 0
      %521 = vperm.xlu0 %520, %v306
      %v522 = vpop.permute.xlu0 %521
      %525 = vset.pattern.permute.xlu0 0
      %526 = vperm.xlu0 %525, %v307
      %v527 = vpop.permute.xlu0 %526
      %530 = vset.pattern.permute.xlu0 0
      %531 = vperm.xlu0 %530, %v308
      %v532 = vpop.permute.xlu0 %531
      %535 = vset.pattern.permute.xlu0 0
      %536 = vperm.xlu0 %535, %v309
      %v537 = vpop.permute.xlu0 %536
      %540 = vset.pattern.permute.xlu0 0
      %541 = vperm.xlu0 %540, %v310
      %v542 = vpop.permute.xlu0 %541
      %545 = vset.pattern.permute.xlu0 0
      %546 = vperm.xlu0 %545, %v311
      %v547 = vpop.permute.xlu0 %546
      %550 = vset.pattern.permute.xlu0 0
      %551 = vperm.xlu0 %550, %v312
      %v552 = vpop.permute.xlu0 %551
      %555 = vset.pattern.permute.xlu0 0
      %556 = vperm.xlu0 %555, %v313
      %v557 = vpop.permute.xlu0 %556
      %560 = vset.pattern.permute.xlu0 0
      %561 = vperm.xlu0 %560, %v314
      %v562 = vpop.permute.xlu0 %561
      %565 = vset.pattern.permute.xlu0 0
      %566 = vperm.xlu0 %565, %v315
      %v567 = vpop.permute.xlu0 %566
      %570 = vset.pattern.permute.xlu0 0
      %571 = vperm.xlu0 %570, %v316
      %v572 = vpop.permute.xlu0 %571
      %575 = vset.pattern.permute.xlu0 0
      %576 = vperm.xlu0 %575, %v317
      %v577 = vpop.permute.xlu0 %576
      %580 = vset.pattern.permute.xlu0 0
      %581 = vperm.xlu0 %580, %v318
      %v582 = vpop.permute.xlu0 %581
      %585 = vset.pattern.permute.xlu0 0
      %586 = vperm.xlu0 %585, %v319
      %v587 = vpop.permute.xlu0 %586
      %590 = vset.pattern.permute.xlu0 0
      %591 = vperm.xlu0 %590, %v320
      %v592 = vpop.permute.xlu0 %591
      %595 = vset.pattern.permute.xlu0 0
      %596 = vperm.xlu0 %595, %v321
      %v597 = vpop.permute.xlu0 %596
      %600 = vset.pattern.permute.xlu0 0
      %601 = vperm.xlu0 %600, %v322
      %v602 = vpop.permute.xlu0 %601
      %605 = vset.pattern.permute.xlu0 0
      %606 = vperm.xlu0 %605, %v323
      %v607 = vpop.permute.xlu0 %606
      %610 = vset.pattern.permute.xlu0 0
      %611 = vperm.xlu0 %610, %v324
      %v612 = vpop.permute.xlu0 %611
      %615 = vset.pattern.permute.xlu0 0
      %616 = vperm.xlu0 %615, %v325
      %v617 = vpop.permute.xlu0 %616
      %620 = vset.pattern.permute.xlu0 0
      %621 = vperm.xlu0 %620, %v326
      %v622 = vpop.permute.xlu0 %621
      %625 = vset.pattern.permute.xlu0 0
      %626 = vperm.xlu0 %625, %v327
      %v627 = vpop.permute.xlu0 %626
      %630 = vset.pattern.permute.xlu0 0
      %631 = vperm.xlu0 %630, %v328
      %v632 = vpop.permute.xlu0 %631
      %635 = vset.pattern.permute.xlu0 0
      %636 = vperm.xlu0 %635, %v329
      %v637 = vpop.permute.xlu0 %636
      %640 = vset.pattern.permute.xlu0 0
      %641 = vperm.xlu0 %640, %v330
      %v642 = vpop.permute.xlu0 %641
      %645 = vset.pattern.permute.xlu0 0
      %646 = vperm.xlu0 %645, %v331
      %v647 = vpop.permute.xlu0 %646
      %650 = vset.pattern.permute.xlu0 0
      %651 = vperm.xlu0 %650, %v332
      %v652 = vpop.permute.xlu0 %651
      %655 = vset.pattern.permute.xlu0 0
      %656 = vperm.xlu0 %655, %v333
      %v657 = vpop.permute.xlu0 %656
      %660 = vset.pattern.permute.xlu0 0
      %661 = vperm.xlu0 %660, %v334
      %v662 = vpop.permute.xlu0 %661
      %665 = vset.pattern.permute.xlu0 0
      %666 = vperm.xlu0 %665, %v335
      %v667 = vpop.permute.xlu0 %666
      %670 = vset.pattern.permute.xlu0 0
      %671 = vperm.xlu0 %670, %v336
      %v672 = vpop.permute.xlu0 %671
      %675 = vset.pattern.permute.xlu0 0
      %676 = vperm.xlu0 %675, %v337
      %v677 = vpop.permute.xlu0 %676
      %680 = vset.pattern.permute.xlu0 0
      %681 = vperm.xlu0 %680, %v338
      %v682 = vpop.permute.xlu0 %681
      %685 = vset.pattern.permute.xlu0 0
      %686 = vperm.xlu0 %685, %v339
      %v687 = vpop.permute.xlu0 %686
      %690 = vset.pattern.permute.xlu0 0
      %691 = vperm.xlu0 %690, %v340
      %v692 = vpop.permute.xlu0 %691
      %695 = vset.pattern.permute.xlu0 0
      %696 = vperm.xlu0 %695, %v341
      %v697 = vpop.permute.xlu0 %696
      %700 = vset.pattern.permute.xlu0 0
      %701 = vperm.xlu0 %700, %v342
      %v702 = vpop.permute.xlu0 %701
      %705 = vset.pattern.permute.xlu0 0
      %706 = vperm.xlu0 %705, %v343
      %v707 = vpop.permute.xlu0 %706
      %710 = vset.pattern.permute.xlu0 0
      %711 = vperm.xlu0 %710, %v344
      %v712 = vpop.permute.xlu0 %711
      %715 = vset.pattern.permute.xlu0 0
      %716 = vperm.xlu0 %715, %v345
      %v717 = vpop.permute.xlu0 %716
      %720 = vset.pattern.permute.xlu0 0
      %721 = vperm.xlu0 %720, %v346
      %v722 = vpop.permute.xlu0 %721
      %725 = vset.pattern.permute.xlu0 0
      %726 = vperm.xlu0 %725, %v347
      %v727 = vpop.permute.xlu0 %726
      %730 = vset.pattern.permute.xlu0 0
      %731 = vperm.xlu0 %730, %v348
      %v732 = vpop.permute.xlu0 %731
      %735 = vset.pattern.permute.xlu0 0
      %736 = vperm.xlu0 %735, %v349
      %v737 = vpop.permute.xlu0 %736
      %740 = vset.pattern.permute.xlu0 0
      %741 = vperm.xlu0 %740, %v350
      %v742 = vpop.permute.xlu0 %741
      %745 = vset.pattern.permute.xlu0 0
      %746 = vperm.xlu0 %745, %v351
      %v747 = vpop.permute.xlu0 %746
      %750 = vset.pattern.permute.xlu0 0
      %751 = vperm.xlu0 %750, %v352
      %v752 = vpop.permute.xlu0 %751
      %755 = vset.pattern.permute.xlu0 0
      %756 = vperm.xlu0 %755, %v353
      %v757 = vpop.permute.xlu0 %756
      %760 = vset.pattern.permute.xlu0 0
      %761 = vperm.xlu0 %760, %v354
      %v762 = vpop.permute.xlu0 %761
      %765 = vset.pattern.permute.xlu0 0
      %766 = vperm.xlu0 %765, %v355
      %v767 = vpop.permute.xlu0 %766
      %770 = vset.pattern.permute.xlu0 0
      %771 = vperm.xlu0 %770, %v356
      %v772 = vpop.permute.xlu0 %771
      %775 = vset.pattern.permute.xlu0 0
      %776 = vperm.xlu0 %775, %v357
      %v777 = vpop.permute.xlu0 %776
      %780 = vset.pattern.permute.xlu0 0
      %781 = vperm.xlu0 %780, %v358
      %v782 = vpop.permute.xlu0 %781
      %785 = vset.pattern.permute.xlu0 0
      %786 = vperm.xlu0 %785, %v359
      %v787 = vpop.permute.xlu0 %786
      %790 = vset.pattern.permute.xlu0 0
      %791 = vperm.xlu0 %790, %v360
      %v792 = vpop.permute.xlu0 %791
      %795 = vset.pattern.permute.xlu0 0
      %796 = vperm.xlu0 %795, %v361
      %v797 = vpop.permute.xlu0 %796
      %800 = vset.pattern.permute.xlu0 0
      %801 = vperm.xlu0 %800, %v362
      %v802 = vpop.permute.xlu0 %801
      %805 = vset.pattern.permute.xlu0 0
      %806 = vperm.xlu0 %805, %v363
      %v807 = vpop.permute.xlu0 %806
      %810 = vset.pattern.permute.xlu0 0
      %811 = vperm.xlu0 %810, %v364
      %v812 = vpop.permute.xlu0 %811
      %815 = vset.pattern.permute.xlu0 0
      %816 = vperm.xlu0 %815, %v365
      %v817 = vpop.permute.xlu0 %816
      %820 = vset.pattern.permute.xlu0 0
      %821 = vperm.xlu0 %820, %v366
      %v822 = vpop.permute.xlu0 %821
      %825 = vset.pattern.permute.xlu0 0
      %826 = vperm.xlu0 %825, %v367
      %v827 = vpop.permute.xlu0 %826
      %830 = vset.pattern.permute.xlu0 0
      %831 = vperm.xlu0 %830, %v368
      %v832 = vpop.permute.xlu0 %831
      %835 = vset.pattern.permute.xlu0 0
      %836 = vperm.xlu0 %835, %v369
      %v837 = vpop.permute.xlu0 %836
      %840 = vset.pattern.permute.xlu0 0
      %841 = vperm.xlu0 %840, %v370
      %v842 = vpop.permute.xlu0 %841
      %845 = vset.pattern.permute.xlu0 0
      %846 = vperm.xlu0 %845, %v371
      %v847 = vpop.permute.xlu0 %846
      %850 = vset.pattern.permute.xlu0 0
      %851 = vperm.xlu0 %850, %v372
      %v852 = vpop.permute.xlu0 %851
      %855 = vset.pattern.permute.xlu0 0
      %856 = vperm.xlu0 %855, %v373
      %v857 = vpop.permute.xlu0 %856
      %860 = vset.pattern.permute.xlu0 0
      %861 = vperm.xlu0 %860, %v374
      %v862 = vpop.permute.xlu0 %861
      %865 = vset.pattern.permute.xlu0 0
      %866 = vperm.xlu0 %865, %v375
      %v867 = vpop.permute.xlu0 %866
      %870 = vset.pattern.permute.xlu0 0
      %871 = vperm.xlu0 %870, %v376
      %v872 = vpop.permute.xlu0 %871
      %875 = vset.pattern.permute.xlu0 0
      %876 = vperm.xlu0 %875, %v377
      %v877 = vpop.permute.xlu0 %876
      %880 = vset.pattern.permute.xlu0 0
      %881 = vperm.xlu0 %880, %v378
      %v882 = vpop.permute.xlu0 %881
      %885 = vset.pattern.permute.xlu0 0
      %886 = vperm.xlu0 %885, %v379
      %v887 = vpop.permute.xlu0 %886
      %890 = vset.pattern.permute.xlu0 0
      %891 = vperm.xlu0 %890, %v380
      %v892 = vpop.permute.xlu0 %891
      %895 = vset.pattern.permute.xlu0 0
      %896 = vperm.xlu0 %895, %v381
      %v897 = vpop.permute.xlu0 %896
      %900 = vset.pattern.permute.xlu0 0
      %901 = vperm.xlu0 %900, %v382
      %v902 = vpop.permute.xlu0 %901
      %905 = vset.pattern.permute.xlu0 0
      %906 = vperm.xlu0 %905, %v383
      %v907 = vpop.permute.xlu0 %906
      %910 = vset.pattern.permute.xlu0 0
      %911 = vperm.xlu0 %910, %v384
      %v912 = vpop.permute.xlu0 %911
      %915 = vset.pattern.permute.xlu0 0
      %916 = vperm.xlu0 %915, %v385
      %v917 = vpop.permute.xlu0 %916
      %920 = vset.pattern.permute.xlu0 0
      %921 = vperm.xlu0 %920, %v386
      %v922 = vpop.permute.xlu0 %921
      %925 = vset.pattern.permute.xlu0 0
      %926 = vperm.xlu0 %925, %v387
      %v927 = vpop.permute.xlu0 %926
      %930 = vset.pattern.permute.xlu0 0
      %931 = vperm.xlu0 %930, %v388
      %v932 = vpop.permute.xlu0 %931
      %935 = vset.pattern.permute.xlu0 0
      %936 = vperm.xlu0 %935, %v389
      %v937 = vpop.permute.xlu0 %936
      %940 = vset.pattern.permute.xlu0 0
      %941 = vperm.xlu0 %940, %v390
      %v942 = vpop.permute.xlu0 %941
      %945 = vset.pattern.permute.xlu0 0
      %946 = vperm.xlu0 %945, %v391
      %v947 = vpop.permute.xlu0 %946
      %950 = vset.pattern.permute.xlu0 0
      %951 = vperm.xlu0 %950, %v392
      %v952 = vpop.permute.xlu0 %951
      %955 = vset.pattern.permute.xlu0 0
      %956 = vperm.xlu0 %955, %v393
      %v957 = vpop.permute.xlu0 %956
      %960 = vset.pattern.permute.xlu0 0
      %961 = vperm.xlu0 %960, %v394
      %v962 = vpop.permute.xlu0 %961
      %965 = vset.pattern.permute.xlu0 0
      %966 = vperm.xlu0 %965, %v395
      %v967 = vpop.permute.xlu0 %966
      %970 = vset.pattern.permute.xlu0 0
      %971 = vperm.xlu0 %970, %v396
      %v972 = vpop.permute.xlu0 %971
      %975 = vset.pattern.permute.xlu0 0
      %976 = vperm.xlu0 %975, %v397
      %v977 = vpop.permute.xlu0 %976
      %980 = vset.pattern.permute.xlu0 0
      %981 = vperm.xlu0 %980, %v398
      %v982 = vpop.permute.xlu0 %981
      %985 = vset.pattern.permute.xlu0 0
      %986 = vperm.xlu0 %985, %v399
      %v987 = vpop.permute.xlu0 %986
      %990 = vset.pattern.permute.xlu0 0
      %991 = vperm.xlu0 %990, %v400
      %v992 = vpop.permute.xlu0 %991
      %995 = vset.pattern.permute.xlu0 0
      %996 = vperm.xlu0 %995, %v401
      %v997 = vpop.permute.xlu0 %996
      %1000 = vset.pattern.permute.xlu0 0
      %1001 = vperm.xlu0 %1000, %v402
      %v1002 = vpop.permute.xlu0 %1001
      %1005 = vset.pattern.permute.xlu0 0
      %1006 = vperm.xlu0 %1005, %v403
      %v1007 = vpop.permute.xlu0 %1006
      %1010 = vset.pattern.permute.xlu0 0
      %1011 = vperm.xlu0 %1010, %v404
      %v1012 = vpop.permute.xlu0 %1011
      %1015 = vset.pattern.permute.xlu0 0
      %1016 = vperm.xlu0 %1015, %v405
      %v1017 = vpop.permute.xlu0 %1016
      %1020 = vset.pattern.permute.xlu0 0
      %1021 = vperm.xlu0 %1020, %v406
      %v1022 = vpop.permute.xlu0 %1021
      %1025 = vset.pattern.permute.xlu0 0
      %1026 = vperm.xlu0 %1025, %v407
      %v1027 = vpop.permute.xlu0 %1026
      %1030 = vset.pattern.permute.xlu0 0
      %1031 = vperm.xlu0 %1030, %v408
      %v1032 = vpop.permute.xlu0 %1031
      %1035 = vset.pattern.permute.xlu0 0
      %1036 = vperm.xlu0 %1035, %v409
      %v1037 = vpop.permute.xlu0 %1036
      %1040 = vset.pattern.permute.xlu0 0
      %1041 = vperm.xlu0 %1040, %v410
      %v1042 = vpop.permute.xlu0 %1041
      %1045 = vset.pattern.permute.xlu0 0
      %1046 = vperm.xlu0 %1045, %v411
      %v1047 = vpop.permute.xlu0 %1046
      %1050 = vset.pattern.permute.xlu0 0
      %1051 = vperm.xlu0 %1050, %v412
      %v1052 = vpop.permute.xlu0 %1051
      %v1054 = vlaneseq
      %v1055 = vshrl.u32 %v1054, 7
      %v1056 = vsub.s32 0, %v1055
      %v1057 = vrot.slane %v413, %v1056
      %v1058 = vmul.f32 %v417, %v1057
      %v1059 = vmul.f32 %v422, %v1057
      %v1060 = vmul.f32 %v427, %v1057
      %v1061 = vmul.f32 %v432, %v1057
      %v1062 = vmul.f32 %v437, %v1057
      %v1063 = vmul.f32 %v442, %v1057
      %v1064 = vmul.f32 %v447, %v1057
      %v1065 = vmul.f32 %v452, %v1057
      %v1066 = vmul.f32 %v457, %v1057
      %v1067 = vmul.f32 %v462, %v1057
      %v1068 = vmul.f32 %v467, %v1057
      %v1069 = vmul.f32 %v472, %v1057
      %v1070 = vmul.f32 %v477, %v1057
      %v1071 = vmul.f32 %v482, %v1057
      %v1072 = vmul.f32 %v487, %v1057
      %v1073 = vmul.f32 %v492, %v1057
      %v1074 = vmul.f32 %v497, %v1057
      %v1075 = vmul.f32 %v502, %v1057
      %v1076 = vmul.f32 %v507, %v1057
      %v1077 = vmul.f32 %v512, %v1057
      %v1078 = vmul.f32 %v517, %v1057
      %v1079 = vmul.f32 %v522, %v1057
      %v1080 = vmul.f32 %v527, %v1057
      %v1081 = vmul.f32 %v532, %v1057
      %v1082 = vmul.f32 %v537, %v1057
      %v1083 = vmul.f32 %v542, %v1057
      %v1084 = vmul.f32 %v547, %v1057
      %v1085 = vmul.f32 %v552, %v1057
      %v1086 = vmul.f32 %v557, %v1057
      %v1087 = vmul.f32 %v562, %v1057
      %v1088 = vmul.f32 %v567, %v1057
      %v1089 = vmul.f32 %v572, %v1057
      %v1090 = vmul.f32 %v577, %v1057
      %v1091 = vmul.f32 %v582, %v1057
      %v1092 = vmul.f32 %v587, %v1057
      %v1093 = vmul.f32 %v592, %v1057
      %v1094 = vmul.f32 %v597, %v1057
      %v1095 = vmul.f32 %v602, %v1057
      %v1096 = vmul.f32 %v607, %v1057
      %v1097 = vmul.f32 %v612, %v1057
      %v1098 = vmul.f32 %v617, %v1057
      %v1099 = vmul.f32 %v622, %v1057
      %v1100 = vmul.f32 %v627, %v1057
      %v1101 = vmul.f32 %v632, %v1057
      %v1102 = vmul.f32 %v637, %v1057
      %v1103 = vmul.f32 %v642, %v1057
      %v1104 = vmul.f32 %v647, %v1057
      %v1105 = vmul.f32 %v652, %v1057
      %v1106 = vmul.f32 %v657, %v1057
      %v1107 = vmul.f32 %v662, %v1057
      %v1108 = vmul.f32 %v667, %v1057
      %v1109 = vmul.f32 %v672, %v1057
      %v1110 = vmul.f32 %v677, %v1057
      %v1111 = vmul.f32 %v682, %v1057
      %v1112 = vmul.f32 %v687, %v1057
      %v1113 = vmul.f32 %v692, %v1057
      %v1114 = vmul.f32 %v697, %v1057
      %v1115 = vmul.f32 %v702, %v1057
      %v1116 = vmul.f32 %v707, %v1057
      %v1117 = vmul.f32 %v712, %v1057
      %v1118 = vmul.f32 %v717, %v1057
      %v1119 = vmul.f32 %v722, %v1057
      %v1120 = vmul.f32 %v727, %v1057
      %v1121 = vmul.f32 %v732, %v1057
      %v1122 = vmul.f32 %v737, %v1057
      %v1123 = vmul.f32 %v742, %v1057
      %v1124 = vmul.f32 %v747, %v1057
      %v1125 = vmul.f32 %v752, %v1057
      %v1126 = vmul.f32 %v757, %v1057
      %v1127 = vmul.f32 %v762, %v1057
      %v1128 = vmul.f32 %v767, %v1057
      %v1129 = vmul.f32 %v772, %v1057
      %v1130 = vmul.f32 %v777, %v1057
      %v1131 = vmul.f32 %v782, %v1057
      %v1132 = vmul.f32 %v787, %v1057
      %v1133 = vmul.f32 %v792, %v1057
      %v1134 = vmul.f32 %v797, %v1057
      %v1135 = vmul.f32 %v802, %v1057
      %v1136 = vmul.f32 %v807, %v1057
      %v1137 = vmul.f32 %v812, %v1057
      %v1138 = vmul.f32 %v817, %v1057
      %v1139 = vmul.f32 %v822, %v1057
      %v1140 = vmul.f32 %v827, %v1057
      %v1141 = vmul.f32 %v832, %v1057
      %v1142 = vmul.f32 %v837, %v1057
      %v1143 = vmul.f32 %v842, %v1057
      %v1144 = vmul.f32 %v847, %v1057
      %v1145 = vmul.f32 %v852, %v1057
      %v1146 = vmul.f32 %v857, %v1057
      %v1147 = vmul.f32 %v862, %v1057
      %v1148 = vmul.f32 %v867, %v1057
      %v1149 = vmul.f32 %v872, %v1057
      %v1150 = vmul.f32 %v877, %v1057
      %v1151 = vmul.f32 %v882, %v1057
      %v1152 = vmul.f32 %v887, %v1057
      %v1153 = vmul.f32 %v892, %v1057
      %v1154 = vmul.f32 %v897, %v1057
      %v1155 = vmul.f32 %v902, %v1057
      %v1156 = vmul.f32 %v907, %v1057
      %v1157 = vmul.f32 %v912, %v1057
      %v1158 = vmul.f32 %v917, %v1057
      %v1159 = vmul.f32 %v922, %v1057
      %v1160 = vmul.f32 %v927, %v1057
      %v1161 = vmul.f32 %v932, %v1057
      %v1162 = vmul.f32 %v937, %v1057
      %v1163 = vmul.f32 %v942, %v1057
      %v1164 = vmul.f32 %v947, %v1057
      %v1165 = vmul.f32 %v952, %v1057
      %v1166 = vmul.f32 %v957, %v1057
      %v1167 = vmul.f32 %v962, %v1057
      %v1168 = vmul.f32 %v967, %v1057
      %v1169 = vmul.f32 %v972, %v1057
      %v1170 = vmul.f32 %v977, %v1057
      %v1171 = vmul.f32 %v982, %v1057
      %v1172 = vmul.f32 %v987, %v1057
      %v1173 = vmul.f32 %v992, %v1057
      %v1174 = vmul.f32 %v997, %v1057
      %v1175 = vmul.f32 %v1002, %v1057
      %v1176 = vmul.f32 %v1007, %v1057
      %v1177 = vmul.f32 %v1012, %v1057
      %v1178 = vmul.f32 %v1017, %v1057
      %v1179 = vmul.f32 %v1022, %v1057
      %v1180 = vmul.f32 %v1027, %v1057
      %v1181 = vmul.f32 %v1032, %v1057
      %v1182 = vmul.f32 %v1037, %v1057
      %v1183 = vmul.f32 %v1042, %v1057
      %v1184 = vmul.f32 %v1047, %v1057
      %v1185 = vmul.f32 %v1052, %v1057
      %1186 = vset.pattern.permute.xlu0 1
      %1187 = vperm.xlu0 %1186, %v285
      %v1188 = vpop.permute.xlu0 %1187
      %1190 = vset.pattern.permute.xlu0 1
      %1191 = vperm.xlu0 %1190, %v286
      %v1192 = vpop.permute.xlu0 %1191
      %1194 = vset.pattern.permute.xlu0 1
      %1195 = vperm.xlu0 %1194, %v287
      %v1196 = vpop.permute.xlu0 %1195
      %1198 = vset.pattern.permute.xlu0 1
      %1199 = vperm.xlu0 %1198, %v288
      %v1200 = vpop.permute.xlu0 %1199
      %1202 = vset.pattern.permute.xlu0 1
      %1203 = vperm.xlu0 %1202, %v289
      %v1204 = vpop.permute.xlu0 %1203
      %1206 = vset.pattern.permute.xlu0 1
      %1207 = vperm.xlu0 %1206, %v290
      %v1208 = vpop.permute.xlu0 %1207
      %1210 = vset.pattern.permute.xlu0 1
      %1211 = vperm.xlu0 %1210, %v291
      %v1212 = vpop.permute.xlu0 %1211
      %1214 = vset.pattern.permute.xlu0 1
      %1215 = vperm.xlu0 %1214, %v292
      %v1216 = vpop.permute.xlu0 %1215
      %1218 = vset.pattern.permute.xlu0 1
      %1219 = vperm.xlu0 %1218, %v293
      %v1220 = vpop.permute.xlu0 %1219
      %1222 = vset.pattern.permute.xlu0 1
      %1223 = vperm.xlu0 %1222, %v294
      %v1224 = vpop.permute.xlu0 %1223
      %1226 = vset.pattern.permute.xlu0 1
      %1227 = vperm.xlu0 %1226, %v295
      %v1228 = vpop.permute.xlu0 %1227
      %1230 = vset.pattern.permute.xlu0 1
      %1231 = vperm.xlu0 %1230, %v296
      %v1232 = vpop.permute.xlu0 %1231
      %1234 = vset.pattern.permute.xlu0 1
      %1235 = vperm.xlu0 %1234, %v297
      %v1236 = vpop.permute.xlu0 %1235
      %1238 = vset.pattern.permute.xlu0 1
      %1239 = vperm.xlu0 %1238, %v298
      %v1240 = vpop.permute.xlu0 %1239
      %1242 = vset.pattern.permute.xlu0 1
      %1243 = vperm.xlu0 %1242, %v299
      %v1244 = vpop.permute.xlu0 %1243
      %1246 = vset.pattern.permute.xlu0 1
      %1247 = vperm.xlu0 %1246, %v300
      %v1248 = vpop.permute.xlu0 %1247
      %1250 = vset.pattern.permute.xlu0 1
      %1251 = vperm.xlu0 %1250, %v301
      %v1252 = vpop.permute.xlu0 %1251
      %1254 = vset.pattern.permute.xlu0 1
      %1255 = vperm.xlu0 %1254, %v302
      %v1256 = vpop.permute.xlu0 %1255
      %1258 = vset.pattern.permute.xlu0 1
      %1259 = vperm.xlu0 %1258, %v303
      %v1260 = vpop.permute.xlu0 %1259
      %1262 = vset.pattern.permute.xlu0 1
      %1263 = vperm.xlu0 %1262, %v304
      %v1264 = vpop.permute.xlu0 %1263
      %1266 = vset.pattern.permute.xlu0 1
      %1267 = vperm.xlu0 %1266, %v305
      %v1268 = vpop.permute.xlu0 %1267
      %1270 = vset.pattern.permute.xlu0 1
      %1271 = vperm.xlu0 %1270, %v306
      %v1272 = vpop.permute.xlu0 %1271
      %1274 = vset.pattern.permute.xlu0 1
      %1275 = vperm.xlu0 %1274, %v307
      %v1276 = vpop.permute.xlu0 %1275
      %1278 = vset.pattern.permute.xlu0 1
      %1279 = vperm.xlu0 %1278, %v308
      %v1280 = vpop.permute.xlu0 %1279
      %1282 = vset.pattern.permute.xlu0 1
      %1283 = vperm.xlu0 %1282, %v309
      %v1284 = vpop.permute.xlu0 %1283
      %1286 = vset.pattern.permute.xlu0 1
      %1287 = vperm.xlu0 %1286, %v310
      %v1288 = vpop.permute.xlu0 %1287
      %1290 = vset.pattern.permute.xlu0 1
      %1291 = vperm.xlu0 %1290, %v311
      %v1292 = vpop.permute.xlu0 %1291
      %1294 = vset.pattern.permute.xlu0 1
      %1295 = vperm.xlu0 %1294, %v312
      %v1296 = vpop.permute.xlu0 %1295
      %1298 = vset.pattern.permute.xlu0 1
      %1299 = vperm.xlu0 %1298, %v313
      %v1300 = vpop.permute.xlu0 %1299
      %1302 = vset.pattern.permute.xlu0 1
      %1303 = vperm.xlu0 %1302, %v314
      %v1304 = vpop.permute.xlu0 %1303
      %1306 = vset.pattern.permute.xlu0 1
      %1307 = vperm.xlu0 %1306, %v315
      %v1308 = vpop.permute.xlu0 %1307
      %1310 = vset.pattern.permute.xlu0 1
      %1311 = vperm.xlu0 %1310, %v316
      %v1312 = vpop.permute.xlu0 %1311
      %1314 = vset.pattern.permute.xlu0 1
      %1315 = vperm.xlu0 %1314, %v317
      %v1316 = vpop.permute.xlu0 %1315
      %1318 = vset.pattern.permute.xlu0 1
      %1319 = vperm.xlu0 %1318, %v318
      %v1320 = vpop.permute.xlu0 %1319
      %1322 = vset.pattern.permute.xlu0 1
      %1323 = vperm.xlu0 %1322, %v319
      %v1324 = vpop.permute.xlu0 %1323
      %1326 = vset.pattern.permute.xlu0 1
      %1327 = vperm.xlu0 %1326, %v320
      %v1328 = vpop.permute.xlu0 %1327
      %1330 = vset.pattern.permute.xlu0 1
      %1331 = vperm.xlu0 %1330, %v321
      %v1332 = vpop.permute.xlu0 %1331
      %1334 = vset.pattern.permute.xlu0 1
      %1335 = vperm.xlu0 %1334, %v322
      %v1336 = vpop.permute.xlu0 %1335
      %1338 = vset.pattern.permute.xlu0 1
      %1339 = vperm.xlu0 %1338, %v323
      %v1340 = vpop.permute.xlu0 %1339
      %1342 = vset.pattern.permute.xlu0 1
      %1343 = vperm.xlu0 %1342, %v324
      %v1344 = vpop.permute.xlu0 %1343
      %1346 = vset.pattern.permute.xlu0 1
      %1347 = vperm.xlu0 %1346, %v325
      %v1348 = vpop.permute.xlu0 %1347
      %1350 = vset.pattern.permute.xlu0 1
      %1351 = vperm.xlu0 %1350, %v326
      %v1352 = vpop.permute.xlu0 %1351
      %1354 = vset.pattern.permute.xlu0 1
      %1355 = vperm.xlu0 %1354, %v327
      %v1356 = vpop.permute.xlu0 %1355
      %1358 = vset.pattern.permute.xlu0 1
      %1359 = vperm.xlu0 %1358, %v328
      %v1360 = vpop.permute.xlu0 %1359
      %1362 = vset.pattern.permute.xlu0 1
      %1363 = vperm.xlu0 %1362, %v329
      %v1364 = vpop.permute.xlu0 %1363
      %1366 = vset.pattern.permute.xlu0 1
      %1367 = vperm.xlu0 %1366, %v330
      %v1368 = vpop.permute.xlu0 %1367
      %1370 = vset.pattern.permute.xlu0 1
      %1371 = vperm.xlu0 %1370, %v331
      %v1372 = vpop.permute.xlu0 %1371
      %1374 = vset.pattern.permute.xlu0 1
      %1375 = vperm.xlu0 %1374, %v332
      %v1376 = vpop.permute.xlu0 %1375
      %1378 = vset.pattern.permute.xlu0 1
      %1379 = vperm.xlu0 %1378, %v333
      %v1380 = vpop.permute.xlu0 %1379
      %1382 = vset.pattern.permute.xlu0 1
      %1383 = vperm.xlu0 %1382, %v334
      %v1384 = vpop.permute.xlu0 %1383
      %1386 = vset.pattern.permute.xlu0 1
      %1387 = vperm.xlu0 %1386, %v335
      %v1388 = vpop.permute.xlu0 %1387
      %1390 = vset.pattern.permute.xlu0 1
      %1391 = vperm.xlu0 %1390, %v336
      %v1392 = vpop.permute.xlu0 %1391
      %1394 = vset.pattern.permute.xlu0 1
      %1395 = vperm.xlu0 %1394, %v337
      %v1396 = vpop.permute.xlu0 %1395
      %1398 = vset.pattern.permute.xlu0 1
      %1399 = vperm.xlu0 %1398, %v338
      %v1400 = vpop.permute.xlu0 %1399
      %1402 = vset.pattern.permute.xlu0 1
      %1403 = vperm.xlu0 %1402, %v339
      %v1404 = vpop.permute.xlu0 %1403
      %1406 = vset.pattern.permute.xlu0 1
      %1407 = vperm.xlu0 %1406, %v340
      %v1408 = vpop.permute.xlu0 %1407
      %1410 = vset.pattern.permute.xlu0 1
      %1411 = vperm.xlu0 %1410, %v341
      %v1412 = vpop.permute.xlu0 %1411
      %1414 = vset.pattern.permute.xlu0 1
      %1415 = vperm.xlu0 %1414, %v342
      %v1416 = vpop.permute.xlu0 %1415
      %1418 = vset.pattern.permute.xlu0 1
      %1419 = vperm.xlu0 %1418, %v343
      %v1420 = vpop.permute.xlu0 %1419
      %1422 = vset.pattern.permute.xlu0 1
      %1423 = vperm.xlu0 %1422, %v344
      %v1424 = vpop.permute.xlu0 %1423
      %1426 = vset.pattern.permute.xlu0 1
      %1427 = vperm.xlu0 %1426, %v345
      %v1428 = vpop.permute.xlu0 %1427
      %1430 = vset.pattern.permute.xlu0 1
      %1431 = vperm.xlu0 %1430, %v346
      %v1432 = vpop.permute.xlu0 %1431
      %1434 = vset.pattern.permute.xlu0 1
      %1435 = vperm.xlu0 %1434, %v347
      %v1436 = vpop.permute.xlu0 %1435
      %1438 = vset.pattern.permute.xlu0 1
      %1439 = vperm.xlu0 %1438, %v348
      %v1440 = vpop.permute.xlu0 %1439
      %1442 = vset.pattern.permute.xlu0 1
      %1443 = vperm.xlu0 %1442, %v349
      %v1444 = vpop.permute.xlu0 %1443
      %1446 = vset.pattern.permute.xlu0 1
      %1447 = vperm.xlu0 %1446, %v350
      %v1448 = vpop.permute.xlu0 %1447
      %1450 = vset.pattern.permute.xlu0 1
      %1451 = vperm.xlu0 %1450, %v351
      %v1452 = vpop.permute.xlu0 %1451
      %1454 = vset.pattern.permute.xlu0 1
      %1455 = vperm.xlu0 %1454, %v352
      %v1456 = vpop.permute.xlu0 %1455
      %1458 = vset.pattern.permute.xlu0 1
      %1459 = vperm.xlu0 %1458, %v353
      %v1460 = vpop.permute.xlu0 %1459
      %1462 = vset.pattern.permute.xlu0 1
      %1463 = vperm.xlu0 %1462, %v354
      %v1464 = vpop.permute.xlu0 %1463
      %1466 = vset.pattern.permute.xlu0 1
      %1467 = vperm.xlu0 %1466, %v355
      %v1468 = vpop.permute.xlu0 %1467
      %1470 = vset.pattern.permute.xlu0 1
      %1471 = vperm.xlu0 %1470, %v356
      %v1472 = vpop.permute.xlu0 %1471
      %1474 = vset.pattern.permute.xlu0 1
      %1475 = vperm.xlu0 %1474, %v357
      %v1476 = vpop.permute.xlu0 %1475
      %1478 = vset.pattern.permute.xlu0 1
      %1479 = vperm.xlu0 %1478, %v358
      %v1480 = vpop.permute.xlu0 %1479
      %1482 = vset.pattern.permute.xlu0 1
      %1483 = vperm.xlu0 %1482, %v359
      %v1484 = vpop.permute.xlu0 %1483
      %1486 = vset.pattern.permute.xlu0 1
      %1487 = vperm.xlu0 %1486, %v360
      %v1488 = vpop.permute.xlu0 %1487
      %1490 = vset.pattern.permute.xlu0 1
      %1491 = vperm.xlu0 %1490, %v361
      %v1492 = vpop.permute.xlu0 %1491
      %1494 = vset.pattern.permute.xlu0 1
      %1495 = vperm.xlu0 %1494, %v362
      %v1496 = vpop.permute.xlu0 %1495
      %1498 = vset.pattern.permute.xlu0 1
      %1499 = vperm.xlu0 %1498, %v363
      %v1500 = vpop.permute.xlu0 %1499
      %1502 = vset.pattern.permute.xlu0 1
      %1503 = vperm.xlu0 %1502, %v364
      %v1504 = vpop.permute.xlu0 %1503
      %1506 = vset.pattern.permute.xlu0 1
      %1507 = vperm.xlu0 %1506, %v365
      %v1508 = vpop.permute.xlu0 %1507
      %1510 = vset.pattern.permute.xlu0 1
      %1511 = vperm.xlu0 %1510, %v366
      %v1512 = vpop.permute.xlu0 %1511
      %1514 = vset.pattern.permute.xlu0 1
      %1515 = vperm.xlu0 %1514, %v367
      %v1516 = vpop.permute.xlu0 %1515
      %1518 = vset.pattern.permute.xlu0 1
      %1519 = vperm.xlu0 %1518, %v368
      %v1520 = vpop.permute.xlu0 %1519
      %1522 = vset.pattern.permute.xlu0 1
      %1523 = vperm.xlu0 %1522, %v369
      %v1524 = vpop.permute.xlu0 %1523
      %1526 = vset.pattern.permute.xlu0 1
      %1527 = vperm.xlu0 %1526, %v370
      %v1528 = vpop.permute.xlu0 %1527
      %1530 = vset.pattern.permute.xlu0 1
      %1531 = vperm.xlu0 %1530, %v371
      %v1532 = vpop.permute.xlu0 %1531
      %1534 = vset.pattern.permute.xlu0 1
      %1535 = vperm.xlu0 %1534, %v372
      %v1536 = vpop.permute.xlu0 %1535
      %1538 = vset.pattern.permute.xlu0 1
      %1539 = vperm.xlu0 %1538, %v373
      %v1540 = vpop.permute.xlu0 %1539
      %1542 = vset.pattern.permute.xlu0 1
      %1543 = vperm.xlu0 %1542, %v374
      %v1544 = vpop.permute.xlu0 %1543
      %1546 = vset.pattern.permute.xlu0 1
      %1547 = vperm.xlu0 %1546, %v375
      %v1548 = vpop.permute.xlu0 %1547
      %1550 = vset.pattern.permute.xlu0 1
      %1551 = vperm.xlu0 %1550, %v376
      %v1552 = vpop.permute.xlu0 %1551
      %1554 = vset.pattern.permute.xlu0 1
      %1555 = vperm.xlu0 %1554, %v377
      %v1556 = vpop.permute.xlu0 %1555
      %1558 = vset.pattern.permute.xlu0 1
      %1559 = vperm.xlu0 %1558, %v378
      %v1560 = vpop.permute.xlu0 %1559
      %1562 = vset.pattern.permute.xlu0 1
      %1563 = vperm.xlu0 %1562, %v379
      %v1564 = vpop.permute.xlu0 %1563
      %1566 = vset.pattern.permute.xlu0 1
      %1567 = vperm.xlu0 %1566, %v380
      %v1568 = vpop.permute.xlu0 %1567
      %1570 = vset.pattern.permute.xlu0 1
      %1571 = vperm.xlu0 %1570, %v381
      %v1572 = vpop.permute.xlu0 %1571
      %1574 = vset.pattern.permute.xlu0 1
      %1575 = vperm.xlu0 %1574, %v382
      %v1576 = vpop.permute.xlu0 %1575
      %1578 = vset.pattern.permute.xlu0 1
      %1579 = vperm.xlu0 %1578, %v383
      %v1580 = vpop.permute.xlu0 %1579
      %1582 = vset.pattern.permute.xlu0 1
      %1583 = vperm.xlu0 %1582, %v384
      %v1584 = vpop.permute.xlu0 %1583
      %1586 = vset.pattern.permute.xlu0 1
      %1587 = vperm.xlu0 %1586, %v385
      %v1588 = vpop.permute.xlu0 %1587
      %1590 = vset.pattern.permute.xlu0 1
      %1591 = vperm.xlu0 %1590, %v386
      %v1592 = vpop.permute.xlu0 %1591
      %1594 = vset.pattern.permute.xlu0 1
      %1595 = vperm.xlu0 %1594, %v387
      %v1596 = vpop.permute.xlu0 %1595
      %1598 = vset.pattern.permute.xlu0 1
      %1599 = vperm.xlu0 %1598, %v388
      %v1600 = vpop.permute.xlu0 %1599
      %1602 = vset.pattern.permute.xlu0 1
      %1603 = vperm.xlu0 %1602, %v389
      %v1604 = vpop.permute.xlu0 %1603
      %1606 = vset.pattern.permute.xlu0 1
      %1607 = vperm.xlu0 %1606, %v390
      %v1608 = vpop.permute.xlu0 %1607
      %1610 = vset.pattern.permute.xlu0 1
      %1611 = vperm.xlu0 %1610, %v391
      %v1612 = vpop.permute.xlu0 %1611
      %1614 = vset.pattern.permute.xlu0 1
      %1615 = vperm.xlu0 %1614, %v392
      %v1616 = vpop.permute.xlu0 %1615
      %1618 = vset.pattern.permute.xlu0 1
      %1619 = vperm.xlu0 %1618, %v393
      %v1620 = vpop.permute.xlu0 %1619
      %1622 = vset.pattern.permute.xlu0 1
      %1623 = vperm.xlu0 %1622, %v394
      %v1624 = vpop.permute.xlu0 %1623
      %1626 = vset.pattern.permute.xlu0 1
      %1627 = vperm.xlu0 %1626, %v395
      %v1628 = vpop.permute.xlu0 %1627
      %1630 = vset.pattern.permute.xlu0 1
      %1631 = vperm.xlu0 %1630, %v396
      %v1632 = vpop.permute.xlu0 %1631
      %1634 = vset.pattern.permute.xlu0 1
      %1635 = vperm.xlu0 %1634, %v397
      %v1636 = vpop.permute.xlu0 %1635
      %1638 = vset.pattern.permute.xlu0 1
      %1639 = vperm.xlu0 %1638, %v398
      %v1640 = vpop.permute.xlu0 %1639
      %1642 = vset.pattern.permute.xlu0 1
      %1643 = vperm.xlu0 %1642, %v399
      %v1644 = vpop.permute.xlu0 %1643
      %1646 = vset.pattern.permute.xlu0 1
      %1647 = vperm.xlu0 %1646, %v400
      %v1648 = vpop.permute.xlu0 %1647
      %1650 = vset.pattern.permute.xlu0 1
      %1651 = vperm.xlu0 %1650, %v401
      %v1652 = vpop.permute.xlu0 %1651
      %1654 = vset.pattern.permute.xlu0 1
      %1655 = vperm.xlu0 %1654, %v402
      %v1656 = vpop.permute.xlu0 %1655
      %1658 = vset.pattern.permute.xlu0 1
      %1659 = vperm.xlu0 %1658, %v403
      %v1660 = vpop.permute.xlu0 %1659
      %1662 = vset.pattern.permute.xlu0 1
      %1663 = vperm.xlu0 %1662, %v404
      %v1664 = vpop.permute.xlu0 %1663
      %1666 = vset.pattern.permute.xlu0 1
      %1667 = vperm.xlu0 %1666, %v405
      %v1668 = vpop.permute.xlu0 %1667
      %1670 = vset.pattern.permute.xlu0 1
      %1671 = vperm.xlu0 %1670, %v406
      %v1672 = vpop.permute.xlu0 %1671
      %1674 = vset.pattern.permute.xlu0 1
      %1675 = vperm.xlu0 %1674, %v407
      %v1676 = vpop.permute.xlu0 %1675
      %1678 = vset.pattern.permute.xlu0 1
      %1679 = vperm.xlu0 %1678, %v408
      %v1680 = vpop.permute.xlu0 %1679
      %1682 = vset.pattern.permute.xlu0 1
      %1683 = vperm.xlu0 %1682, %v409
      %v1684 = vpop.permute.xlu0 %1683
      %1686 = vset.pattern.permute.xlu0 1
      %1687 = vperm.xlu0 %1686, %v410
      %v1688 = vpop.permute.xlu0 %1687
      %1690 = vset.pattern.permute.xlu0 1
      %1691 = vperm.xlu0 %1690, %v411
      %v1692 = vpop.permute.xlu0 %1691
      %1694 = vset.pattern.permute.xlu0 1
      %1695 = vperm.xlu0 %1694, %v412
      %v1696 = vpop.permute.xlu0 %1695
      %v1698 = vlaneseq
      %v1699 = vshrl.u32 %v1698, 7
      %v1700 = vsub.s32 1, %v1699
      %v1701 = vrot.slane %v413, %v1700
      %v1702 = vmul.f32 %v1188, %v1701
      %v1703 = vmul.f32 %v1192, %v1701
      %v1704 = vmul.f32 %v1196, %v1701
      %v1705 = vmul.f32 %v1200, %v1701
      %v1706 = vmul.f32 %v1204, %v1701
      %v1707 = vmul.f32 %v1208, %v1701
      %v1708 = vmul.f32 %v1212, %v1701
      %v1709 = vmul.f32 %v1216, %v1701
      %v1710 = vmul.f32 %v1220, %v1701
      %v1711 = vmul.f32 %v1224, %v1701
      %v1712 = vmul.f32 %v1228, %v1701
      %v1713 = vmul.f32 %v1232, %v1701
      %v1714 = vmul.f32 %v1236, %v1701
      %v1715 = vmul.f32 %v1240, %v1701
      %v1716 = vmul.f32 %v1244, %v1701
      %v1717 = vmul.f32 %v1248, %v1701
      %v1718 = vmul.f32 %v1252, %v1701
      %v1719 = vmul.f32 %v1256, %v1701
      %v1720 = vmul.f32 %v1260, %v1701
      %v1721 = vmul.f32 %v1264, %v1701
      %v1722 = vmul.f32 %v1268, %v1701
      %v1723 = vmul.f32 %v1272, %v1701
      %v1724 = vmul.f32 %v1276, %v1701
      %v1725 = vmul.f32 %v1280, %v1701
      %v1726 = vmul.f32 %v1284, %v1701
      %v1727 = vmul.f32 %v1288, %v1701
      %v1728 = vmul.f32 %v1292, %v1701
      %v1729 = vmul.f32 %v1296, %v1701
      %v1730 = vmul.f32 %v1300, %v1701
      %v1731 = vmul.f32 %v1304, %v1701
      %v1732 = vmul.f32 %v1308, %v1701
      %v1733 = vmul.f32 %v1312, %v1701
      %v1734 = vmul.f32 %v1316, %v1701
      %v1735 = vmul.f32 %v1320, %v1701
      %v1736 = vmul.f32 %v1324, %v1701
      %v1737 = vmul.f32 %v1328, %v1701
      %v1738 = vmul.f32 %v1332, %v1701
      %v1739 = vmul.f32 %v1336, %v1701
      %v1740 = vmul.f32 %v1340, %v1701
      %v1741 = vmul.f32 %v1344, %v1701
      %v1742 = vmul.f32 %v1348, %v1701
      %v1743 = vmul.f32 %v1352, %v1701
      %v1744 = vmul.f32 %v1356, %v1701
      %v1745 = vmul.f32 %v1360, %v1701
      %v1746 = vmul.f32 %v1364, %v1701
      %v1747 = vmul.f32 %v1368, %v1701
      %v1748 = vmul.f32 %v1372, %v1701
      %v1749 = vmul.f32 %v1376, %v1701
      %v1750 = vmul.f32 %v1380, %v1701
      %v1751 = vmul.f32 %v1384, %v1701
      %v1752 = vmul.f32 %v1388, %v1701
      %v1753 = vmul.f32 %v1392, %v1701
      %v1754 = vmul.f32 %v1396, %v1701
      %v1755 = vmul.f32 %v1400, %v1701
      %v1756 = vmul.f32 %v1404, %v1701
      %v1757 = vmul.f32 %v1408, %v1701
      %v1758 = vmul.f32 %v1412, %v1701
      %v1759 = vmul.f32 %v1416, %v1701
      %v1760 = vmul.f32 %v1420, %v1701
      %v1761 = vmul.f32 %v1424, %v1701
      %v1762 = vmul.f32 %v1428, %v1701
      %v1763 = vmul.f32 %v1432, %v1701
      %v1764 = vmul.f32 %v1436, %v1701
      %v1765 = vmul.f32 %v1440, %v1701
      %v1766 = vmul.f32 %v1444, %v1701
      %v1767 = vmul.f32 %v1448, %v1701
      %v1768 = vmul.f32 %v1452, %v1701
      %v1769 = vmul.f32 %v1456, %v1701
      %v1770 = vmul.f32 %v1460, %v1701
      %v1771 = vmul.f32 %v1464, %v1701
      %v1772 = vmul.f32 %v1468, %v1701
      %v1773 = vmul.f32 %v1472, %v1701
      %v1774 = vmul.f32 %v1476, %v1701
      %v1775 = vmul.f32 %v1480, %v1701
      %v1776 = vmul.f32 %v1484, %v1701
      %v1777 = vmul.f32 %v1488, %v1701
      %v1778 = vmul.f32 %v1492, %v1701
      %v1779 = vmul.f32 %v1496, %v1701
      %v1780 = vmul.f32 %v1500, %v1701
      %v1781 = vmul.f32 %v1504, %v1701
      %v1782 = vmul.f32 %v1508, %v1701
      %v1783 = vmul.f32 %v1512, %v1701
      %v1784 = vmul.f32 %v1516, %v1701
      %v1785 = vmul.f32 %v1520, %v1701
      %v1786 = vmul.f32 %v1524, %v1701
      %v1787 = vmul.f32 %v1528, %v1701
      %v1788 = vmul.f32 %v1532, %v1701
      %v1789 = vmul.f32 %v1536, %v1701
      %v1790 = vmul.f32 %v1540, %v1701
      %v1791 = vmul.f32 %v1544, %v1701
      %v1792 = vmul.f32 %v1548, %v1701
      %v1793 = vmul.f32 %v1552, %v1701
      %v1794 = vmul.f32 %v1556, %v1701
      %v1795 = vmul.f32 %v1560, %v1701
      %v1796 = vmul.f32 %v1564, %v1701
      %v1797 = vmul.f32 %v1568, %v1701
      %v1798 = vmul.f32 %v1572, %v1701
      %v1799 = vmul.f32 %v1576, %v1701
      %v1800 = vmul.f32 %v1580, %v1701
      %v1801 = vmul.f32 %v1584, %v1701
      %v1802 = vmul.f32 %v1588, %v1701
      %v1803 = vmul.f32 %v1592, %v1701
      %v1804 = vmul.f32 %v1596, %v1701
      %v1805 = vmul.f32 %v1600, %v1701
      %v1806 = vmul.f32 %v1604, %v1701
      %v1807 = vmul.f32 %v1608, %v1701
      %v1808 = vmul.f32 %v1612, %v1701
      %v1809 = vmul.f32 %v1616, %v1701
      %v1810 = vmul.f32 %v1620, %v1701
      %v1811 = vmul.f32 %v1624, %v1701
      %v1812 = vmul.f32 %v1628, %v1701
      %v1813 = vmul.f32 %v1632, %v1701
      %v1814 = vmul.f32 %v1636, %v1701
      %v1815 = vmul.f32 %v1640, %v1701
      %v1816 = vmul.f32 %v1644, %v1701
      %v1817 = vmul.f32 %v1648, %v1701
      %v1818 = vmul.f32 %v1652, %v1701
      %v1819 = vmul.f32 %v1656, %v1701
      %v1820 = vmul.f32 %v1660, %v1701
      %v1821 = vmul.f32 %v1664, %v1701
      %v1822 = vmul.f32 %v1668, %v1701
      %v1823 = vmul.f32 %v1672, %v1701
      %v1824 = vmul.f32 %v1676, %v1701
      %v1825 = vmul.f32 %v1680, %v1701
      %v1826 = vmul.f32 %v1684, %v1701
      %v1827 = vmul.f32 %v1688, %v1701
      %v1828 = vmul.f32 %v1692, %v1701
      %v1829 = vmul.f32 %v1696, %v1701
      %v1830 = vadd.f32 %v1058, %v1702
      %v1831 = vadd.f32 %v1059, %v1703
      %v1832 = vadd.f32 %v1060, %v1704
      %v1833 = vadd.f32 %v1061, %v1705
      %v1834 = vadd.f32 %v1062, %v1706
      %v1835 = vadd.f32 %v1063, %v1707
      %v1836 = vadd.f32 %v1064, %v1708
      %v1837 = vadd.f32 %v1065, %v1709
      %v1838 = vadd.f32 %v1066, %v1710
      %v1839 = vadd.f32 %v1067, %v1711
      %v1840 = vadd.f32 %v1068, %v1712
      %v1841 = vadd.f32 %v1069, %v1713
      %v1842 = vadd.f32 %v1070, %v1714
      %v1843 = vadd.f32 %v1071, %v1715
      %v1844 = vadd.f32 %v1072, %v1716
      %v1845 = vadd.f32 %v1073, %v1717
      %v1846 = vadd.f32 %v1074, %v1718
      %v1847 = vadd.f32 %v1075, %v1719
      %v1848 = vadd.f32 %v1076, %v1720
      %v1849 = vadd.f32 %v1077, %v1721
      %v1850 = vadd.f32 %v1078, %v1722
      %v1851 = vadd.f32 %v1079, %v1723
      %v1852 = vadd.f32 %v1080, %v1724
      %v1853 = vadd.f32 %v1081, %v1725
      %v1854 = vadd.f32 %v1082, %v1726
      %v1855 = vadd.f32 %v1083, %v1727
      %v1856 = vadd.f32 %v1084, %v1728
      %v1857 = vadd.f32 %v1085, %v1729
      %v1858 = vadd.f32 %v1086, %v1730
      %v1859 = vadd.f32 %v1087, %v1731
      %v1860 = vadd.f32 %v1088, %v1732
      %v1861 = vadd.f32 %v1089, %v1733
      %v1862 = vadd.f32 %v1090, %v1734
      %v1863 = vadd.f32 %v1091, %v1735
      %v1864 = vadd.f32 %v1092, %v1736
      %v1865 = vadd.f32 %v1093, %v1737
      %v1866 = vadd.f32 %v1094, %v1738
      %v1867 = vadd.f32 %v1095, %v1739
      %v1868 = vadd.f32 %v1096, %v1740
      %v1869 = vadd.f32 %v1097, %v1741
      %v1870 = vadd.f32 %v1098, %v1742
      %v1871 = vadd.f32 %v1099, %v1743
      %v1872 = vadd.f32 %v1100, %v1744
      %v1873 = vadd.f32 %v1101, %v1745
      %v1874 = vadd.f32 %v1102, %v1746
      %v1875 = vadd.f32 %v1103, %v1747
      %v1876 = vadd.f32 %v1104, %v1748
      %v1877 = vadd.f32 %v1105, %v1749
      %v1878 = vadd.f32 %v1106, %v1750
      %v1879 = vadd.f32 %v1107, %v1751
      %v1880 = vadd.f32 %v1108, %v1752
      %v1881 = vadd.f32 %v1109, %v1753
      %v1882 = vadd.f32 %v1110, %v1754
      %v1883 = vadd.f32 %v1111, %v1755
      %v1884 = vadd.f32 %v1112, %v1756
      %v1885 = vadd.f32 %v1113, %v1757
      %v1886 = vadd.f32 %v1114, %v1758
      %v1887 = vadd.f32 %v1115, %v1759
      %v1888 = vadd.f32 %v1116, %v1760
      %v1889 = vadd.f32 %v1117, %v1761
      %v1890 = vadd.f32 %v1118, %v1762
      %v1891 = vadd.f32 %v1119, %v1763
      %v1892 = vadd.f32 %v1120, %v1764
      %v1893 = vadd.f32 %v1121, %v1765
      %v1894 = vadd.f32 %v1122, %v1766
      %v1895 = vadd.f32 %v1123, %v1767
      %v1896 = vadd.f32 %v1124, %v1768
      %v1897 = vadd.f32 %v1125, %v1769
      %v1898 = vadd.f32 %v1126, %v1770
      %v1899 = vadd.f32 %v1127, %v1771
      %v1900 = vadd.f32 %v1128, %v1772
      %v1901 = vadd.f32 %v1129, %v1773
      %v1902 = vadd.f32 %v1130, %v1774
      %v1903 = vadd.f32 %v1131, %v1775
      %v1904 = vadd.f32 %v1132, %v1776
      %v1905 = vadd.f32 %v1133, %v1777
      %v1906 = vadd.f32 %v1134, %v1778
      %v1907 = vadd.f32 %v1135, %v1779
      %v1908 = vadd.f32 %v1136, %v1780
      %v1909 = vadd.f32 %v1137, %v1781
      %v1910 = vadd.f32 %v1138, %v1782
      %v1911 = vadd.f32 %v1139, %v1783
      %v1912 = vadd.f32 %v1140, %v1784
      %v1913 = vadd.f32 %v1141, %v1785
      %v1914 = vadd.f32 %v1142, %v1786
      %v1915 = vadd.f32 %v1143, %v1787
      %v1916 = vadd.f32 %v1144, %v1788
      %v1917 = vadd.f32 %v1145, %v1789
      %v1918 = vadd.f32 %v1146, %v1790
      %v1919 = vadd.f32 %v1147, %v1791
      %v1920 = vadd.f32 %v1148, %v1792
      %v1921 = vadd.f32 %v1149, %v1793
      %v1922 = vadd.f32 %v1150, %v1794
      %v1923 = vadd.f32 %v1151, %v1795
      %v1924 = vadd.f32 %v1152, %v1796
      %v1925 = vadd.f32 %v1153, %v1797
      %v1926 = vadd.f32 %v1154, %v1798
      %v1927 = vadd.f32 %v1155, %v1799
      %v1928 = vadd.f32 %v1156, %v1800
      %v1929 = vadd.f32 %v1157, %v1801
      %v1930 = vadd.f32 %v1158, %v1802
      %v1931 = vadd.f32 %v1159, %v1803
      %v1932 = vadd.f32 %v1160, %v1804
      %v1933 = vadd.f32 %v1161, %v1805
      %v1934 = vadd.f32 %v1162, %v1806
      %v1935 = vadd.f32 %v1163, %v1807
      %v1936 = vadd.f32 %v1164, %v1808
      %v1937 = vadd.f32 %v1165, %v1809
      %v1938 = vadd.f32 %v1166, %v1810
      %v1939 = vadd.f32 %v1167, %v1811
      %v1940 = vadd.f32 %v1168, %v1812
      %v1941 = vadd.f32 %v1169, %v1813
      %v1942 = vadd.f32 %v1170, %v1814
      %v1943 = vadd.f32 %v1171, %v1815
      %v1944 = vadd.f32 %v1172, %v1816
      %v1945 = vadd.f32 %v1173, %v1817
      %v1946 = vadd.f32 %v1174, %v1818
      %v1947 = vadd.f32 %v1175, %v1819
      %v1948 = vadd.f32 %v1176, %v1820
      %v1949 = vadd.f32 %v1177, %v1821
      %v1950 = vadd.f32 %v1178, %v1822
      %v1951 = vadd.f32 %v1179, %v1823
      %v1952 = vadd.f32 %v1180, %v1824
      %v1953 = vadd.f32 %v1181, %v1825
      %v1954 = vadd.f32 %v1182, %v1826
      %v1955 = vadd.f32 %v1183, %v1827
      %v1956 = vadd.f32 %v1184, %v1828
      %v1957 = vadd.f32 %v1185, %v1829
      %1958 = vset.pattern.permute.xlu0 2
      %1959 = vperm.xlu0 %1958, %v285
      %v1960 = vpop.permute.xlu0 %1959
      %1962 = vset.pattern.permute.xlu0 2
      %1963 = vperm.xlu0 %1962, %v286
      %v1964 = vpop.permute.xlu0 %1963
      %1966 = vset.pattern.permute.xlu0 2
      %1967 = vperm.xlu0 %1966, %v287
      %v1968 = vpop.permute.xlu0 %1967
      %1970 = vset.pattern.permute.xlu0 2
      %1971 = vperm.xlu0 %1970, %v288
      %v1972 = vpop.permute.xlu0 %1971
      %1974 = vset.pattern.permute.xlu0 2
      %1975 = vperm.xlu0 %1974, %v289
      %v1976 = vpop.permute.xlu0 %1975
      %1978 = vset.pattern.permute.xlu0 2
      %1979 = vperm.xlu0 %1978, %v290
      %v1980 = vpop.permute.xlu0 %1979
      %1982 = vset.pattern.permute.xlu0 2
      %1983 = vperm.xlu0 %1982, %v291
      %v1984 = vpop.permute.xlu0 %1983
      %1986 = vset.pattern.permute.xlu0 2
      %1987 = vperm.xlu0 %1986, %v292
      %v1988 = vpop.permute.xlu0 %1987
      %1990 = vset.pattern.permute.xlu0 2
      %1991 = vperm.xlu0 %1990, %v293
      %v1992 = vpop.permute.xlu0 %1991
      %1994 = vset.pattern.permute.xlu0 2
      %1995 = vperm.xlu0 %1994, %v294
      %v1996 = vpop.permute.xlu0 %1995
      %1998 = vset.pattern.permute.xlu0 2
      %1999 = vperm.xlu0 %1998, %v295
      %v2000 = vpop.permute.xlu0 %1999
      %2002 = vset.pattern.permute.xlu0 2
      %2003 = vperm.xlu0 %2002, %v296
      %v2004 = vpop.permute.xlu0 %2003
      %2006 = vset.pattern.permute.xlu0 2
      %2007 = vperm.xlu0 %2006, %v297
      %v2008 = vpop.permute.xlu0 %2007
      %2010 = vset.pattern.permute.xlu0 2
      %2011 = vperm.xlu0 %2010, %v298
      %v2012 = vpop.permute.xlu0 %2011
      %2014 = vset.pattern.permute.xlu0 2
      %2015 = vperm.xlu0 %2014, %v299
      %v2016 = vpop.permute.xlu0 %2015
      %2018 = vset.pattern.permute.xlu0 2
      %2019 = vperm.xlu0 %2018, %v300
      %v2020 = vpop.permute.xlu0 %2019
      %2022 = vset.pattern.permute.xlu0 2
      %2023 = vperm.xlu0 %2022, %v301
      %v2024 = vpop.permute.xlu0 %2023
      %2026 = vset.pattern.permute.xlu0 2
      %2027 = vperm.xlu0 %2026, %v302
      %v2028 = vpop.permute.xlu0 %2027
      %2030 = vset.pattern.permute.xlu0 2
      %2031 = vperm.xlu0 %2030, %v303
      %v2032 = vpop.permute.xlu0 %2031
      %2034 = vset.pattern.permute.xlu0 2
      %2035 = vperm.xlu0 %2034, %v304
      %v2036 = vpop.permute.xlu0 %2035
      %2038 = vset.pattern.permute.xlu0 2
      %2039 = vperm.xlu0 %2038, %v305
      %v2040 = vpop.permute.xlu0 %2039
      %2042 = vset.pattern.permute.xlu0 2
      %2043 = vperm.xlu0 %2042, %v306
      %v2044 = vpop.permute.xlu0 %2043
      %2046 = vset.pattern.permute.xlu0 2
      %2047 = vperm.xlu0 %2046, %v307
      %v2048 = vpop.permute.xlu0 %2047
      %2050 = vset.pattern.permute.xlu0 2
      %2051 = vperm.xlu0 %2050, %v308
      %v2052 = vpop.permute.xlu0 %2051
      %2054 = vset.pattern.permute.xlu0 2
      %2055 = vperm.xlu0 %2054, %v309
      %v2056 = vpop.permute.xlu0 %2055
      %2058 = vset.pattern.permute.xlu0 2
      %2059 = vperm.xlu0 %2058, %v310
      %v2060 = vpop.permute.xlu0 %2059
      %2062 = vset.pattern.permute.xlu0 2
      %2063 = vperm.xlu0 %2062, %v311
      %v2064 = vpop.permute.xlu0 %2063
      %2066 = vset.pattern.permute.xlu0 2
      %2067 = vperm.xlu0 %2066, %v312
      %v2068 = vpop.permute.xlu0 %2067
      %2070 = vset.pattern.permute.xlu0 2
      %2071 = vperm.xlu0 %2070, %v313
      %v2072 = vpop.permute.xlu0 %2071
      %2074 = vset.pattern.permute.xlu0 2
      %2075 = vperm.xlu0 %2074, %v314
      %v2076 = vpop.permute.xlu0 %2075
      %2078 = vset.pattern.permute.xlu0 2
      %2079 = vperm.xlu0 %2078, %v315
      %v2080 = vpop.permute.xlu0 %2079
      %2082 = vset.pattern.permute.xlu0 2
      %2083 = vperm.xlu0 %2082, %v316
      %v2084 = vpop.permute.xlu0 %2083
      %2086 = vset.pattern.permute.xlu0 2
      %2087 = vperm.xlu0 %2086, %v317
      %v2088 = vpop.permute.xlu0 %2087
      %2090 = vset.pattern.permute.xlu0 2
      %2091 = vperm.xlu0 %2090, %v318
      %v2092 = vpop.permute.xlu0 %2091
      %2094 = vset.pattern.permute.xlu0 2
      %2095 = vperm.xlu0 %2094, %v319
      %v2096 = vpop.permute.xlu0 %2095
      %2098 = vset.pattern.permute.xlu0 2
      %2099 = vperm.xlu0 %2098, %v320
      %v2100 = vpop.permute.xlu0 %2099
      %2102 = vset.pattern.permute.xlu0 2
      %2103 = vperm.xlu0 %2102, %v321
      %v2104 = vpop.permute.xlu0 %2103
      %2106 = vset.pattern.permute.xlu0 2
      %2107 = vperm.xlu0 %2106, %v322
      %v2108 = vpop.permute.xlu0 %2107
      %2110 = vset.pattern.permute.xlu0 2
      %2111 = vperm.xlu0 %2110, %v323
      %v2112 = vpop.permute.xlu0 %2111
      %2114 = vset.pattern.permute.xlu0 2
      %2115 = vperm.xlu0 %2114, %v324
      %v2116 = vpop.permute.xlu0 %2115
      %2118 = vset.pattern.permute.xlu0 2
      %2119 = vperm.xlu0 %2118, %v325
      %v2120 = vpop.permute.xlu0 %2119
      %2122 = vset.pattern.permute.xlu0 2
      %2123 = vperm.xlu0 %2122, %v326
      %v2124 = vpop.permute.xlu0 %2123
      %2126 = vset.pattern.permute.xlu0 2
      %2127 = vperm.xlu0 %2126, %v327
      %v2128 = vpop.permute.xlu0 %2127
      %2130 = vset.pattern.permute.xlu0 2
      %2131 = vperm.xlu0 %2130, %v328
      %v2132 = vpop.permute.xlu0 %2131
      %2134 = vset.pattern.permute.xlu0 2
      %2135 = vperm.xlu0 %2134, %v329
      %v2136 = vpop.permute.xlu0 %2135
      %2138 = vset.pattern.permute.xlu0 2
      %2139 = vperm.xlu0 %2138, %v330
      %v2140 = vpop.permute.xlu0 %2139
      %2142 = vset.pattern.permute.xlu0 2
      %2143 = vperm.xlu0 %2142, %v331
      %v2144 = vpop.permute.xlu0 %2143
      %2146 = vset.pattern.permute.xlu0 2
      %2147 = vperm.xlu0 %2146, %v332
      %v2148 = vpop.permute.xlu0 %2147
      %2150 = vset.pattern.permute.xlu0 2
      %2151 = vperm.xlu0 %2150, %v333
      %v2152 = vpop.permute.xlu0 %2151
      %2154 = vset.pattern.permute.xlu0 2
      %2155 = vperm.xlu0 %2154, %v334
      %v2156 = vpop.permute.xlu0 %2155
      %2158 = vset.pattern.permute.xlu0 2
      %2159 = vperm.xlu0 %2158, %v335
      %v2160 = vpop.permute.xlu0 %2159
      %2162 = vset.pattern.permute.xlu0 2
      %2163 = vperm.xlu0 %2162, %v336
      %v2164 = vpop.permute.xlu0 %2163
      %2166 = vset.pattern.permute.xlu0 2
      %2167 = vperm.xlu0 %2166, %v337
      %v2168 = vpop.permute.xlu0 %2167
      %2170 = vset.pattern.permute.xlu0 2
      %2171 = vperm.xlu0 %2170, %v338
      %v2172 = vpop.permute.xlu0 %2171
      %2174 = vset.pattern.permute.xlu0 2
      %2175 = vperm.xlu0 %2174, %v339
      %v2176 = vpop.permute.xlu0 %2175
      %2178 = vset.pattern.permute.xlu0 2
      %2179 = vperm.xlu0 %2178, %v340
      %v2180 = vpop.permute.xlu0 %2179
      %2182 = vset.pattern.permute.xlu0 2
      %2183 = vperm.xlu0 %2182, %v341
      %v2184 = vpop.permute.xlu0 %2183
      %2186 = vset.pattern.permute.xlu0 2
      %2187 = vperm.xlu0 %2186, %v342
      %v2188 = vpop.permute.xlu0 %2187
      %2190 = vset.pattern.permute.xlu0 2
      %2191 = vperm.xlu0 %2190, %v343
      %v2192 = vpop.permute.xlu0 %2191
      %2194 = vset.pattern.permute.xlu0 2
      %2195 = vperm.xlu0 %2194, %v344
      %v2196 = vpop.permute.xlu0 %2195
      %2198 = vset.pattern.permute.xlu0 2
      %2199 = vperm.xlu0 %2198, %v345
      %v2200 = vpop.permute.xlu0 %2199
      %2202 = vset.pattern.permute.xlu0 2
      %2203 = vperm.xlu0 %2202, %v346
      %v2204 = vpop.permute.xlu0 %2203
      %2206 = vset.pattern.permute.xlu0 2
      %2207 = vperm.xlu0 %2206, %v347
      %v2208 = vpop.permute.xlu0 %2207
      %2210 = vset.pattern.permute.xlu0 2
      %2211 = vperm.xlu0 %2210, %v348
      %v2212 = vpop.permute.xlu0 %2211
      %2214 = vset.pattern.permute.xlu0 2
      %2215 = vperm.xlu0 %2214, %v349
      %v2216 = vpop.permute.xlu0 %2215
      %2218 = vset.pattern.permute.xlu0 2
      %2219 = vperm.xlu0 %2218, %v350
      %v2220 = vpop.permute.xlu0 %2219
      %2222 = vset.pattern.permute.xlu0 2
      %2223 = vperm.xlu0 %2222, %v351
      %v2224 = vpop.permute.xlu0 %2223
      %2226 = vset.pattern.permute.xlu0 2
      %2227 = vperm.xlu0 %2226, %v352
      %v2228 = vpop.permute.xlu0 %2227
      %2230 = vset.pattern.permute.xlu0 2
      %2231 = vperm.xlu0 %2230, %v353
      %v2232 = vpop.permute.xlu0 %2231
      %2234 = vset.pattern.permute.xlu0 2
      %2235 = vperm.xlu0 %2234, %v354
      %v2236 = vpop.permute.xlu0 %2235
      %2238 = vset.pattern.permute.xlu0 2
      %2239 = vperm.xlu0 %2238, %v355
      %v2240 = vpop.permute.xlu0 %2239
      %2242 = vset.pattern.permute.xlu0 2
      %2243 = vperm.xlu0 %2242, %v356
      %v2244 = vpop.permute.xlu0 %2243
      %2246 = vset.pattern.permute.xlu0 2
      %2247 = vperm.xlu0 %2246, %v357
      %v2248 = vpop.permute.xlu0 %2247
      %2250 = vset.pattern.permute.xlu0 2
      %2251 = vperm.xlu0 %2250, %v358
      %v2252 = vpop.permute.xlu0 %2251
      %2254 = vset.pattern.permute.xlu0 2
      %2255 = vperm.xlu0 %2254, %v359
      %v2256 = vpop.permute.xlu0 %2255
      %2258 = vset.pattern.permute.xlu0 2
      %2259 = vperm.xlu0 %2258, %v360
      %v2260 = vpop.permute.xlu0 %2259
      %2262 = vset.pattern.permute.xlu0 2
      %2263 = vperm.xlu0 %2262, %v361
      %v2264 = vpop.permute.xlu0 %2263
      %2266 = vset.pattern.permute.xlu0 2
      %2267 = vperm.xlu0 %2266, %v362
      %v2268 = vpop.permute.xlu0 %2267
      %2270 = vset.pattern.permute.xlu0 2
      %2271 = vperm.xlu0 %2270, %v363
      %v2272 = vpop.permute.xlu0 %2271
      %2274 = vset.pattern.permute.xlu0 2
      %2275 = vperm.xlu0 %2274, %v364
      %v2276 = vpop.permute.xlu0 %2275
      %2278 = vset.pattern.permute.xlu0 2
      %2279 = vperm.xlu0 %2278, %v365
      %v2280 = vpop.permute.xlu0 %2279
      %2282 = vset.pattern.permute.xlu0 2
      %2283 = vperm.xlu0 %2282, %v366
      %v2284 = vpop.permute.xlu0 %2283
      %2286 = vset.pattern.permute.xlu0 2
      %2287 = vperm.xlu0 %2286, %v367
      %v2288 = vpop.permute.xlu0 %2287
      %2290 = vset.pattern.permute.xlu0 2
      %2291 = vperm.xlu0 %2290, %v368
      %v2292 = vpop.permute.xlu0 %2291
      %2294 = vset.pattern.permute.xlu0 2
      %2295 = vperm.xlu0 %2294, %v369
      %v2296 = vpop.permute.xlu0 %2295
      %2298 = vset.pattern.permute.xlu0 2
      %2299 = vperm.xlu0 %2298, %v370
      %v2300 = vpop.permute.xlu0 %2299
      %2302 = vset.pattern.permute.xlu0 2
      %2303 = vperm.xlu0 %2302, %v371
      %v2304 = vpop.permute.xlu0 %2303
      %2306 = vset.pattern.permute.xlu0 2
      %2307 = vperm.xlu0 %2306, %v372
      %v2308 = vpop.permute.xlu0 %2307
      %2310 = vset.pattern.permute.xlu0 2
      %2311 = vperm.xlu0 %2310, %v373
      %v2312 = vpop.permute.xlu0 %2311
      %2314 = vset.pattern.permute.xlu0 2
      %2315 = vperm.xlu0 %2314, %v374
      %v2316 = vpop.permute.xlu0 %2315
      %2318 = vset.pattern.permute.xlu0 2
      %2319 = vperm.xlu0 %2318, %v375
      %v2320 = vpop.permute.xlu0 %2319
      %2322 = vset.pattern.permute.xlu0 2
      %2323 = vperm.xlu0 %2322, %v376
      %v2324 = vpop.permute.xlu0 %2323
      %2326 = vset.pattern.permute.xlu0 2
      %2327 = vperm.xlu0 %2326, %v377
      %v2328 = vpop.permute.xlu0 %2327
      %2330 = vset.pattern.permute.xlu0 2
      %2331 = vperm.xlu0 %2330, %v378
      %v2332 = vpop.permute.xlu0 %2331
      %2334 = vset.pattern.permute.xlu0 2
      %2335 = vperm.xlu0 %2334, %v379
      %v2336 = vpop.permute.xlu0 %2335
      %2338 = vset.pattern.permute.xlu0 2
      %2339 = vperm.xlu0 %2338, %v380
      %v2340 = vpop.permute.xlu0 %2339
      %2342 = vset.pattern.permute.xlu0 2
      %2343 = vperm.xlu0 %2342, %v381
      %v2344 = vpop.permute.xlu0 %2343
      %2346 = vset.pattern.permute.xlu0 2
      %2347 = vperm.xlu0 %2346, %v382
      %v2348 = vpop.permute.xlu0 %2347
      %2350 = vset.pattern.permute.xlu0 2
      %2351 = vperm.xlu0 %2350, %v383
      %v2352 = vpop.permute.xlu0 %2351
      %2354 = vset.pattern.permute.xlu0 2
      %2355 = vperm.xlu0 %2354, %v384
      %v2356 = vpop.permute.xlu0 %2355
      %2358 = vset.pattern.permute.xlu0 2
      %2359 = vperm.xlu0 %2358, %v385
      %v2360 = vpop.permute.xlu0 %2359
      %2362 = vset.pattern.permute.xlu0 2
      %2363 = vperm.xlu0 %2362, %v386
      %v2364 = vpop.permute.xlu0 %2363
      %2366 = vset.pattern.permute.xlu0 2
      %2367 = vperm.xlu0 %2366, %v387
      %v2368 = vpop.permute.xlu0 %2367
      %2370 = vset.pattern.permute.xlu0 2
      %2371 = vperm.xlu0 %2370, %v388
      %v2372 = vpop.permute.xlu0 %2371
      %2374 = vset.pattern.permute.xlu0 2
      %2375 = vperm.xlu0 %2374, %v389
      %v2376 = vpop.permute.xlu0 %2375
      %2378 = vset.pattern.permute.xlu0 2
      %2379 = vperm.xlu0 %2378, %v390
      %v2380 = vpop.permute.xlu0 %2379
      %2382 = vset.pattern.permute.xlu0 2
      %2383 = vperm.xlu0 %2382, %v391
      %v2384 = vpop.permute.xlu0 %2383
      %2386 = vset.pattern.permute.xlu0 2
      %2387 = vperm.xlu0 %2386, %v392
      %v2388 = vpop.permute.xlu0 %2387
      %2390 = vset.pattern.permute.xlu0 2
      %2391 = vperm.xlu0 %2390, %v393
      %v2392 = vpop.permute.xlu0 %2391
      %2394 = vset.pattern.permute.xlu0 2
      %2395 = vperm.xlu0 %2394, %v394
      %v2396 = vpop.permute.xlu0 %2395
      %2398 = vset.pattern.permute.xlu0 2
      %2399 = vperm.xlu0 %2398, %v395
      %v2400 = vpop.permute.xlu0 %2399
      %2402 = vset.pattern.permute.xlu0 2
      %2403 = vperm.xlu0 %2402, %v396
      %v2404 = vpop.permute.xlu0 %2403
      %2406 = vset.pattern.permute.xlu0 2
      %2407 = vperm.xlu0 %2406, %v397
      %v2408 = vpop.permute.xlu0 %2407
      %2410 = vset.pattern.permute.xlu0 2
      %2411 = vperm.xlu0 %2410, %v398
      %v2412 = vpop.permute.xlu0 %2411
      %2414 = vset.pattern.permute.xlu0 2
      %2415 = vperm.xlu0 %2414, %v399
      %v2416 = vpop.permute.xlu0 %2415
      %2418 = vset.pattern.permute.xlu0 2
      %2419 = vperm.xlu0 %2418, %v400
      %v2420 = vpop.permute.xlu0 %2419
      %2422 = vset.pattern.permute.xlu0 2
      %2423 = vperm.xlu0 %2422, %v401
      %v2424 = vpop.permute.xlu0 %2423
      %2426 = vset.pattern.permute.xlu0 2
      %2427 = vperm.xlu0 %2426, %v402
      %v2428 = vpop.permute.xlu0 %2427
      %2430 = vset.pattern.permute.xlu0 2
      %2431 = vperm.xlu0 %2430, %v403
      %v2432 = vpop.permute.xlu0 %2431
      %2434 = vset.pattern.permute.xlu0 2
      %2435 = vperm.xlu0 %2434, %v404
      %v2436 = vpop.permute.xlu0 %2435
      %2438 = vset.pattern.permute.xlu0 2
      %2439 = vperm.xlu0 %2438, %v405
      %v2440 = vpop.permute.xlu0 %2439
      %2442 = vset.pattern.permute.xlu0 2
      %2443 = vperm.xlu0 %2442, %v406
      %v2444 = vpop.permute.xlu0 %2443
      %2446 = vset.pattern.permute.xlu0 2
      %2447 = vperm.xlu0 %2446, %v407
      %v2448 = vpop.permute.xlu0 %2447
      %2450 = vset.pattern.permute.xlu0 2
      %2451 = vperm.xlu0 %2450, %v408
      %v2452 = vpop.permute.xlu0 %2451
      %2454 = vset.pattern.permute.xlu0 2
      %2455 = vperm.xlu0 %2454, %v409
      %v2456 = vpop.permute.xlu0 %2455
      %2458 = vset.pattern.permute.xlu0 2
      %2459 = vperm.xlu0 %2458, %v410
      %v2460 = vpop.permute.xlu0 %2459
      %2462 = vset.pattern.permute.xlu0 2
      %2463 = vperm.xlu0 %2462, %v411
      %v2464 = vpop.permute.xlu0 %2463
      %2466 = vset.pattern.permute.xlu0 2
      %2467 = vperm.xlu0 %2466, %v412
      %v2468 = vpop.permute.xlu0 %2467
      %v2470 = vlaneseq
      %v2471 = vshrl.u32 %v2470, 7
      %v2472 = vsub.s32 2, %v2471
      %v2473 = vrot.slane %v413, %v2472
      %v2474 = vmul.f32 %v1960, %v2473
      %v2475 = vmul.f32 %v1964, %v2473
      %v2476 = vmul.f32 %v1968, %v2473
      %v2477 = vmul.f32 %v1972, %v2473
      %v2478 = vmul.f32 %v1976, %v2473
      %v2479 = vmul.f32 %v1980, %v2473
      %v2480 = vmul.f32 %v1984, %v2473
      %v2481 = vmul.f32 %v1988, %v2473
      %v2482 = vmul.f32 %v1992, %v2473
      %v2483 = vmul.f32 %v1996, %v2473
      %v2484 = vmul.f32 %v2000, %v2473
      %v2485 = vmul.f32 %v2004, %v2473
      %v2486 = vmul.f32 %v2008, %v2473
      %v2487 = vmul.f32 %v2012, %v2473
      %v2488 = vmul.f32 %v2016, %v2473
      %v2489 = vmul.f32 %v2020, %v2473
      %v2490 = vmul.f32 %v2024, %v2473
      %v2491 = vmul.f32 %v2028, %v2473
      %v2492 = vmul.f32 %v2032, %v2473
      %v2493 = vmul.f32 %v2036, %v2473
      %v2494 = vmul.f32 %v2040, %v2473
      %v2495 = vmul.f32 %v2044, %v2473
      %v2496 = vmul.f32 %v2048, %v2473
      %v2497 = vmul.f32 %v2052, %v2473
      %v2498 = vmul.f32 %v2056, %v2473
      %v2499 = vmul.f32 %v2060, %v2473
      %v2500 = vmul.f32 %v2064, %v2473
      %v2501 = vmul.f32 %v2068, %v2473
      %v2502 = vmul.f32 %v2072, %v2473
      %v2503 = vmul.f32 %v2076, %v2473
      %v2504 = vmul.f32 %v2080, %v2473
      %v2505 = vmul.f32 %v2084, %v2473
      %v2506 = vmul.f32 %v2088, %v2473
      %v2507 = vmul.f32 %v2092, %v2473
      %v2508 = vmul.f32 %v2096, %v2473
      %v2509 = vmul.f32 %v2100, %v2473
      %v2510 = vmul.f32 %v2104, %v2473
      %v2511 = vmul.f32 %v2108, %v2473
      %v2512 = vmul.f32 %v2112, %v2473
      %v2513 = vmul.f32 %v2116, %v2473
      %v2514 = vmul.f32 %v2120, %v2473
      %v2515 = vmul.f32 %v2124, %v2473
      %v2516 = vmul.f32 %v2128, %v2473
      %v2517 = vmul.f32 %v2132, %v2473
      %v2518 = vmul.f32 %v2136, %v2473
      %v2519 = vmul.f32 %v2140, %v2473
      %v2520 = vmul.f32 %v2144, %v2473
      %v2521 = vmul.f32 %v2148, %v2473
      %v2522 = vmul.f32 %v2152, %v2473
      %v2523 = vmul.f32 %v2156, %v2473
      %v2524 = vmul.f32 %v2160, %v2473
      %v2525 = vmul.f32 %v2164, %v2473
      %v2526 = vmul.f32 %v2168, %v2473
      %v2527 = vmul.f32 %v2172, %v2473
      %v2528 = vmul.f32 %v2176, %v2473
      %v2529 = vmul.f32 %v2180, %v2473
      %v2530 = vmul.f32 %v2184, %v2473
      %v2531 = vmul.f32 %v2188, %v2473
      %v2532 = vmul.f32 %v2192, %v2473
      %v2533 = vmul.f32 %v2196, %v2473
      %v2534 = vmul.f32 %v2200, %v2473
      %v2535 = vmul.f32 %v2204, %v2473
      %v2536 = vmul.f32 %v2208, %v2473
      %v2537 = vmul.f32 %v2212, %v2473
      %v2538 = vmul.f32 %v2216, %v2473
      %v2539 = vmul.f32 %v2220, %v2473
      %v2540 = vmul.f32 %v2224, %v2473
      %v2541 = vmul.f32 %v2228, %v2473
      %v2542 = vmul.f32 %v2232, %v2473
      %v2543 = vmul.f32 %v2236, %v2473
      %v2544 = vmul.f32 %v2240, %v2473
      %v2545 = vmul.f32 %v2244, %v2473
      %v2546 = vmul.f32 %v2248, %v2473
      %v2547 = vmul.f32 %v2252, %v2473
      %v2548 = vmul.f32 %v2256, %v2473
      %v2549 = vmul.f32 %v2260, %v2473
      %v2550 = vmul.f32 %v2264, %v2473
      %v2551 = vmul.f32 %v2268, %v2473
      %v2552 = vmul.f32 %v2272, %v2473
      %v2553 = vmul.f32 %v2276, %v2473
      %v2554 = vmul.f32 %v2280, %v2473
      %v2555 = vmul.f32 %v2284, %v2473
      %v2556 = vmul.f32 %v2288, %v2473
      %v2557 = vmul.f32 %v2292, %v2473
      %v2558 = vmul.f32 %v2296, %v2473
      %v2559 = vmul.f32 %v2300, %v2473
      %v2560 = vmul.f32 %v2304, %v2473
      %v2561 = vmul.f32 %v2308, %v2473
      %v2562 = vmul.f32 %v2312, %v2473
      %v2563 = vmul.f32 %v2316, %v2473
      %v2564 = vmul.f32 %v2320, %v2473
      %v2565 = vmul.f32 %v2324, %v2473
      %v2566 = vmul.f32 %v2328, %v2473
      %v2567 = vmul.f32 %v2332, %v2473
      %v2568 = vmul.f32 %v2336, %v2473
      %v2569 = vmul.f32 %v2340, %v2473
      %v2570 = vmul.f32 %v2344, %v2473
      %v2571 = vmul.f32 %v2348, %v2473
      %v2572 = vmul.f32 %v2352, %v2473
      %v2573 = vmul.f32 %v2356, %v2473
      %v2574 = vmul.f32 %v2360, %v2473
      %v2575 = vmul.f32 %v2364, %v2473
      %v2576 = vmul.f32 %v2368, %v2473
      %v2577 = vmul.f32 %v2372, %v2473
      %v2578 = vmul.f32 %v2376, %v2473
      %v2579 = vmul.f32 %v2380, %v2473
      %v2580 = vmul.f32 %v2384, %v2473
      %v2581 = vmul.f32 %v2388, %v2473
      %v2582 = vmul.f32 %v2392, %v2473
      %v2583 = vmul.f32 %v2396, %v2473
      %v2584 = vmul.f32 %v2400, %v2473
      %v2585 = vmul.f32 %v2404, %v2473
      %v2586 = vmul.f32 %v2408, %v2473
      %v2587 = vmul.f32 %v2412, %v2473
      %v2588 = vmul.f32 %v2416, %v2473
      %v2589 = vmul.f32 %v2420, %v2473
      %v2590 = vmul.f32 %v2424, %v2473
      %v2591 = vmul.f32 %v2428, %v2473
      %v2592 = vmul.f32 %v2432, %v2473
      %v2593 = vmul.f32 %v2436, %v2473
      %v2594 = vmul.f32 %v2440, %v2473
      %v2595 = vmul.f32 %v2444, %v2473
      %v2596 = vmul.f32 %v2448, %v2473
      %v2597 = vmul.f32 %v2452, %v2473
      %v2598 = vmul.f32 %v2456, %v2473
      %v2599 = vmul.f32 %v2460, %v2473
      %v2600 = vmul.f32 %v2464, %v2473
      %v2601 = vmul.f32 %v2468, %v2473
      %v2602 = vadd.f32 %v1830, %v2474
      %v2603 = vadd.f32 %v1831, %v2475
      %v2604 = vadd.f32 %v1832, %v2476
      %v2605 = vadd.f32 %v1833, %v2477
      %v2606 = vadd.f32 %v1834, %v2478
      %v2607 = vadd.f32 %v1835, %v2479
      %v2608 = vadd.f32 %v1836, %v2480
      %v2609 = vadd.f32 %v1837, %v2481
      %v2610 = vadd.f32 %v1838, %v2482
      %v2611 = vadd.f32 %v1839, %v2483
      %v2612 = vadd.f32 %v1840, %v2484
      %v2613 = vadd.f32 %v1841, %v2485
      %v2614 = vadd.f32 %v1842, %v2486
      %v2615 = vadd.f32 %v1843, %v2487
      %v2616 = vadd.f32 %v1844, %v2488
      %v2617 = vadd.f32 %v1845, %v2489
      %v2618 = vadd.f32 %v1846, %v2490
      %v2619 = vadd.f32 %v1847, %v2491
      %v2620 = vadd.f32 %v1848, %v2492
      %v2621 = vadd.f32 %v1849, %v2493
      %v2622 = vadd.f32 %v1850, %v2494
      %v2623 = vadd.f32 %v1851, %v2495
      %v2624 = vadd.f32 %v1852, %v2496
      %v2625 = vadd.f32 %v1853, %v2497
      %v2626 = vadd.f32 %v1854, %v2498
      %v2627 = vadd.f32 %v1855, %v2499
      %v2628 = vadd.f32 %v1856, %v2500
      %v2629 = vadd.f32 %v1857, %v2501
      %v2630 = vadd.f32 %v1858, %v2502
      %v2631 = vadd.f32 %v1859, %v2503
      %v2632 = vadd.f32 %v1860, %v2504
      %v2633 = vadd.f32 %v1861, %v2505
      %v2634 = vadd.f32 %v1862, %v2506
      %v2635 = vadd.f32 %v1863, %v2507
      %v2636 = vadd.f32 %v1864, %v2508
      %v2637 = vadd.f32 %v1865, %v2509
      %v2638 = vadd.f32 %v1866, %v2510
      %v2639 = vadd.f32 %v1867, %v2511
      %v2640 = vadd.f32 %v1868, %v2512
      %v2641 = vadd.f32 %v1869, %v2513
      %v2642 = vadd.f32 %v1870, %v2514
      %v2643 = vadd.f32 %v1871, %v2515
      %v2644 = vadd.f32 %v1872, %v2516
      %v2645 = vadd.f32 %v1873, %v2517
      %v2646 = vadd.f32 %v1874, %v2518
      %v2647 = vadd.f32 %v1875, %v2519
      %v2648 = vadd.f32 %v1876, %v2520
      %v2649 = vadd.f32 %v1877, %v2521
      %v2650 = vadd.f32 %v1878, %v2522
      %v2651 = vadd.f32 %v1879, %v2523
      %v2652 = vadd.f32 %v1880, %v2524
      %v2653 = vadd.f32 %v1881, %v2525
      %v2654 = vadd.f32 %v1882, %v2526
      %v2655 = vadd.f32 %v1883, %v2527
      %v2656 = vadd.f32 %v1884, %v2528
      %v2657 = vadd.f32 %v1885, %v2529
      %v2658 = vadd.f32 %v1886, %v2530
      %v2659 = vadd.f32 %v1887, %v2531
      %v2660 = vadd.f32 %v1888, %v2532
      %v2661 = vadd.f32 %v1889, %v2533
      %v2662 = vadd.f32 %v1890, %v2534
      %v2663 = vadd.f32 %v1891, %v2535
      %v2664 = vadd.f32 %v1892, %v2536
      %v2665 = vadd.f32 %v1893, %v2537
      %v2666 = vadd.f32 %v1894, %v2538
      %v2667 = vadd.f32 %v1895, %v2539
      %v2668 = vadd.f32 %v1896, %v2540
      %v2669 = vadd.f32 %v1897, %v2541
      %v2670 = vadd.f32 %v1898, %v2542
      %v2671 = vadd.f32 %v1899, %v2543
      %v2672 = vadd.f32 %v1900, %v2544
      %v2673 = vadd.f32 %v1901, %v2545
      %v2674 = vadd.f32 %v1902, %v2546
      %v2675 = vadd.f32 %v1903, %v2547
      %v2676 = vadd.f32 %v1904, %v2548
      %v2677 = vadd.f32 %v1905, %v2549
      %v2678 = vadd.f32 %v1906, %v2550
      %v2679 = vadd.f32 %v1907, %v2551
      %v2680 = vadd.f32 %v1908, %v2552
      %v2681 = vadd.f32 %v1909, %v2553
      %v2682 = vadd.f32 %v1910, %v2554
      %v2683 = vadd.f32 %v1911, %v2555
      %v2684 = vadd.f32 %v1912, %v2556
      %v2685 = vadd.f32 %v1913, %v2557
      %v2686 = vadd.f32 %v1914, %v2558
      %v2687 = vadd.f32 %v1915, %v2559
      %v2688 = vadd.f32 %v1916, %v2560
      %v2689 = vadd.f32 %v1917, %v2561
      %v2690 = vadd.f32 %v1918, %v2562
      %v2691 = vadd.f32 %v1919, %v2563
      %v2692 = vadd.f32 %v1920, %v2564
      %v2693 = vadd.f32 %v1921, %v2565
      %v2694 = vadd.f32 %v1922, %v2566
      %v2695 = vadd.f32 %v1923, %v2567
      %v2696 = vadd.f32 %v1924, %v2568
      %v2697 = vadd.f32 %v1925, %v2569
      %v2698 = vadd.f32 %v1926, %v2570
      %v2699 = vadd.f32 %v1927, %v2571
      %v2700 = vadd.f32 %v1928, %v2572
      %v2701 = vadd.f32 %v1929, %v2573
      %v2702 = vadd.f32 %v1930, %v2574
      %v2703 = vadd.f32 %v1931, %v2575
      %v2704 = vadd.f32 %v1932, %v2576
      %v2705 = vadd.f32 %v1933, %v2577
      %v2706 = vadd.f32 %v1934, %v2578
      %v2707 = vadd.f32 %v1935, %v2579
      %v2708 = vadd.f32 %v1936, %v2580
      %v2709 = vadd.f32 %v1937, %v2581
      %v2710 = vadd.f32 %v1938, %v2582
      %v2711 = vadd.f32 %v1939, %v2583
      %v2712 = vadd.f32 %v1940, %v2584
      %v2713 = vadd.f32 %v1941, %v2585
      %v2714 = vadd.f32 %v1942, %v2586
      %v2715 = vadd.f32 %v1943, %v2587
      %v2716 = vadd.f32 %v1944, %v2588
      %v2717 = vadd.f32 %v1945, %v2589
      %v2718 = vadd.f32 %v1946, %v2590
      %v2719 = vadd.f32 %v1947, %v2591
      %v2720 = vadd.f32 %v1948, %v2592
      %v2721 = vadd.f32 %v1949, %v2593
      %v2722 = vadd.f32 %v1950, %v2594
      %v2723 = vadd.f32 %v1951, %v2595
      %v2724 = vadd.f32 %v1952, %v2596
      %v2725 = vadd.f32 %v1953, %v2597
      %v2726 = vadd.f32 %v1954, %v2598
      %v2727 = vadd.f32 %v1955, %v2599
      %v2728 = vadd.f32 %v1956, %v2600
      %v2729 = vadd.f32 %v1957, %v2601
      %v2730 = vld [vmem:[%s2] sm:$0x1]
      %v2732 = vlaneseq
      %v2733 = vshrl.u32 %v2732, 7
      %v2734 = vsub.s32 0, %v2733
      %v2735 = vrot.slane %v2730, %v2734
      %v2737 = vadd.f32 %v2602, %v2735
      %v2738 = vadd.f32 %v2603, %v2735
      %v2739 = vadd.f32 %v2604, %v2735
      %v2740 = vadd.f32 %v2605, %v2735
      %v2741 = vadd.f32 %v2606, %v2735
      %v2742 = vadd.f32 %v2607, %v2735
      %v2743 = vadd.f32 %v2608, %v2735
      %v2744 = vadd.f32 %v2609, %v2735
      %v2745 = vadd.f32 %v2610, %v2735
      %v2746 = vadd.f32 %v2611, %v2735
      %v2747 = vadd.f32 %v2612, %v2735
      %v2748 = vadd.f32 %v2613, %v2735
      %v2749 = vadd.f32 %v2614, %v2735
      %v2750 = vadd.f32 %v2615, %v2735
      %v2751 = vadd.f32 %v2616, %v2735
      %v2752 = vadd.f32 %v2617, %v2735
      %v2753 = vadd.f32 %v2618, %v2735
      %v2754 = vadd.f32 %v2619, %v2735
      %v2755 = vadd.f32 %v2620, %v2735
      %v2756 = vadd.f32 %v2621, %v2735
      %v2757 = vadd.f32 %v2622, %v2735
      %v2758 = vadd.f32 %v2623, %v2735
      %v2759 = vadd.f32 %v2624, %v2735
      %v2760 = vadd.f32 %v2625, %v2735
      %v2761 = vadd.f32 %v2626, %v2735
      %v2762 = vadd.f32 %v2627, %v2735
      %v2763 = vadd.f32 %v2628, %v2735
      %v2764 = vadd.f32 %v2629, %v2735
      %v2765 = vadd.f32 %v2630, %v2735
      %v2766 = vadd.f32 %v2631, %v2735
      %v2767 = vadd.f32 %v2632, %v2735
      %v2768 = vadd.f32 %v2633, %v2735
      %v2769 = vadd.f32 %v2634, %v2735
      %v2770 = vadd.f32 %v2635, %v2735
      %v2771 = vadd.f32 %v2636, %v2735
      %v2772 = vadd.f32 %v2637, %v2735
      %v2773 = vadd.f32 %v2638, %v2735
      %v2774 = vadd.f32 %v2639, %v2735
      %v2775 = vadd.f32 %v2640, %v2735
      %v2776 = vadd.f32 %v2641, %v2735
      %v2777 = vadd.f32 %v2642, %v2735
      %v2778 = vadd.f32 %v2643, %v2735
      %v2779 = vadd.f32 %v2644, %v2735
      %v2780 = vadd.f32 %v2645, %v2735
      %v2781 = vadd.f32 %v2646, %v2735
      %v2782 = vadd.f32 %v2647, %v2735
      %v2783 = vadd.f32 %v2648, %v2735
      %v2784 = vadd.f32 %v2649, %v2735
      %v2785 = vadd.f32 %v2650, %v2735
      %v2786 = vadd.f32 %v2651, %v2735
      %v2787 = vadd.f32 %v2652, %v2735
      %v2788 = vadd.f32 %v2653, %v2735
      %v2789 = vadd.f32 %v2654, %v2735
      %v2790 = vadd.f32 %v2655, %v2735
      %v2791 = vadd.f32 %v2656, %v2735
      %v2792 = vadd.f32 %v2657, %v2735
      %v2793 = vadd.f32 %v2658, %v2735
      %v2794 = vadd.f32 %v2659, %v2735
      %v2795 = vadd.f32 %v2660, %v2735
      %v2796 = vadd.f32 %v2661, %v2735
      %v2797 = vadd.f32 %v2662, %v2735
      %v2798 = vadd.f32 %v2663, %v2735
      %v2799 = vadd.f32 %v2664, %v2735
      %v2800 = vadd.f32 %v2665, %v2735
      %v2801 = vadd.f32 %v2666, %v2735
      %v2802 = vadd.f32 %v2667, %v2735
      %v2803 = vadd.f32 %v2668, %v2735
      %v2804 = vadd.f32 %v2669, %v2735
      %v2805 = vadd.f32 %v2670, %v2735
      %v2806 = vadd.f32 %v2671, %v2735
      %v2807 = vadd.f32 %v2672, %v2735
      %v2808 = vadd.f32 %v2673, %v2735
      %v2809 = vadd.f32 %v2674, %v2735
      %v2810 = vadd.f32 %v2675, %v2735
      %v2811 = vadd.f32 %v2676, %v2735
      %v2812 = vadd.f32 %v2677, %v2735
      %v2813 = vadd.f32 %v2678, %v2735
      %v2814 = vadd.f32 %v2679, %v2735
      %v2815 = vadd.f32 %v2680, %v2735
      %v2816 = vadd.f32 %v2681, %v2735
      %v2817 = vadd.f32 %v2682, %v2735
      %v2818 = vadd.f32 %v2683, %v2735
      %v2819 = vadd.f32 %v2684, %v2735
      %v2820 = vadd.f32 %v2685, %v2735
      %v2821 = vadd.f32 %v2686, %v2735
      %v2822 = vadd.f32 %v2687, %v2735
      %v2823 = vadd.f32 %v2688, %v2735
      %v2824 = vadd.f32 %v2689, %v2735
      %v2825 = vadd.f32 %v2690, %v2735
      %v2826 = vadd.f32 %v2691, %v2735
      %v2827 = vadd.f32 %v2692, %v2735
      %v2828 = vadd.f32 %v2693, %v2735
      %v2829 = vadd.f32 %v2694, %v2735
      %v2830 = vadd.f32 %v2695, %v2735
      %v2831 = vadd.f32 %v2696, %v2735
      %v2832 = vadd.f32 %v2697, %v2735
      %v2833 = vadd.f32 %v2698, %v2735
      %v2834 = vadd.f32 %v2699, %v2735
      %v2835 = vadd.f32 %v2700, %v2735
      %v2836 = vadd.f32 %v2701, %v2735
      %v2837 = vadd.f32 %v2702, %v2735
      %v2838 = vadd.f32 %v2703, %v2735
      %v2839 = vadd.f32 %v2704, %v2735
      %v2840 = vadd.f32 %v2705, %v2735
      %v2841 = vadd.f32 %v2706, %v2735
      %v2842 = vadd.f32 %v2707, %v2735
      %v2843 = vadd.f32 %v2708, %v2735
      %v2844 = vadd.f32 %v2709, %v2735
      %v2845 = vadd.f32 %v2710, %v2735
      %v2846 = vadd.f32 %v2711, %v2735
      %v2847 = vadd.f32 %v2712, %v2735
      %v2848 = vadd.f32 %v2713, %v2735
      %v2849 = vadd.f32 %v2714, %v2735
      %v2850 = vadd.f32 %v2715, %v2735
      %v2851 = vadd.f32 %v2716, %v2735
      %v2852 = vadd.f32 %v2717, %v2735
      %v2853 = vadd.f32 %v2718, %v2735
      %v2854 = vadd.f32 %v2719, %v2735
      %v2855 = vadd.f32 %v2720, %v2735
      %v2856 = vadd.f32 %v2721, %v2735
      %v2857 = vadd.f32 %v2722, %v2735
      %v2858 = vadd.f32 %v2723, %v2735
      %v2859 = vadd.f32 %v2724, %v2735
      %v2860 = vadd.f32 %v2725, %v2735
      %v2861 = vadd.f32 %v2726, %v2735
      %v2862 = vadd.f32 %v2727, %v2735
      %v2863 = vadd.f32 %v2728, %v2735
      %v2864 = vadd.f32 %v2729, %v2735
      %v2865 = vmax.f32 %v2737, 0.0
      %v2866 = vmax.f32 %v2738, 0.0
      %v2867 = vmax.f32 %v2739, 0.0
      %v2868 = vmax.f32 %v2740, 0.0
      %v2869 = vmax.f32 %v2741, 0.0
      %v2870 = vmax.f32 %v2742, 0.0
      %v2871 = vmax.f32 %v2743, 0.0
      %v2872 = vmax.f32 %v2744, 0.0
      %v2873 = vmax.f32 %v2745, 0.0
      %v2874 = vmax.f32 %v2746, 0.0
      %v2875 = vmax.f32 %v2747, 0.0
      %v2876 = vmax.f32 %v2748, 0.0
      %v2877 = vmax.f32 %v2749, 0.0
      %v2878 = vmax.f32 %v2750, 0.0
      %v2879 = vmax.f32 %v2751, 0.0
      %v2880 = vmax.f32 %v2752, 0.0
      %v2881 = vmax.f32 %v2753, 0.0
      %v2882 = vmax.f32 %v2754, 0.0
      %v2883 = vmax.f32 %v2755, 0.0
      %v2884 = vmax.f32 %v2756, 0.0
      %v2885 = vmax.f32 %v2757, 0.0
      %v2886 = vmax.f32 %v2758, 0.0
      %v2887 = vmax.f32 %v2759, 0.0
      %v2888 = vmax.f32 %v2760, 0.0
      %v2889 = vmax.f32 %v2761, 0.0
      %v2890 = vmax.f32 %v2762, 0.0
      %v2891 = vmax.f32 %v2763, 0.0
      %v2892 = vmax.f32 %v2764, 0.0
      %v2893 = vmax.f32 %v2765, 0.0
      %v2894 = vmax.f32 %v2766, 0.0
      %v2895 = vmax.f32 %v2767, 0.0
      %v2896 = vmax.f32 %v2768, 0.0
      %v2897 = vmax.f32 %v2769, 0.0
      %v2898 = vmax.f32 %v2770, 0.0
      %v2899 = vmax.f32 %v2771, 0.0
      %v2900 = vmax.f32 %v2772, 0.0
      %v2901 = vmax.f32 %v2773, 0.0
      %v2902 = vmax.f32 %v2774, 0.0
      %v2903 = vmax.f32 %v2775, 0.0
      %v2904 = vmax.f32 %v2776, 0.0
      %v2905 = vmax.f32 %v2777, 0.0
      %v2906 = vmax.f32 %v2778, 0.0
      %v2907 = vmax.f32 %v2779, 0.0
      %v2908 = vmax.f32 %v2780, 0.0
      %v2909 = vmax.f32 %v2781, 0.0
      %v2910 = vmax.f32 %v2782, 0.0
      %v2911 = vmax.f32 %v2783, 0.0
      %v2912 = vmax.f32 %v2784, 0.0
      %v2913 = vmax.f32 %v2785, 0.0
      %v2914 = vmax.f32 %v2786, 0.0
      %v2915 = vmax.f32 %v2787, 0.0
      %v2916 = vmax.f32 %v2788, 0.0
      %v2917 = vmax.f32 %v2789, 0.0
      %v2918 = vmax.f32 %v2790, 0.0
      %v2919 = vmax.f32 %v2791, 0.0
      %v2920 = vmax.f32 %v2792, 0.0
      %v2921 = vmax.f32 %v2793, 0.0
      %v2922 = vmax.f32 %v2794, 0.0
      %v2923 = vmax.f32 %v2795, 0.0
      %v2924 = vmax.f32 %v2796, 0.0
      %v2925 = vmax.f32 %v2797, 0.0
      %v2926 = vmax.f32 %v2798, 0.0
      %v2927 = vmax.f32 %v2799, 0.0
      %v2928 = vmax.f32 %v2800, 0.0
      %v2929 = vmax.f32 %v2801, 0.0
      %v2930 = vmax.f32 %v2802, 0.0
      %v2931 = vmax.f32 %v2803, 0.0
      %v2932 = vmax.f32 %v2804, 0.0
      %v2933 = vmax.f32 %v2805, 0.0
      %v2934 = vmax.f32 %v2806, 0.0
      %v2935 = vmax.f32 %v2807, 0.0
      %v2936 = vmax.f32 %v2808, 0.0
      %v2937 = vmax.f32 %v2809, 0.0
      %v2938 = vmax.f32 %v2810, 0.0
      %v2939 = vmax.f32 %v2811, 0.0
      %v2940 = vmax.f32 %v2812, 0.0
      %v2941 = vmax.f32 %v2813, 0.0
      %v2942 = vmax.f32 %v2814, 0.0
      %v2943 = vmax.f32 %v2815, 0.0
      %v2944 = vmax.f32 %v2816, 0.0
      %v2945 = vmax.f32 %v2817, 0.0
      %v2946 = vmax.f32 %v2818, 0.0
      %v2947 = vmax.f32 %v2819, 0.0
      %v2948 = vmax.f32 %v2820, 0.0
      %v2949 = vmax.f32 %v2821, 0.0
      %v2950 = vmax.f32 %v2822, 0.0
      %v2951 = vmax.f32 %v2823, 0.0
      %v2952 = vmax.f32 %v2824, 0.0
      %v2953 = vmax.f32 %v2825, 0.0
      %v2954 = vmax.f32 %v2826, 0.0
      %v2955 = vmax.f32 %v2827, 0.0
      %v2956 = vmax.f32 %v2828, 0.0
      %v2957 = vmax.f32 %v2829, 0.0
      %v2958 = vmax.f32 %v2830, 0.0
      %v2959 = vmax.f32 %v2831, 0.0
      %v2960 = vmax.f32 %v2832, 0.0
      %v2961 = vmax.f32 %v2833, 0.0
      %v2962 = vmax.f32 %v2834, 0.0
      %v2963 = vmax.f32 %v2835, 0.0
      %v2964 = vmax.f32 %v2836, 0.0
      %v2965 = vmax.f32 %v2837, 0.0
      %v2966 = vmax.f32 %v2838, 0.0
      %v2967 = vmax.f32 %v2839, 0.0
      %v2968 = vmax.f32 %v2840, 0.0
      %v2969 = vmax.f32 %v2841, 0.0
      %v2970 = vmax.f32 %v2842, 0.0
      %v2971 = vmax.f32 %v2843, 0.0
      %v2972 = vmax.f32 %v2844, 0.0
      %v2973 = vmax.f32 %v2845, 0.0
      %v2974 = vmax.f32 %v2846, 0.0
      %v2975 = vmax.f32 %v2847, 0.0
      %v2976 = vmax.f32 %v2848, 0.0
      %v2977 = vmax.f32 %v2849, 0.0
      %v2978 = vmax.f32 %v2850, 0.0
      %v2979 = vmax.f32 %v2851, 0.0
      %v2980 = vmax.f32 %v2852, 0.0
      %v2981 = vmax.f32 %v2853, 0.0
      %v2982 = vmax.f32 %v2854, 0.0
      %v2983 = vmax.f32 %v2855, 0.0
      %v2984 = vmax.f32 %v2856, 0.0
      %v2985 = vmax.f32 %v2857, 0.0
      %v2986 = vmax.f32 %v2858, 0.0
      %v2987 = vmax.f32 %v2859, 0.0
      %v2988 = vmax.f32 %v2860, 0.0
      %v2989 = vmax.f32 %v2861, 0.0
      %v2990 = vmax.f32 %v2862, 0.0
      %v2991 = vmax.f32 %v2863, 0.0
      %v2992 = vmax.f32 %v2864, 0.0
      %v2993 = vpack.c.bf16 %v2866, %v2865
      %v2994 = vpack.c.bf16 %v2868, %v2867
      %v2995 = vpack.c.bf16 %v2870, %v2869
      %v2996 = vpack.c.bf16 %v2872, %v2871
      %v2997 = vpack.c.bf16 %v2874, %v2873
      %v2998 = vpack.c.bf16 %v2876, %v2875
      %v2999 = vpack.c.bf16 %v2878, %v2877
      %v3000 = vpack.c.bf16 %v2880, %v2879
      %v3001 = vpack.c.bf16 %v2882, %v2881
      %v3002 = vpack.c.bf16 %v2884, %v2883
      %v3003 = vpack.c.bf16 %v2886, %v2885
      %v3004 = vpack.c.bf16 %v2888, %v2887
      %v3005 = vpack.c.bf16 %v2890, %v2889
      %v3006 = vpack.c.bf16 %v2892, %v2891
      %v3007 = vpack.c.bf16 %v2894, %v2893
      %v3008 = vpack.c.bf16 %v2896, %v2895
      %v3009 = vpack.c.bf16 %v2898, %v2897
      %v3010 = vpack.c.bf16 %v2900, %v2899
      %v3011 = vpack.c.bf16 %v2902, %v2901
      %v3012 = vpack.c.bf16 %v2904, %v2903
      %v3013 = vpack.c.bf16 %v2906, %v2905
      %v3014 = vpack.c.bf16 %v2908, %v2907
      %v3015 = vpack.c.bf16 %v2910, %v2909
      %v3016 = vpack.c.bf16 %v2912, %v2911
      %v3017 = vpack.c.bf16 %v2914, %v2913
      %v3018 = vpack.c.bf16 %v2916, %v2915
      %v3019 = vpack.c.bf16 %v2918, %v2917
      %v3020 = vpack.c.bf16 %v2920, %v2919
      %v3021 = vpack.c.bf16 %v2922, %v2921
      %v3022 = vpack.c.bf16 %v2924, %v2923
      %v3023 = vpack.c.bf16 %v2926, %v2925
      %v3024 = vpack.c.bf16 %v2928, %v2927
      %v3025 = vpack.c.bf16 %v2930, %v2929
      %v3026 = vpack.c.bf16 %v2932, %v2931
      %v3027 = vpack.c.bf16 %v2934, %v2933
      %v3028 = vpack.c.bf16 %v2936, %v2935
      %v3029 = vpack.c.bf16 %v2938, %v2937
      %v3030 = vpack.c.bf16 %v2940, %v2939
      %v3031 = vpack.c.bf16 %v2942, %v2941
      %v3032 = vpack.c.bf16 %v2944, %v2943
      %v3033 = vpack.c.bf16 %v2946, %v2945
      %v3034 = vpack.c.bf16 %v2948, %v2947
      %v3035 = vpack.c.bf16 %v2950, %v2949
      %v3036 = vpack.c.bf16 %v2952, %v2951
      %v3037 = vpack.c.bf16 %v2954, %v2953
      %v3038 = vpack.c.bf16 %v2956, %v2955
      %v3039 = vpack.c.bf16 %v2958, %v2957
      %v3040 = vpack.c.bf16 %v2960, %v2959
      %v3041 = vpack.c.bf16 %v2962, %v2961
      %v3042 = vpack.c.bf16 %v2964, %v2963
      %v3043 = vpack.c.bf16 %v2966, %v2965
      %v3044 = vpack.c.bf16 %v2968, %v2967
      %v3045 = vpack.c.bf16 %v2970, %v2969
      %v3046 = vpack.c.bf16 %v2972, %v2971
      %v3047 = vpack.c.bf16 %v2974, %v2973
      %v3048 = vpack.c.bf16 %v2976, %v2975
      %v3049 = vpack.c.bf16 %v2978, %v2977
      %v3050 = vpack.c.bf16 %v2980, %v2979
      %v3051 = vpack.c.bf16 %v2982, %v2981
      %v3052 = vpack.c.bf16 %v2984, %v2983
      %v3053 = vpack.c.bf16 %v2986, %v2985
      %v3054 = vpack.c.bf16 %v2988, %v2987
      %v3055 = vpack.c.bf16 %v2990, %v2989
      %v3056 = vpack.c.bf16 %v2992, %v2991
      %v3057 = vld [vmem:[%s3] sm:$0xf]
      %v3058 = vld [vmem:[%s3 + $0x4] sm:$0xf]
      %v3059 = vld [vmem:[%s3 + $0x8] sm:$0xf]
      %v3060 = vld [vmem:[%s3 + $0xc] sm:$0xf]
      %v3061 = vld [vmem:[%s3 + $0x10] sm:$0xf]
      %v3062 = vld [vmem:[%s3 + $0x14] sm:$0xf]
      %v3063 = vld [vmem:[%s3 + $0x18] sm:$0xf]
      %v3064 = vld [vmem:[%s3 + $0x1c] sm:$0xf]
      %v3065 = vld [vmem:[%s4] sm:$0x1]
      %v3067 = vlaneseq
      %v3068 = vshrl.u32 %v3067, 7
      %v3069 = vsub.s32 0, %v3068
      %v3070 = vrot.slane %v3065, %v3069
      %v3080 = vunpack.c.l.b16 %v3057
      %v3081 = vunpack.c.l.b16 %v3058
      %v3082 = vunpack.c.l.b16 %v3059
      %v3083 = vunpack.c.l.b16 %v3060
      %v3084 = vunpack.c.l.b16 %v3061
      %v3085 = vunpack.c.l.b16 %v3062
      %v3086 = vunpack.c.l.b16 %v3063
      %v3087 = vunpack.c.l.b16 %v3064
      %v3088 = vpack.c.b16 %v3081, %v3080
      %v3089 = vpack.c.b16 %v3083, %v3082
      %v3090 = vpack.c.b16 %v3085, %v3084
      %v3091 = vpack.c.b16 %v3087, %v3086
      %vm3096 = vcmask 523264
      %v3098 = vsel %vm3096, %v2993, 0
      %v3101 = vsel %vm3096, %v2994, 0
      %v3104 = vsel %vm3096, %v2995, 0
      %v3107 = vsel %vm3096, %v2996, 0
      %v3110 = vsel %vm3096, %v2997, 0
      %v3113 = vsel %vm3096, %v2998, 0
      %v3116 = vsel %vm3096, %v2999, 0
      %v3119 = vsel %vm3096, %v3000, 0
      %v3122 = vsel %vm3096, %v3001, 0
      %v3125 = vsel %vm3096, %v3002, 0
      %v3128 = vsel %vm3096, %v3003, 0
      %v3131 = vsel %vm3096, %v3004, 0
      %v3134 = vsel %vm3096, %v3005, 0
      %v3137 = vsel %vm3096, %v3006, 0
      %v3140 = vsel %vm3096, %v3007, 0
      %v3143 = vsel %vm3096, %v3008, 0
      %v3146 = vsel %vm3096, %v3009, 0
      %v3149 = vsel %vm3096, %v3010, 0
      %v3152 = vsel %vm3096, %v3011, 0
      %v3155 = vsel %vm3096, %v3012, 0
      %v3158 = vsel %vm3096, %v3013, 0
      %v3161 = vsel %vm3096, %v3014, 0
      %v3164 = vsel %vm3096, %v3015, 0
      %v3167 = vsel %vm3096, %v3016, 0
      %v3170 = vsel %vm3096, %v3017, 0
      %v3173 = vsel %vm3096, %v3018, 0
      %v3176 = vsel %vm3096, %v3019, 0
      %v3179 = vsel %vm3096, %v3020, 0
      %v3182 = vsel %vm3096, %v3021, 0
      %v3185 = vsel %vm3096, %v3022, 0
      %v3188 = vsel %vm3096, %v3023, 0
      %v3191 = vsel %vm3096, %v3024, 0
      %v3194 = vsel %vm3096, %v3025, 0
      %v3197 = vsel %vm3096, %v3026, 0
      %v3200 = vsel %vm3096, %v3027, 0
      %v3203 = vsel %vm3096, %v3028, 0
      %v3206 = vsel %vm3096, %v3029, 0
      %v3209 = vsel %vm3096, %v3030, 0
      %v3212 = vsel %vm3096, %v3031, 0
      %v3215 = vsel %vm3096, %v3032, 0
      %v3218 = vsel %vm3096, %v3033, 0
      %v3221 = vsel %vm3096, %v3034, 0
      %v3224 = vsel %vm3096, %v3035, 0
      %v3227 = vsel %vm3096, %v3036, 0
      %v3230 = vsel %vm3096, %v3037, 0
      %v3233 = vsel %vm3096, %v3038, 0
      %v3236 = vsel %vm3096, %v3039, 0
      %v3239 = vsel %vm3096, %v3040, 0
      %v3242 = vsel %vm3096, %v3041, 0
      %v3245 = vsel %vm3096, %v3042, 0
      %v3248 = vsel %vm3096, %v3043, 0
      %v3251 = vsel %vm3096, %v3044, 0
      %v3254 = vsel %vm3096, %v3045, 0
      %v3257 = vsel %vm3096, %v3046, 0
      %v3260 = vsel %vm3096, %v3047, 0
      %v3263 = vsel %vm3096, %v3048, 0
      %v3266 = vsel %vm3096, %v3049, 0
      %v3269 = vsel %vm3096, %v3050, 0
      %v3272 = vsel %vm3096, %v3051, 0
      %v3275 = vsel %vm3096, %v3052, 0
      %v3278 = vsel %vm3096, %v3053, 0
      %v3281 = vsel %vm3096, %v3054, 0
      %v3284 = vsel %vm3096, %v3055, 0
      %v3287 = vsel %vm3096, %v3056, 0
      %3289 = vmatprep.subr.bf16.mxu0 0
      %3290 = vmatpush1.bf16.msra.mxu0 0
      %3291 = vmatprep.subr.bf16.mxu0 0
      %3292 = vmatpush1.bf16.msra.mxu0 0
      %3293 = vmatprep.subr.bf16.mxu0 0
      %3294 = vmatpush1.bf16.msra.mxu0 0
      %3295 = vmatprep.subr.bf16.mxu0 0
      %3296 = vmatpush1.bf16.msra.mxu0 0
      %3297 = vmatprep.subr.bf16.mxu0 0
      %3298 = vmatpush1.bf16.msra.mxu0 %v3091
      %3299 = vmatprep.subr.bf16.mxu0 0
      %3300 = vmatpush1.bf16.msra.mxu0 %v3090
      %3301 = vmatprep.subr.bf16.mxu0 0
      %3302 = vmatpush1.bf16.msra.mxu0 %v3089
      %3303 = vmatprep.subr.bf16.mxu0 0
      %3304 = vmatpush1.bf16.msra.mxu0 %v3088
      %3305 = vmatprep.subr.bf16.mxu0 0
      %3306 = vmatpush2.bf16.msra.mxu0 0
      %3307 = vmatprep.subr.bf16.mxu0 0
      %3308 = vmatpush2.bf16.msra.mxu0 0
      %3309 = vmatprep.subr.bf16.mxu0 0
      %3310 = vmatpush2.bf16.msra.mxu0 0
      %3311 = vmatprep.subr.bf16.mxu0 0
      %3312 = vmatpush2.bf16.msra.mxu0 0
      %3313 = vmatprep.subr.bf16.mxu0 0
      %3314 = vmatpush2.bf16.msra.mxu0 0
      %3315 = vmatprep.subr.bf16.mxu0 0
      %3316 = vmatpush2.bf16.msra.mxu0 0
      %3317 = vmatprep.subr.bf16.mxu0 0
      %3318 = vmatpush2.bf16.msra.mxu0 0
      %3319 = vmatprep.subr.bf16.mxu0 0
      %3320 = vmatpush2.bf16.msra.mxu0 0
      %3321 = vmatprep.mubr.bf16.mxu0 0
      %3322 = vmatmul.mubr.bf16.gmra.mxu0 %v3098
      %v3323 = vpop.f32.mrf.mxu0
      %v3324 = vadd.f32 %v3070, %v3323
      %v3325 = vpop.f32.mrf.mxu0
      %v3326 = vpop.f32.mrf.mxu0
      %v3327 = vadd.f32 %v3070, %v3326
      %v3328 = vpop.f32.mrf.mxu0
      %3329 = vmatprep.mubr.bf16.mxu0 0
      %3330 = vmatmul.mubr.bf16.gmra.mxu0 %v3101
      %v3331 = vpop.f32.mrf.mxu0
      %v3332 = vadd.f32 %v3070, %v3331
      %v3333 = vpop.f32.mrf.mxu0
      %v3334 = vpop.f32.mrf.mxu0
      %v3335 = vadd.f32 %v3070, %v3334
      %v3336 = vpop.f32.mrf.mxu0
      %3337 = vmatprep.mubr.bf16.mxu0 0
      %3338 = vmatmul.mubr.bf16.gmra.mxu0 %v3104
      %v3339 = vpop.f32.mrf.mxu0
      %v3340 = vadd.f32 %v3070, %v3339
      %v3341 = vpop.f32.mrf.mxu0
      %v3342 = vpop.f32.mrf.mxu0
      %v3343 = vadd.f32 %v3070, %v3342
      %v3344 = vpop.f32.mrf.mxu0
      %3345 = vmatprep.mubr.bf16.mxu0 0
      %3346 = vmatmul.mubr.bf16.gmra.mxu0 %v3107
      %v3347 = vpop.f32.mrf.mxu0
      %v3348 = vadd.f32 %v3070, %v3347
      %v3349 = vpop.f32.mrf.mxu0
      %v3350 = vpop.f32.mrf.mxu0
      %v3351 = vadd.f32 %v3070, %v3350
      %v3352 = vpop.f32.mrf.mxu0
      %3353 = vmatprep.mubr.bf16.mxu0 0
      %3354 = vmatmul.mubr.bf16.gmra.mxu0 %v3110
      %v3355 = vpop.f32.mrf.mxu0
      %v3356 = vadd.f32 %v3070, %v3355
      %v3357 = vpop.f32.mrf.mxu0
      %v3358 = vpop.f32.mrf.mxu0
      %v3359 = vadd.f32 %v3070, %v3358
      %v3360 = vpop.f32.mrf.mxu0
      %3361 = vmatprep.mubr.bf16.mxu0 0
      %3362 = vmatmul.mubr.bf16.gmra.mxu0 %v3113
      %v3363 = vpop.f32.mrf.mxu0
      %v3364 = vadd.f32 %v3070, %v3363
      %v3365 = vpop.f32.mrf.mxu0
      %v3366 = vpop.f32.mrf.mxu0
      %v3367 = vadd.f32 %v3070, %v3366
      %v3368 = vpop.f32.mrf.mxu0
      %3369 = vmatprep.mubr.bf16.mxu0 0
      %3370 = vmatmul.mubr.bf16.gmra.mxu0 %v3116
      %v3371 = vpop.f32.mrf.mxu0
      %v3372 = vadd.f32 %v3070, %v3371
      %v3373 = vpop.f32.mrf.mxu0
      %v3374 = vpop.f32.mrf.mxu0
      %v3375 = vadd.f32 %v3070, %v3374
      %v3376 = vpop.f32.mrf.mxu0
      %3377 = vmatprep.mubr.bf16.mxu0 0
      %3378 = vmatmul.mubr.bf16.gmra.mxu0 %v3119
      %v3379 = vpop.f32.mrf.mxu0
      %v3380 = vadd.f32 %v3070, %v3379
      %v3381 = vpop.f32.mrf.mxu0
      %v3382 = vpop.f32.mrf.mxu0
      %v3383 = vadd.f32 %v3070, %v3382
      %v3384 = vpop.f32.mrf.mxu0
      %3385 = vmatprep.mubr.bf16.mxu0 0
      %3386 = vmatmul.mubr.bf16.gmra.mxu0 %v3122
      %v3387 = vpop.f32.mrf.mxu0
      %v3388 = vadd.f32 %v3070, %v3387
      %v3389 = vpop.f32.mrf.mxu0
      %v3390 = vpop.f32.mrf.mxu0
      %v3391 = vadd.f32 %v3070, %v3390
      %v3392 = vpop.f32.mrf.mxu0
      %3393 = vmatprep.mubr.bf16.mxu0 0
      %3394 = vmatmul.mubr.bf16.gmra.mxu0 %v3125
      %v3395 = vpop.f32.mrf.mxu0
      %v3396 = vadd.f32 %v3070, %v3395
      %v3397 = vpop.f32.mrf.mxu0
      %v3398 = vpop.f32.mrf.mxu0
      %v3399 = vadd.f32 %v3070, %v3398
      %v3400 = vpop.f32.mrf.mxu0
      %3401 = vmatprep.mubr.bf16.mxu0 0
      %3402 = vmatmul.mubr.bf16.gmra.mxu0 %v3128
      %v3403 = vpop.f32.mrf.mxu0
      %v3404 = vadd.f32 %v3070, %v3403
      %v3405 = vpop.f32.mrf.mxu0
      %v3406 = vpop.f32.mrf.mxu0
      %v3407 = vadd.f32 %v3070, %v3406
      %v3408 = vpop.f32.mrf.mxu0
      %3409 = vmatprep.mubr.bf16.mxu0 0
      %3410 = vmatmul.mubr.bf16.gmra.mxu0 %v3131
      %v3411 = vpop.f32.mrf.mxu0
      %v3412 = vadd.f32 %v3070, %v3411
      %v3413 = vpop.f32.mrf.mxu0
      %v3414 = vpop.f32.mrf.mxu0
      %v3415 = vadd.f32 %v3070, %v3414
      %v3416 = vpop.f32.mrf.mxu0
      %3417 = vmatprep.mubr.bf16.mxu0 0
      %3418 = vmatmul.mubr.bf16.gmra.mxu0 %v3134
      %v3419 = vpop.f32.mrf.mxu0
      %v3420 = vadd.f32 %v3070, %v3419
      %v3421 = vpop.f32.mrf.mxu0
      %v3422 = vpop.f32.mrf.mxu0
      %v3423 = vadd.f32 %v3070, %v3422
      %v3424 = vpop.f32.mrf.mxu0
      %3425 = vmatprep.mubr.bf16.mxu0 0
      %3426 = vmatmul.mubr.bf16.gmra.mxu0 %v3137
      %v3427 = vpop.f32.mrf.mxu0
      %v3428 = vadd.f32 %v3070, %v3427
      %v3429 = vpop.f32.mrf.mxu0
      %v3430 = vpop.f32.mrf.mxu0
      %v3431 = vadd.f32 %v3070, %v3430
      %v3432 = vpop.f32.mrf.mxu0
      %3433 = vmatprep.mubr.bf16.mxu0 0
      %3434 = vmatmul.mubr.bf16.gmra.mxu0 %v3140
      %v3435 = vpop.f32.mrf.mxu0
      %v3436 = vadd.f32 %v3070, %v3435
      %v3437 = vpop.f32.mrf.mxu0
      %v3438 = vpop.f32.mrf.mxu0
      %v3439 = vadd.f32 %v3070, %v3438
      %v3440 = vpop.f32.mrf.mxu0
      %3441 = vmatprep.mubr.bf16.mxu0 0
      %3442 = vmatmul.mubr.bf16.gmra.mxu0 %v3143
      %v3443 = vpop.f32.mrf.mxu0
      %v3444 = vadd.f32 %v3070, %v3443
      %v3445 = vpop.f32.mrf.mxu0
      %v3446 = vpop.f32.mrf.mxu0
      %v3447 = vadd.f32 %v3070, %v3446
      %v3448 = vpop.f32.mrf.mxu0
      %3449 = vmatprep.mubr.bf16.mxu0 0
      %3450 = vmatmul.mubr.bf16.gmra.mxu0 %v3146
      %v3451 = vpop.f32.mrf.mxu0
      %v3452 = vadd.f32 %v3070, %v3451
      %v3453 = vpop.f32.mrf.mxu0
      %v3454 = vpop.f32.mrf.mxu0
      %v3455 = vadd.f32 %v3070, %v3454
      %v3456 = vpop.f32.mrf.mxu0
      %3457 = vmatprep.mubr.bf16.mxu0 0
      %3458 = vmatmul.mubr.bf16.gmra.mxu0 %v3149
      %v3459 = vpop.f32.mrf.mxu0
      %v3460 = vadd.f32 %v3070, %v3459
      %v3461 = vpop.f32.mrf.mxu0
      %v3462 = vpop.f32.mrf.mxu0
      %v3463 = vadd.f32 %v3070, %v3462
      %v3464 = vpop.f32.mrf.mxu0
      %3465 = vmatprep.mubr.bf16.mxu0 0
      %3466 = vmatmul.mubr.bf16.gmra.mxu0 %v3152
      %v3467 = vpop.f32.mrf.mxu0
      %v3468 = vadd.f32 %v3070, %v3467
      %v3469 = vpop.f32.mrf.mxu0
      %v3470 = vpop.f32.mrf.mxu0
      %v3471 = vadd.f32 %v3070, %v3470
      %v3472 = vpop.f32.mrf.mxu0
      %3473 = vmatprep.mubr.bf16.mxu0 0
      %3474 = vmatmul.mubr.bf16.gmra.mxu0 %v3155
      %v3475 = vpop.f32.mrf.mxu0
      %v3476 = vadd.f32 %v3070, %v3475
      %v3477 = vpop.f32.mrf.mxu0
      %v3478 = vpop.f32.mrf.mxu0
      %v3479 = vadd.f32 %v3070, %v3478
      %v3480 = vpop.f32.mrf.mxu0
      %3481 = vmatprep.mubr.bf16.mxu0 0
      %3482 = vmatmul.mubr.bf16.gmra.mxu0 %v3158
      %v3483 = vpop.f32.mrf.mxu0
      %v3484 = vadd.f32 %v3070, %v3483
      %v3485 = vpop.f32.mrf.mxu0
      %v3486 = vpop.f32.mrf.mxu0
      %v3487 = vadd.f32 %v3070, %v3486
      %v3488 = vpop.f32.mrf.mxu0
      %3489 = vmatprep.mubr.bf16.mxu0 0
      %3490 = vmatmul.mubr.bf16.gmra.mxu0 %v3161
      %v3491 = vpop.f32.mrf.mxu0
      %v3492 = vadd.f32 %v3070, %v3491
      %v3493 = vpop.f32.mrf.mxu0
      %v3494 = vpop.f32.mrf.mxu0
      %v3495 = vadd.f32 %v3070, %v3494
      %v3496 = vpop.f32.mrf.mxu0
      %3497 = vmatprep.mubr.bf16.mxu0 0
      %3498 = vmatmul.mubr.bf16.gmra.mxu0 %v3164
      %v3499 = vpop.f32.mrf.mxu0
      %v3500 = vadd.f32 %v3070, %v3499
      %v3501 = vpop.f32.mrf.mxu0
      %v3502 = vpop.f32.mrf.mxu0
      %v3503 = vadd.f32 %v3070, %v3502
      %v3504 = vpop.f32.mrf.mxu0
      %3505 = vmatprep.mubr.bf16.mxu0 0
      %3506 = vmatmul.mubr.bf16.gmra.mxu0 %v3167
      %v3507 = vpop.f32.mrf.mxu0
      %v3508 = vadd.f32 %v3070, %v3507
      %v3509 = vpop.f32.mrf.mxu0
      %v3510 = vpop.f32.mrf.mxu0
      %v3511 = vadd.f32 %v3070, %v3510
      %v3512 = vpop.f32.mrf.mxu0
      %3513 = vmatprep.mubr.bf16.mxu0 0
      %3514 = vmatmul.mubr.bf16.gmra.mxu0 %v3170
      %v3515 = vpop.f32.mrf.mxu0
      %v3516 = vadd.f32 %v3070, %v3515
      %v3517 = vpop.f32.mrf.mxu0
      %v3518 = vpop.f32.mrf.mxu0
      %v3519 = vadd.f32 %v3070, %v3518
      %v3520 = vpop.f32.mrf.mxu0
      %3521 = vmatprep.mubr.bf16.mxu0 0
      %3522 = vmatmul.mubr.bf16.gmra.mxu0 %v3173
      %v3523 = vpop.f32.mrf.mxu0
      %v3524 = vadd.f32 %v3070, %v3523
      %v3525 = vpop.f32.mrf.mxu0
      %v3526 = vpop.f32.mrf.mxu0
      %v3527 = vadd.f32 %v3070, %v3526
      %v3528 = vpop.f32.mrf.mxu0
      %3529 = vmatprep.mubr.bf16.mxu0 0
      %3530 = vmatmul.mubr.bf16.gmra.mxu0 %v3176
      %v3531 = vpop.f32.mrf.mxu0
      %v3532 = vadd.f32 %v3070, %v3531
      %v3533 = vpop.f32.mrf.mxu0
      %v3534 = vpop.f32.mrf.mxu0
      %v3535 = vadd.f32 %v3070, %v3534
      %v3536 = vpop.f32.mrf.mxu0
      %3537 = vmatprep.mubr.bf16.mxu0 0
      %3538 = vmatmul.mubr.bf16.gmra.mxu0 %v3179
      %v3539 = vpop.f32.mrf.mxu0
      %v3540 = vadd.f32 %v3070, %v3539
      %v3541 = vpop.f32.mrf.mxu0
      %v3542 = vpop.f32.mrf.mxu0
      %v3543 = vadd.f32 %v3070, %v3542
      %v3544 = vpop.f32.mrf.mxu0
      %3545 = vmatprep.mubr.bf16.mxu0 0
      %3546 = vmatmul.mubr.bf16.gmra.mxu0 %v3182
      %v3547 = vpop.f32.mrf.mxu0
      %v3548 = vadd.f32 %v3070, %v3547
      %v3549 = vpop.f32.mrf.mxu0
      %v3550 = vpop.f32.mrf.mxu0
      %v3551 = vadd.f32 %v3070, %v3550
      %v3552 = vpop.f32.mrf.mxu0
      %3553 = vmatprep.mubr.bf16.mxu0 0
      %3554 = vmatmul.mubr.bf16.gmra.mxu0 %v3185
      %v3555 = vpop.f32.mrf.mxu0
      %v3556 = vadd.f32 %v3070, %v3555
      %v3557 = vpop.f32.mrf.mxu0
      %v3558 = vpop.f32.mrf.mxu0
      %v3559 = vadd.f32 %v3070, %v3558
      %v3560 = vpop.f32.mrf.mxu0
      %3561 = vmatprep.mubr.bf16.mxu0 0
      %3562 = vmatmul.mubr.bf16.gmra.mxu0 %v3188
      %v3563 = vpop.f32.mrf.mxu0
      %v3564 = vadd.f32 %v3070, %v3563
      %v3565 = vpop.f32.mrf.mxu0
      %v3566 = vpop.f32.mrf.mxu0
      %v3567 = vadd.f32 %v3070, %v3566
      %v3568 = vpop.f32.mrf.mxu0
      %3569 = vmatprep.mubr.bf16.mxu0 0
      %3570 = vmatmul.mubr.bf16.gmra.mxu0 %v3191
      %v3571 = vpop.f32.mrf.mxu0
      %v3572 = vadd.f32 %v3070, %v3571
      %v3573 = vpop.f32.mrf.mxu0
      %v3574 = vpop.f32.mrf.mxu0
      %v3575 = vadd.f32 %v3070, %v3574
      %v3576 = vpop.f32.mrf.mxu0
      %3577 = vmatprep.mubr.bf16.mxu0 0
      %3578 = vmatmul.mubr.bf16.gmra.mxu0 %v3194
      %v3579 = vpop.f32.mrf.mxu0
      %v3580 = vadd.f32 %v3070, %v3579
      %v3581 = vpop.f32.mrf.mxu0
      %v3582 = vpop.f32.mrf.mxu0
      %v3583 = vadd.f32 %v3070, %v3582
      %v3584 = vpop.f32.mrf.mxu0
      %3585 = vmatprep.mubr.bf16.mxu0 0
      %3586 = vmatmul.mubr.bf16.gmra.mxu0 %v3197
      %v3587 = vpop.f32.mrf.mxu0
      %v3588 = vadd.f32 %v3070, %v3587
      %v3589 = vpop.f32.mrf.mxu0
      %v3590 = vpop.f32.mrf.mxu0
      %v3591 = vadd.f32 %v3070, %v3590
      %v3592 = vpop.f32.mrf.mxu0
      %3593 = vmatprep.mubr.bf16.mxu0 0
      %3594 = vmatmul.mubr.bf16.gmra.mxu0 %v3200
      %v3595 = vpop.f32.mrf.mxu0
      %v3596 = vadd.f32 %v3070, %v3595
      %v3597 = vpop.f32.mrf.mxu0
      %v3598 = vpop.f32.mrf.mxu0
      %v3599 = vadd.f32 %v3070, %v3598
      %v3600 = vpop.f32.mrf.mxu0
      %3601 = vmatprep.mubr.bf16.mxu0 0
      %3602 = vmatmul.mubr.bf16.gmra.mxu0 %v3203
      %v3603 = vpop.f32.mrf.mxu0
      %v3604 = vadd.f32 %v3070, %v3603
      %v3605 = vpop.f32.mrf.mxu0
      %v3606 = vpop.f32.mrf.mxu0
      %v3607 = vadd.f32 %v3070, %v3606
      %v3608 = vpop.f32.mrf.mxu0
      %3609 = vmatprep.mubr.bf16.mxu0 0
      %3610 = vmatmul.mubr.bf16.gmra.mxu0 %v3206
      %v3611 = vpop.f32.mrf.mxu0
      %v3612 = vadd.f32 %v3070, %v3611
      %v3613 = vpop.f32.mrf.mxu0
      %v3614 = vpop.f32.mrf.mxu0
      %v3615 = vadd.f32 %v3070, %v3614
      %v3616 = vpop.f32.mrf.mxu0
      %3617 = vmatprep.mubr.bf16.mxu0 0
      %3618 = vmatmul.mubr.bf16.gmra.mxu0 %v3209
      %v3619 = vpop.f32.mrf.mxu0
      %v3620 = vadd.f32 %v3070, %v3619
      %v3621 = vpop.f32.mrf.mxu0
      %v3622 = vpop.f32.mrf.mxu0
      %v3623 = vadd.f32 %v3070, %v3622
      %v3624 = vpop.f32.mrf.mxu0
      %3625 = vmatprep.mubr.bf16.mxu0 0
      %3626 = vmatmul.mubr.bf16.gmra.mxu0 %v3212
      %v3627 = vpop.f32.mrf.mxu0
      %v3628 = vadd.f32 %v3070, %v3627
      %v3629 = vpop.f32.mrf.mxu0
      %v3630 = vpop.f32.mrf.mxu0
      %v3631 = vadd.f32 %v3070, %v3630
      %v3632 = vpop.f32.mrf.mxu0
      %3633 = vmatprep.mubr.bf16.mxu0 0
      %3634 = vmatmul.mubr.bf16.gmra.mxu0 %v3215
      %v3635 = vpop.f32.mrf.mxu0
      %v3636 = vadd.f32 %v3070, %v3635
      %v3637 = vpop.f32.mrf.mxu0
      %v3638 = vpop.f32.mrf.mxu0
      %v3639 = vadd.f32 %v3070, %v3638
      %v3640 = vpop.f32.mrf.mxu0
      %3641 = vmatprep.mubr.bf16.mxu0 0
      %3642 = vmatmul.mubr.bf16.gmra.mxu0 %v3218
      %v3643 = vpop.f32.mrf.mxu0
      %v3644 = vadd.f32 %v3070, %v3643
      %v3645 = vpop.f32.mrf.mxu0
      %v3646 = vpop.f32.mrf.mxu0
      %v3647 = vadd.f32 %v3070, %v3646
      %v3648 = vpop.f32.mrf.mxu0
      %3649 = vmatprep.mubr.bf16.mxu0 0
      %3650 = vmatmul.mubr.bf16.gmra.mxu0 %v3221
      %v3651 = vpop.f32.mrf.mxu0
      %v3652 = vadd.f32 %v3070, %v3651
      %v3653 = vpop.f32.mrf.mxu0
      %v3654 = vpop.f32.mrf.mxu0
      %v3655 = vadd.f32 %v3070, %v3654
      %v3656 = vpop.f32.mrf.mxu0
      %3657 = vmatprep.mubr.bf16.mxu0 0
      %3658 = vmatmul.mubr.bf16.gmra.mxu0 %v3224
      %v3659 = vpop.f32.mrf.mxu0
      %v3660 = vadd.f32 %v3070, %v3659
      %v3661 = vpop.f32.mrf.mxu0
      %v3662 = vpop.f32.mrf.mxu0
      %v3663 = vadd.f32 %v3070, %v3662
      %v3664 = vpop.f32.mrf.mxu0
      %3665 = vmatprep.mubr.bf16.mxu0 0
      %3666 = vmatmul.mubr.bf16.gmra.mxu0 %v3227
      %v3667 = vpop.f32.mrf.mxu0
      %v3668 = vadd.f32 %v3070, %v3667
      %v3669 = vpop.f32.mrf.mxu0
      %v3670 = vpop.f32.mrf.mxu0
      %v3671 = vadd.f32 %v3070, %v3670
      %v3672 = vpop.f32.mrf.mxu0
      %3673 = vmatprep.mubr.bf16.mxu0 0
      %3674 = vmatmul.mubr.bf16.gmra.mxu0 %v3230
      %v3675 = vpop.f32.mrf.mxu0
      %v3676 = vadd.f32 %v3070, %v3675
      %v3677 = vpop.f32.mrf.mxu0
      %v3678 = vpop.f32.mrf.mxu0
      %v3679 = vadd.f32 %v3070, %v3678
      %v3680 = vpop.f32.mrf.mxu0
      %3681 = vmatprep.mubr.bf16.mxu0 0
      %3682 = vmatmul.mubr.bf16.gmra.mxu0 %v3233
      %v3683 = vpop.f32.mrf.mxu0
      %v3684 = vadd.f32 %v3070, %v3683
      %v3685 = vpop.f32.mrf.mxu0
      %v3686 = vpop.f32.mrf.mxu0
      %v3687 = vadd.f32 %v3070, %v3686
      %v3688 = vpop.f32.mrf.mxu0
      %3689 = vmatprep.mubr.bf16.mxu0 0
      %3690 = vmatmul.mubr.bf16.gmra.mxu0 %v3236
      %v3691 = vpop.f32.mrf.mxu0
      %v3692 = vadd.f32 %v3070, %v3691
      %v3693 = vpop.f32.mrf.mxu0
      %v3694 = vpop.f32.mrf.mxu0
      %v3695 = vadd.f32 %v3070, %v3694
      %v3696 = vpop.f32.mrf.mxu0
      %3697 = vmatprep.mubr.bf16.mxu0 0
      %3698 = vmatmul.mubr.bf16.gmra.mxu0 %v3239
      %v3699 = vpop.f32.mrf.mxu0
      %v3700 = vadd.f32 %v3070, %v3699
      %v3701 = vpop.f32.mrf.mxu0
      %v3702 = vpop.f32.mrf.mxu0
      %v3703 = vadd.f32 %v3070, %v3702
      %v3704 = vpop.f32.mrf.mxu0
      %3705 = vmatprep.mubr.bf16.mxu0 0
      %3706 = vmatmul.mubr.bf16.gmra.mxu0 %v3242
      %v3707 = vpop.f32.mrf.mxu0
      %v3708 = vadd.f32 %v3070, %v3707
      %v3709 = vpop.f32.mrf.mxu0
      %v3710 = vpop.f32.mrf.mxu0
      %v3711 = vadd.f32 %v3070, %v3710
      %v3712 = vpop.f32.mrf.mxu0
      %3713 = vmatprep.mubr.bf16.mxu0 0
      %3714 = vmatmul.mubr.bf16.gmra.mxu0 %v3245
      %v3715 = vpop.f32.mrf.mxu0
      %v3716 = vadd.f32 %v3070, %v3715
      %v3717 = vpop.f32.mrf.mxu0
      %v3718 = vpop.f32.mrf.mxu0
      %v3719 = vadd.f32 %v3070, %v3718
      %v3720 = vpop.f32.mrf.mxu0
      %3721 = vmatprep.mubr.bf16.mxu0 0
      %3722 = vmatmul.mubr.bf16.gmra.mxu0 %v3248
      %v3723 = vpop.f32.mrf.mxu0
      %v3724 = vadd.f32 %v3070, %v3723
      %v3725 = vpop.f32.mrf.mxu0
      %v3726 = vpop.f32.mrf.mxu0
      %v3727 = vadd.f32 %v3070, %v3726
      %v3728 = vpop.f32.mrf.mxu0
      %3729 = vmatprep.mubr.bf16.mxu0 0
      %3730 = vmatmul.mubr.bf16.gmra.mxu0 %v3251
      %v3731 = vpop.f32.mrf.mxu0
      %v3732 = vadd.f32 %v3070, %v3731
      %v3733 = vpop.f32.mrf.mxu0
      %v3734 = vpop.f32.mrf.mxu0
      %v3735 = vadd.f32 %v3070, %v3734
      %v3736 = vpop.f32.mrf.mxu0
      %3737 = vmatprep.mubr.bf16.mxu0 0
      %3738 = vmatmul.mubr.bf16.gmra.mxu0 %v3254
      %v3739 = vpop.f32.mrf.mxu0
      %v3740 = vadd.f32 %v3070, %v3739
      %v3741 = vpop.f32.mrf.mxu0
      %v3742 = vpop.f32.mrf.mxu0
      %v3743 = vadd.f32 %v3070, %v3742
      %v3744 = vpop.f32.mrf.mxu0
      %3745 = vmatprep.mubr.bf16.mxu0 0
      %3746 = vmatmul.mubr.bf16.gmra.mxu0 %v3257
      %v3747 = vpop.f32.mrf.mxu0
      %v3748 = vadd.f32 %v3070, %v3747
      %v3749 = vpop.f32.mrf.mxu0
      %v3750 = vpop.f32.mrf.mxu0
      %v3751 = vadd.f32 %v3070, %v3750
      %v3752 = vpop.f32.mrf.mxu0
      %3753 = vmatprep.mubr.bf16.mxu0 0
      %3754 = vmatmul.mubr.bf16.gmra.mxu0 %v3260
      %v3755 = vpop.f32.mrf.mxu0
      %v3756 = vadd.f32 %v3070, %v3755
      %v3757 = vpop.f32.mrf.mxu0
      %v3758 = vpop.f32.mrf.mxu0
      %v3759 = vadd.f32 %v3070, %v3758
      %v3760 = vpop.f32.mrf.mxu0
      %3761 = vmatprep.mubr.bf16.mxu0 0
      %3762 = vmatmul.mubr.bf16.gmra.mxu0 %v3263
      %v3763 = vpop.f32.mrf.mxu0
      %v3764 = vadd.f32 %v3070, %v3763
      %v3765 = vpop.f32.mrf.mxu0
      %v3766 = vpop.f32.mrf.mxu0
      %v3767 = vadd.f32 %v3070, %v3766
      %v3768 = vpop.f32.mrf.mxu0
      %3769 = vmatprep.mubr.bf16.mxu0 0
      %3770 = vmatmul.mubr.bf16.gmra.mxu0 %v3266
      %v3771 = vpop.f32.mrf.mxu0
      %v3772 = vadd.f32 %v3070, %v3771
      %v3773 = vpop.f32.mrf.mxu0
      %v3774 = vpop.f32.mrf.mxu0
      %v3775 = vadd.f32 %v3070, %v3774
      %v3776 = vpop.f32.mrf.mxu0
      %3777 = vmatprep.mubr.bf16.mxu0 0
      %3778 = vmatmul.mubr.bf16.gmra.mxu0 %v3269
      %v3779 = vpop.f32.mrf.mxu0
      %v3780 = vadd.f32 %v3070, %v3779
      %v3781 = vpop.f32.mrf.mxu0
      %v3782 = vpop.f32.mrf.mxu0
      %v3783 = vadd.f32 %v3070, %v3782
      %v3784 = vpop.f32.mrf.mxu0
      %3785 = vmatprep.mubr.bf16.mxu0 0
      %3786 = vmatmul.mubr.bf16.gmra.mxu0 %v3272
      %v3787 = vpop.f32.mrf.mxu0
      %v3788 = vadd.f32 %v3070, %v3787
      %v3789 = vpop.f32.mrf.mxu0
      %v3790 = vpop.f32.mrf.mxu0
      %v3791 = vadd.f32 %v3070, %v3790
      %v3792 = vpop.f32.mrf.mxu0
      %3793 = vmatprep.mubr.bf16.mxu0 0
      %3794 = vmatmul.mubr.bf16.gmra.mxu0 %v3275
      %v3795 = vpop.f32.mrf.mxu0
      %v3796 = vadd.f32 %v3070, %v3795
      %v3797 = vpop.f32.mrf.mxu0
      %v3798 = vpop.f32.mrf.mxu0
      %v3799 = vadd.f32 %v3070, %v3798
      %v3800 = vpop.f32.mrf.mxu0
      %3801 = vmatprep.mubr.bf16.mxu0 0
      %3802 = vmatmul.mubr.bf16.gmra.mxu0 %v3278
      %v3803 = vpop.f32.mrf.mxu0
      %v3804 = vadd.f32 %v3070, %v3803
      %v3805 = vpop.f32.mrf.mxu0
      %v3806 = vpop.f32.mrf.mxu0
      %v3807 = vadd.f32 %v3070, %v3806
      %v3808 = vpop.f32.mrf.mxu0
      %3809 = vmatprep.mubr.bf16.mxu0 0
      %3810 = vmatmul.mubr.bf16.gmra.mxu0 %v3281
      %v3811 = vpop.f32.mrf.mxu0
      %v3812 = vadd.f32 %v3070, %v3811
      %v3813 = vpop.f32.mrf.mxu0
      %v3814 = vpop.f32.mrf.mxu0
      %v3815 = vadd.f32 %v3070, %v3814
      %v3816 = vpop.f32.mrf.mxu0
      %3817 = vmatprep.mubr.bf16.mxu0 0
      %3818 = vmatmul.mubr.bf16.gmra.mxu0 %v3284
      %v3819 = vpop.f32.mrf.mxu0
      %v3820 = vadd.f32 %v3070, %v3819
      %v3821 = vpop.f32.mrf.mxu0
      %v3822 = vpop.f32.mrf.mxu0
      %v3823 = vadd.f32 %v3070, %v3822
      %v3824 = vpop.f32.mrf.mxu0
      %3825 = vmatprep.mubr.bf16.mxu0 0
      %3826 = vmatmul.mubr.bf16.gmra.mxu0 %v3287
      %v3827 = vpop.f32.mrf.mxu0
      %v3828 = vadd.f32 %v3070, %v3827
      %v3829 = vpop.f32.mrf.mxu0
      %v3830 = vpop.f32.mrf.mxu0
      %v3831 = vadd.f32 %v3070, %v3830
      %v3832 = vpop.f32.mrf.mxu0
      %3833 = vdwg.mxu0
      %v3834 = vmax.f32 %v3324, 0.0
      %v3835 = vmax.f32 %v3327, 0.0
      %v3836 = vmax.f32 %v3332, 0.0
      %v3837 = vmax.f32 %v3335, 0.0
      %v3838 = vmax.f32 %v3340, 0.0
      %v3839 = vmax.f32 %v3343, 0.0
      %v3840 = vmax.f32 %v3348, 0.0
      %v3841 = vmax.f32 %v3351, 0.0
      %v3842 = vmax.f32 %v3356, 0.0
      %v3843 = vmax.f32 %v3359, 0.0
      %v3844 = vmax.f32 %v3364, 0.0
      %v3845 = vmax.f32 %v3367, 0.0
      %v3846 = vmax.f32 %v3372, 0.0
      %v3847 = vmax.f32 %v3375, 0.0
      %v3848 = vmax.f32 %v3380, 0.0
      %v3849 = vmax.f32 %v3383, 0.0
      %v3850 = vmax.f32 %v3388, 0.0
      %v3851 = vmax.f32 %v3391, 0.0
      %v3852 = vmax.f32 %v3396, 0.0
      %v3853 = vmax.f32 %v3399, 0.0
      %v3854 = vmax.f32 %v3404, 0.0
      %v3855 = vmax.f32 %v3407, 0.0
      %v3856 = vmax.f32 %v3412, 0.0
      %v3857 = vmax.f32 %v3415, 0.0
      %v3858 = vmax.f32 %v3420, 0.0
      %v3859 = vmax.f32 %v3423, 0.0
      %v3860 = vmax.f32 %v3428, 0.0
      %v3861 = vmax.f32 %v3431, 0.0
      %v3862 = vmax.f32 %v3436, 0.0
      %v3863 = vmax.f32 %v3439, 0.0
      %v3864 = vmax.f32 %v3444, 0.0
      %v3865 = vmax.f32 %v3447, 0.0
      %v3866 = vmax.f32 %v3452, 0.0
      %v3867 = vmax.f32 %v3455, 0.0
      %v3868 = vmax.f32 %v3460, 0.0
      %v3869 = vmax.f32 %v3463, 0.0
      %v3870 = vmax.f32 %v3468, 0.0
      %v3871 = vmax.f32 %v3471, 0.0
      %v3872 = vmax.f32 %v3476, 0.0
      %v3873 = vmax.f32 %v3479, 0.0
      %v3874 = vmax.f32 %v3484, 0.0
      %v3875 = vmax.f32 %v3487, 0.0
      %v3876 = vmax.f32 %v3492, 0.0
      %v3877 = vmax.f32 %v3495, 0.0
      %v3878 = vmax.f32 %v3500, 0.0
      %v3879 = vmax.f32 %v3503, 0.0
      %v3880 = vmax.f32 %v3508, 0.0
      %v3881 = vmax.f32 %v3511, 0.0
      %v3882 = vmax.f32 %v3516, 0.0
      %v3883 = vmax.f32 %v3519, 0.0
      %v3884 = vmax.f32 %v3524, 0.0
      %v3885 = vmax.f32 %v3527, 0.0
      %v3886 = vmax.f32 %v3532, 0.0
      %v3887 = vmax.f32 %v3535, 0.0
      %v3888 = vmax.f32 %v3540, 0.0
      %v3889 = vmax.f32 %v3543, 0.0
      %v3890 = vmax.f32 %v3548, 0.0
      %v3891 = vmax.f32 %v3551, 0.0
      %v3892 = vmax.f32 %v3556, 0.0
      %v3893 = vmax.f32 %v3559, 0.0
      %v3894 = vmax.f32 %v3564, 0.0
      %v3895 = vmax.f32 %v3567, 0.0
      %v3896 = vmax.f32 %v3572, 0.0
      %v3897 = vmax.f32 %v3575, 0.0
      %v3898 = vmax.f32 %v3580, 0.0
      %v3899 = vmax.f32 %v3583, 0.0
      %v3900 = vmax.f32 %v3588, 0.0
      %v3901 = vmax.f32 %v3591, 0.0
      %v3902 = vmax.f32 %v3596, 0.0
      %v3903 = vmax.f32 %v3599, 0.0
      %v3904 = vmax.f32 %v3604, 0.0
      %v3905 = vmax.f32 %v3607, 0.0
      %v3906 = vmax.f32 %v3612, 0.0
      %v3907 = vmax.f32 %v3615, 0.0
      %v3908 = vmax.f32 %v3620, 0.0
      %v3909 = vmax.f32 %v3623, 0.0
      %v3910 = vmax.f32 %v3628, 0.0
      %v3911 = vmax.f32 %v3631, 0.0
      %v3912 = vmax.f32 %v3636, 0.0
      %v3913 = vmax.f32 %v3639, 0.0
      %v3914 = vmax.f32 %v3644, 0.0
      %v3915 = vmax.f32 %v3647, 0.0
      %v3916 = vmax.f32 %v3652, 0.0
      %v3917 = vmax.f32 %v3655, 0.0
      %v3918 = vmax.f32 %v3660, 0.0
      %v3919 = vmax.f32 %v3663, 0.0
      %v3920 = vmax.f32 %v3668, 0.0
      %v3921 = vmax.f32 %v3671, 0.0
      %v3922 = vmax.f32 %v3676, 0.0
      %v3923 = vmax.f32 %v3679, 0.0
      %v3924 = vmax.f32 %v3684, 0.0
      %v3925 = vmax.f32 %v3687, 0.0
      %v3926 = vmax.f32 %v3692, 0.0
      %v3927 = vmax.f32 %v3695, 0.0
      %v3928 = vmax.f32 %v3700, 0.0
      %v3929 = vmax.f32 %v3703, 0.0
      %v3930 = vmax.f32 %v3708, 0.0
      %v3931 = vmax.f32 %v3711, 0.0
      %v3932 = vmax.f32 %v3716, 0.0
      %v3933 = vmax.f32 %v3719, 0.0
      %v3934 = vmax.f32 %v3724, 0.0
      %v3935 = vmax.f32 %v3727, 0.0
      %v3936 = vmax.f32 %v3732, 0.0
      %v3937 = vmax.f32 %v3735, 0.0
      %v3938 = vmax.f32 %v3740, 0.0
      %v3939 = vmax.f32 %v3743, 0.0
      %v3940 = vmax.f32 %v3748, 0.0
      %v3941 = vmax.f32 %v3751, 0.0
      %v3942 = vmax.f32 %v3756, 0.0
      %v3943 = vmax.f32 %v3759, 0.0
      %v3944 = vmax.f32 %v3764, 0.0
      %v3945 = vmax.f32 %v3767, 0.0
      %v3946 = vmax.f32 %v3772, 0.0
      %v3947 = vmax.f32 %v3775, 0.0
      %v3948 = vmax.f32 %v3780, 0.0
      %v3949 = vmax.f32 %v3783, 0.0
      %v3950 = vmax.f32 %v3788, 0.0
      %v3951 = vmax.f32 %v3791, 0.0
      %v3952 = vmax.f32 %v3796, 0.0
      %v3953 = vmax.f32 %v3799, 0.0
      %v3954 = vmax.f32 %v3804, 0.0
      %v3955 = vmax.f32 %v3807, 0.0
      %v3956 = vmax.f32 %v3812, 0.0
      %v3957 = vmax.f32 %v3815, 0.0
      %v3958 = vmax.f32 %v3820, 0.0
      %v3959 = vmax.f32 %v3823, 0.0
      %v3960 = vmax.f32 %v3828, 0.0
      %v3961 = vmax.f32 %v3831, 0.0
      %v3962 = vpack.c.bf16 %v3835, %v3834
      %v3963 = vpack.c.bf16 %v3837, %v3836
      %v3964 = vpack.c.bf16 %v3839, %v3838
      %v3965 = vpack.c.bf16 %v3841, %v3840
      %v3966 = vpack.c.bf16 %v3843, %v3842
      %v3967 = vpack.c.bf16 %v3845, %v3844
      %v3968 = vpack.c.bf16 %v3847, %v3846
      %v3969 = vpack.c.bf16 %v3849, %v3848
      %v3970 = vpack.c.bf16 %v3851, %v3850
      %v3971 = vpack.c.bf16 %v3853, %v3852
      %v3972 = vpack.c.bf16 %v3855, %v3854
      %v3973 = vpack.c.bf16 %v3857, %v3856
      %v3974 = vpack.c.bf16 %v3859, %v3858
      %v3975 = vpack.c.bf16 %v3861, %v3860
      %v3976 = vpack.c.bf16 %v3863, %v3862
      %v3977 = vpack.c.bf16 %v3865, %v3864
      %v3978 = vpack.c.bf16 %v3867, %v3866
      %v3979 = vpack.c.bf16 %v3869, %v3868
      %v3980 = vpack.c.bf16 %v3871, %v3870
      %v3981 = vpack.c.bf16 %v3873, %v3872
      %v3982 = vpack.c.bf16 %v3875, %v3874
      %v3983 = vpack.c.bf16 %v3877, %v3876
      %v3984 = vpack.c.bf16 %v3879, %v3878
      %v3985 = vpack.c.bf16 %v3881, %v3880
      %v3986 = vpack.c.bf16 %v3883, %v3882
      %v3987 = vpack.c.bf16 %v3885, %v3884
      %v3988 = vpack.c.bf16 %v3887, %v3886
      %v3989 = vpack.c.bf16 %v3889, %v3888
      %v3990 = vpack.c.bf16 %v3891, %v3890
      %v3991 = vpack.c.bf16 %v3893, %v3892
      %v3992 = vpack.c.bf16 %v3895, %v3894
      %v3993 = vpack.c.bf16 %v3897, %v3896
      %v3994 = vpack.c.bf16 %v3899, %v3898
      %v3995 = vpack.c.bf16 %v3901, %v3900
      %v3996 = vpack.c.bf16 %v3903, %v3902
      %v3997 = vpack.c.bf16 %v3905, %v3904
      %v3998 = vpack.c.bf16 %v3907, %v3906
      %v3999 = vpack.c.bf16 %v3909, %v3908
      %v4000 = vpack.c.bf16 %v3911, %v3910
      %v4001 = vpack.c.bf16 %v3913, %v3912
      %v4002 = vpack.c.bf16 %v3915, %v3914
      %v4003 = vpack.c.bf16 %v3917, %v3916
      %v4004 = vpack.c.bf16 %v3919, %v3918
      %v4005 = vpack.c.bf16 %v3921, %v3920
      %v4006 = vpack.c.bf16 %v3923, %v3922
      %v4007 = vpack.c.bf16 %v3925, %v3924
      %v4008 = vpack.c.bf16 %v3927, %v3926
      %v4009 = vpack.c.bf16 %v3929, %v3928
      %v4010 = vpack.c.bf16 %v3931, %v3930
      %v4011 = vpack.c.bf16 %v3933, %v3932
      %v4012 = vpack.c.bf16 %v3935, %v3934
      %v4013 = vpack.c.bf16 %v3937, %v3936
      %v4014 = vpack.c.bf16 %v3939, %v3938
      %v4015 = vpack.c.bf16 %v3941, %v3940
      %v4016 = vpack.c.bf16 %v3943, %v3942
      %v4017 = vpack.c.bf16 %v3945, %v3944
      %v4018 = vpack.c.bf16 %v3947, %v3946
      %v4019 = vpack.c.bf16 %v3949, %v3948
      %v4020 = vpack.c.bf16 %v3951, %v3950
      %v4021 = vpack.c.bf16 %v3953, %v3952
      %v4022 = vpack.c.bf16 %v3955, %v3954
      %v4023 = vpack.c.bf16 %v3957, %v3956
      %v4024 = vpack.c.bf16 %v3959, %v3958
      %v4025 = vpack.c.bf16 %v3961, %v3960
      %v4026 = vld [vmem:[%s5] sm:$0xff]
      %v4027 = vld [vmem:[%s5 + $0x8] sm:$0xff]
      %v4028 = vld [vmem:[%s5 + $0x10] sm:$0xff]
      %v4029 = vld [vmem:[%s5 + $0x18] sm:$0xff]
      %v4030 = vld [vmem:[%s5 + $0x20] sm:$0xff]
      %v4031 = vld [vmem:[%s5 + $0x28] sm:$0xff]
      %v4032 = vld [vmem:[%s5 + $0x30] sm:$0xff]
      %v4033 = vld [vmem:[%s5 + $0x38] sm:$0xff]
      %v4034 = vld [vmem:[%s5 + $0x40] sm:$0xff]
      %v4035 = vld [vmem:[%s5 + $0x48] sm:$0xff]
      %v4036 = vld [vmem:[%s5 + $0x50] sm:$0xff]
      %v4037 = vld [vmem:[%s5 + $0x58] sm:$0xff]
      %v4038 = vld [vmem:[%s5 + $0x60] sm:$0xff]
      %v4039 = vld [vmem:[%s5 + $0x68] sm:$0xff]
      %v4040 = vld [vmem:[%s5 + $0x70] sm:$0xff]
      %v4041 = vld [vmem:[%s5 + $0x78] sm:$0xff]
      %v4042 = vld [vmem:[%s6] sm:$0x3]
      %v4044 = vlaneseq
      %v4045 = vshrl.u32 %v4044, 7
      %v4046 = vsub.s32 0, %v4045
      %v4047 = vrot.slane %v4042, %v4046
      %v4048 = vlaneseq
      %v4049 = vshrl.u32 %v4048, 7
      %v4050 = vsub.s32 1, %v4049
      %v4051 = vrot.slane %v4042, %v4050
      %v4070 = vunpack.c.l.b16 %v4026
      %v4071 = vunpack.c.h.b16 %v4026
      %v4072 = vunpack.c.l.b16 %v4027
      %v4073 = vunpack.c.h.b16 %v4027
      %v4074 = vunpack.c.l.b16 %v4028
      %v4075 = vunpack.c.h.b16 %v4028
      %v4076 = vunpack.c.l.b16 %v4029
      %v4077 = vunpack.c.h.b16 %v4029
      %v4078 = vunpack.c.l.b16 %v4030
      %v4079 = vunpack.c.h.b16 %v4030
      %v4080 = vunpack.c.l.b16 %v4031
      %v4081 = vunpack.c.h.b16 %v4031
      %v4082 = vunpack.c.l.b16 %v4032
      %v4083 = vunpack.c.h.b16 %v4032
      %v4084 = vunpack.c.l.b16 %v4033
      %v4085 = vunpack.c.h.b16 %v4033
      %v4086 = vunpack.c.l.b16 %v4034
      %v4087 = vunpack.c.h.b16 %v4034
      %v4088 = vunpack.c.l.b16 %v4035
      %v4089 = vunpack.c.h.b16 %v4035
      %v4090 = vunpack.c.l.b16 %v4036
      %v4091 = vunpack.c.h.b16 %v4036
      %v4092 = vunpack.c.l.b16 %v4037
      %v4093 = vunpack.c.h.b16 %v4037
      %v4094 = vunpack.c.l.b16 %v4038
      %v4095 = vunpack.c.h.b16 %v4038
      %v4096 = vunpack.c.l.b16 %v4039
      %v4097 = vunpack.c.h.b16 %v4039
      %v4098 = vunpack.c.l.b16 %v4040
      %v4099 = vunpack.c.h.b16 %v4040
      %v4100 = vunpack.c.l.b16 %v4041
      %v4101 = vunpack.c.h.b16 %v4041
      %v4102 = vpack.c.b16 %v4072, %v4070
      %v4103 = vpack.c.b16 %v4073, %v4071
      %v4104 = vpack.c.b16 %v4076, %v4074
      %v4105 = vpack.c.b16 %v4077, %v4075
      %v4106 = vpack.c.b16 %v4080, %v4078
      %v4107 = vpack.c.b16 %v4081, %v4079
      %v4108 = vpack.c.b16 %v4084, %v4082
      %v4109 = vpack.c.b16 %v4085, %v4083
      %v4110 = vpack.c.b16 %v4088, %v4086
      %v4111 = vpack.c.b16 %v4089, %v4087
      %v4112 = vpack.c.b16 %v4092, %v4090
      %v4113 = vpack.c.b16 %v4093, %v4091
      %v4114 = vpack.c.b16 %v4096, %v4094
      %v4115 = vpack.c.b16 %v4097, %v4095
      %v4116 = vpack.c.b16 %v4100, %v4098
      %v4117 = vpack.c.b16 %v4101, %v4099
      %4134 = vmatprep.subr.bf16.mxu0 %v4117
      %4135 = vmatpush1.bf16.msra.mxu0 %v4116
      %4136 = vmatprep.subr.bf16.mxu0 %v4115
      %4137 = vmatpush1.bf16.msra.mxu0 %v4114
      %4138 = vmatprep.subr.bf16.mxu0 %v4113
      %4139 = vmatpush1.bf16.msra.mxu0 %v4112
      %4140 = vmatprep.subr.bf16.mxu0 %v4111
      %4141 = vmatpush1.bf16.msra.mxu0 %v4110
      %4142 = vmatprep.subr.bf16.mxu0 %v4109
      %4143 = vmatpush1.bf16.msra.mxu0 %v4108
      %4144 = vmatprep.subr.bf16.mxu0 %v4107
      %4145 = vmatpush1.bf16.msra.mxu0 %v4106
      %4146 = vmatprep.subr.bf16.mxu0 %v4105
      %4147 = vmatpush1.bf16.msra.mxu0 %v4104
      %4148 = vmatprep.subr.bf16.mxu0 %v4103
      %4149 = vmatpush1.bf16.msra.mxu0 %v4102
      %4150 = vmatprep.subr.bf16.mxu0 0
      %4151 = vmatpush2.bf16.msra.mxu0 0
      %4152 = vmatprep.subr.bf16.mxu0 0
      %4153 = vmatpush2.bf16.msra.mxu0 0
      %4154 = vmatprep.subr.bf16.mxu0 0
      %4155 = vmatpush2.bf16.msra.mxu0 0
      %4156 = vmatprep.subr.bf16.mxu0 0
      %4157 = vmatpush2.bf16.msra.mxu0 0
      %4158 = vmatprep.subr.bf16.mxu0 0
      %4159 = vmatpush2.bf16.msra.mxu0 0
      %4160 = vmatprep.subr.bf16.mxu0 0
      %4161 = vmatpush2.bf16.msra.mxu0 0
      %4162 = vmatprep.subr.bf16.mxu0 0
      %4163 = vmatpush2.bf16.msra.mxu0 0
      %4164 = vmatprep.subr.bf16.mxu0 0
      %4165 = vmatpush2.bf16.msra.mxu0 0
      %4166 = vmatprep.mubr.bf16.mxu0 0
      %4167 = vmatmul.mubr.bf16.gmra.mxu0 %v3962
      %v4168 = vpop.f32.mrf.mxu0
      %v4169 = vadd.f32 %v4047, %v4168
      %v4170 = vpop.f32.mrf.mxu0
      %v4171 = vadd.f32 %v4051, %v4170
      %v4172 = vpop.f32.mrf.mxu0
      %v4173 = vadd.f32 %v4047, %v4172
      %v4174 = vpop.f32.mrf.mxu0
      %v4175 = vadd.f32 %v4051, %v4174
      %4176 = vmatprep.mubr.bf16.mxu0 0
      %4177 = vmatmul.mubr.bf16.gmra.mxu0 %v3963
      %v4178 = vpop.f32.mrf.mxu0
      %v4179 = vadd.f32 %v4047, %v4178
      %v4180 = vpop.f32.mrf.mxu0
      %v4181 = vadd.f32 %v4051, %v4180
      %v4182 = vpop.f32.mrf.mxu0
      %v4183 = vadd.f32 %v4047, %v4182
      %v4184 = vpop.f32.mrf.mxu0
      %v4185 = vadd.f32 %v4051, %v4184
      %4186 = vmatprep.mubr.bf16.mxu0 0
      %4187 = vmatmul.mubr.bf16.gmra.mxu0 %v3964
      %v4188 = vpop.f32.mrf.mxu0
      %v4189 = vadd.f32 %v4047, %v4188
      %v4190 = vpop.f32.mrf.mxu0
      %v4191 = vadd.f32 %v4051, %v4190
      %v4192 = vpop.f32.mrf.mxu0
      %v4193 = vadd.f32 %v4047, %v4192
      %v4194 = vpop.f32.mrf.mxu0
      %v4195 = vadd.f32 %v4051, %v4194
      %4196 = vmatprep.mubr.bf16.mxu0 0
      %4197 = vmatmul.mubr.bf16.gmra.mxu0 %v3965
      %v4198 = vpop.f32.mrf.mxu0
      %v4199 = vadd.f32 %v4047, %v4198
      %v4200 = vpop.f32.mrf.mxu0
      %v4201 = vadd.f32 %v4051, %v4200
      %v4202 = vpop.f32.mrf.mxu0
      %v4203 = vadd.f32 %v4047, %v4202
      %v4204 = vpop.f32.mrf.mxu0
      %v4205 = vadd.f32 %v4051, %v4204
      %4206 = vmatprep.mubr.bf16.mxu0 0
      %4207 = vmatmul.mubr.bf16.gmra.mxu0 %v3966
      %v4208 = vpop.f32.mrf.mxu0
      %v4209 = vadd.f32 %v4047, %v4208
      %v4210 = vpop.f32.mrf.mxu0
      %v4211 = vadd.f32 %v4051, %v4210
      %v4212 = vpop.f32.mrf.mxu0
      %v4213 = vadd.f32 %v4047, %v4212
      %v4214 = vpop.f32.mrf.mxu0
      %v4215 = vadd.f32 %v4051, %v4214
      %4216 = vmatprep.mubr.bf16.mxu0 0
      %4217 = vmatmul.mubr.bf16.gmra.mxu0 %v3967
      %v4218 = vpop.f32.mrf.mxu0
      %v4219 = vadd.f32 %v4047, %v4218
      %v4220 = vpop.f32.mrf.mxu0
      %v4221 = vadd.f32 %v4051, %v4220
      %v4222 = vpop.f32.mrf.mxu0
      %v4223 = vadd.f32 %v4047, %v4222
      %v4224 = vpop.f32.mrf.mxu0
      %v4225 = vadd.f32 %v4051, %v4224
      %4226 = vmatprep.mubr.bf16.mxu0 0
      %4227 = vmatmul.mubr.bf16.gmra.mxu0 %v3968
      %v4228 = vpop.f32.mrf.mxu0
      %v4229 = vadd.f32 %v4047, %v4228
      %v4230 = vpop.f32.mrf.mxu0
      %v4231 = vadd.f32 %v4051, %v4230
      %v4232 = vpop.f32.mrf.mxu0
      %v4233 = vadd.f32 %v4047, %v4232
      %v4234 = vpop.f32.mrf.mxu0
      %v4235 = vadd.f32 %v4051, %v4234
      %4236 = vmatprep.mubr.bf16.mxu0 0
      %4237 = vmatmul.mubr.bf16.gmra.mxu0 %v3969
      %v4238 = vpop.f32.mrf.mxu0
      %v4239 = vadd.f32 %v4047, %v4238
      %v4240 = vpop.f32.mrf.mxu0
      %v4241 = vadd.f32 %v4051, %v4240
      %v4242 = vpop.f32.mrf.mxu0
      %v4243 = vadd.f32 %v4047, %v4242
      %v4244 = vpop.f32.mrf.mxu0
      %v4245 = vadd.f32 %v4051, %v4244
      %4246 = vmatprep.mubr.bf16.mxu0 0
      %4247 = vmatmul.mubr.bf16.gmra.mxu0 %v3970
      %v4248 = vpop.f32.mrf.mxu0
      %v4249 = vadd.f32 %v4047, %v4248
      %v4250 = vpop.f32.mrf.mxu0
      %v4251 = vadd.f32 %v4051, %v4250
      %v4252 = vpop.f32.mrf.mxu0
      %v4253 = vadd.f32 %v4047, %v4252
      %v4254 = vpop.f32.mrf.mxu0
      %v4255 = vadd.f32 %v4051, %v4254
      %4256 = vmatprep.mubr.bf16.mxu0 0
      %4257 = vmatmul.mubr.bf16.gmra.mxu0 %v3971
      %v4258 = vpop.f32.mrf.mxu0
      %v4259 = vadd.f32 %v4047, %v4258
      %v4260 = vpop.f32.mrf.mxu0
      %v4261 = vadd.f32 %v4051, %v4260
      %v4262 = vpop.f32.mrf.mxu0
      %v4263 = vadd.f32 %v4047, %v4262
      %v4264 = vpop.f32.mrf.mxu0
      %v4265 = vadd.f32 %v4051, %v4264
      %4266 = vmatprep.mubr.bf16.mxu0 0
      %4267 = vmatmul.mubr.bf16.gmra.mxu0 %v3972
      %v4268 = vpop.f32.mrf.mxu0
      %v4269 = vadd.f32 %v4047, %v4268
      %v4270 = vpop.f32.mrf.mxu0
      %v4271 = vadd.f32 %v4051, %v4270
      %v4272 = vpop.f32.mrf.mxu0
      %v4273 = vadd.f32 %v4047, %v4272
      %v4274 = vpop.f32.mrf.mxu0
      %v4275 = vadd.f32 %v4051, %v4274
      %4276 = vmatprep.mubr.bf16.mxu0 0
      %4277 = vmatmul.mubr.bf16.gmra.mxu0 %v3973
      %v4278 = vpop.f32.mrf.mxu0
      %v4279 = vadd.f32 %v4047, %v4278
      %v4280 = vpop.f32.mrf.mxu0
      %v4281 = vadd.f32 %v4051, %v4280
      %v4282 = vpop.f32.mrf.mxu0
      %v4283 = vadd.f32 %v4047, %v4282
      %v4284 = vpop.f32.mrf.mxu0
      %v4285 = vadd.f32 %v4051, %v4284
      %4286 = vmatprep.mubr.bf16.mxu0 0
      %4287 = vmatmul.mubr.bf16.gmra.mxu0 %v3974
      %v4288 = vpop.f32.mrf.mxu0
      %v4289 = vadd.f32 %v4047, %v4288
      %v4290 = vpop.f32.mrf.mxu0
      %v4291 = vadd.f32 %v4051, %v4290
      %v4292 = vpop.f32.mrf.mxu0
      %v4293 = vadd.f32 %v4047, %v4292
      %v4294 = vpop.f32.mrf.mxu0
      %v4295 = vadd.f32 %v4051, %v4294
      %4296 = vmatprep.mubr.bf16.mxu0 0
      %4297 = vmatmul.mubr.bf16.gmra.mxu0 %v3975
      %v4298 = vpop.f32.mrf.mxu0
      %v4299 = vadd.f32 %v4047, %v4298
      %v4300 = vpop.f32.mrf.mxu0
      %v4301 = vadd.f32 %v4051, %v4300
      %v4302 = vpop.f32.mrf.mxu0
      %v4303 = vadd.f32 %v4047, %v4302
      %v4304 = vpop.f32.mrf.mxu0
      %v4305 = vadd.f32 %v4051, %v4304
      %4306 = vmatprep.mubr.bf16.mxu0 0
      %4307 = vmatmul.mubr.bf16.gmra.mxu0 %v3976
      %v4308 = vpop.f32.mrf.mxu0
      %v4309 = vadd.f32 %v4047, %v4308
      %v4310 = vpop.f32.mrf.mxu0
      %v4311 = vadd.f32 %v4051, %v4310
      %v4312 = vpop.f32.mrf.mxu0
      %v4313 = vadd.f32 %v4047, %v4312
      %v4314 = vpop.f32.mrf.mxu0
      %v4315 = vadd.f32 %v4051, %v4314
      %4316 = vmatprep.mubr.bf16.mxu0 0
      %4317 = vmatmul.mubr.bf16.gmra.mxu0 %v3977
      %v4318 = vpop.f32.mrf.mxu0
      %v4319 = vadd.f32 %v4047, %v4318
      %v4320 = vpop.f32.mrf.mxu0
      %v4321 = vadd.f32 %v4051, %v4320
      %v4322 = vpop.f32.mrf.mxu0
      %v4323 = vadd.f32 %v4047, %v4322
      %v4324 = vpop.f32.mrf.mxu0
      %v4325 = vadd.f32 %v4051, %v4324
      %4326 = vmatprep.mubr.bf16.mxu0 0
      %4327 = vmatmul.mubr.bf16.gmra.mxu0 %v3978
      %v4328 = vpop.f32.mrf.mxu0
      %v4329 = vadd.f32 %v4047, %v4328
      %v4330 = vpop.f32.mrf.mxu0
      %v4331 = vadd.f32 %v4051, %v4330
      %v4332 = vpop.f32.mrf.mxu0
      %v4333 = vadd.f32 %v4047, %v4332
      %v4334 = vpop.f32.mrf.mxu0
      %v4335 = vadd.f32 %v4051, %v4334
      %4336 = vmatprep.mubr.bf16.mxu0 0
      %4337 = vmatmul.mubr.bf16.gmra.mxu0 %v3979
      %v4338 = vpop.f32.mrf.mxu0
      %v4339 = vadd.f32 %v4047, %v4338
      %v4340 = vpop.f32.mrf.mxu0
      %v4341 = vadd.f32 %v4051, %v4340
      %v4342 = vpop.f32.mrf.mxu0
      %v4343 = vadd.f32 %v4047, %v4342
      %v4344 = vpop.f32.mrf.mxu0
      %v4345 = vadd.f32 %v4051, %v4344
      %4346 = vmatprep.mubr.bf16.mxu0 0
      %4347 = vmatmul.mubr.bf16.gmra.mxu0 %v3980
      %v4348 = vpop.f32.mrf.mxu0
      %v4349 = vadd.f32 %v4047, %v4348
      %v4350 = vpop.f32.mrf.mxu0
      %v4351 = vadd.f32 %v4051, %v4350
      %v4352 = vpop.f32.mrf.mxu0
      %v4353 = vadd.f32 %v4047, %v4352
      %v4354 = vpop.f32.mrf.mxu0
      %v4355 = vadd.f32 %v4051, %v4354
      %4356 = vmatprep.mubr.bf16.mxu0 0
      %4357 = vmatmul.mubr.bf16.gmra.mxu0 %v3981
      %v4358 = vpop.f32.mrf.mxu0
      %v4359 = vadd.f32 %v4047, %v4358
      %v4360 = vpop.f32.mrf.mxu0
      %v4361 = vadd.f32 %v4051, %v4360
      %v4362 = vpop.f32.mrf.mxu0
      %v4363 = vadd.f32 %v4047, %v4362
      %v4364 = vpop.f32.mrf.mxu0
      %v4365 = vadd.f32 %v4051, %v4364
      %4366 = vmatprep.mubr.bf16.mxu0 0
      %4367 = vmatmul.mubr.bf16.gmra.mxu0 %v3982
      %v4368 = vpop.f32.mrf.mxu0
      %v4369 = vadd.f32 %v4047, %v4368
      %v4370 = vpop.f32.mrf.mxu0
      %v4371 = vadd.f32 %v4051, %v4370
      %v4372 = vpop.f32.mrf.mxu0
      %v4373 = vadd.f32 %v4047, %v4372
      %v4374 = vpop.f32.mrf.mxu0
      %v4375 = vadd.f32 %v4051, %v4374
      %4376 = vmatprep.mubr.bf16.mxu0 0
      %4377 = vmatmul.mubr.bf16.gmra.mxu0 %v3983
      %v4378 = vpop.f32.mrf.mxu0
      %v4379 = vadd.f32 %v4047, %v4378
      %v4380 = vpop.f32.mrf.mxu0
      %v4381 = vadd.f32 %v4051, %v4380
      %v4382 = vpop.f32.mrf.mxu0
      %v4383 = vadd.f32 %v4047, %v4382
      %v4384 = vpop.f32.mrf.mxu0
      %v4385 = vadd.f32 %v4051, %v4384
      %4386 = vmatprep.mubr.bf16.mxu0 0
      %4387 = vmatmul.mubr.bf16.gmra.mxu0 %v3984
      %v4388 = vpop.f32.mrf.mxu0
      %v4389 = vadd.f32 %v4047, %v4388
      %v4390 = vpop.f32.mrf.mxu0
      %v4391 = vadd.f32 %v4051, %v4390
      %v4392 = vpop.f32.mrf.mxu0
      %v4393 = vadd.f32 %v4047, %v4392
      %v4394 = vpop.f32.mrf.mxu0
      %v4395 = vadd.f32 %v4051, %v4394
      %4396 = vmatprep.mubr.bf16.mxu0 0
      %4397 = vmatmul.mubr.bf16.gmra.mxu0 %v3985
      %v4398 = vpop.f32.mrf.mxu0
      %v4399 = vadd.f32 %v4047, %v4398
      %v4400 = vpop.f32.mrf.mxu0
      %v4401 = vadd.f32 %v4051, %v4400
      %v4402 = vpop.f32.mrf.mxu0
      %v4403 = vadd.f32 %v4047, %v4402
      %v4404 = vpop.f32.mrf.mxu0
      %v4405 = vadd.f32 %v4051, %v4404
      %4406 = vmatprep.mubr.bf16.mxu0 0
      %4407 = vmatmul.mubr.bf16.gmra.mxu0 %v3986
      %v4408 = vpop.f32.mrf.mxu0
      %v4409 = vadd.f32 %v4047, %v4408
      %v4410 = vpop.f32.mrf.mxu0
      %v4411 = vadd.f32 %v4051, %v4410
      %v4412 = vpop.f32.mrf.mxu0
      %v4413 = vadd.f32 %v4047, %v4412
      %v4414 = vpop.f32.mrf.mxu0
      %v4415 = vadd.f32 %v4051, %v4414
      %4416 = vmatprep.mubr.bf16.mxu0 0
      %4417 = vmatmul.mubr.bf16.gmra.mxu0 %v3987
      %v4418 = vpop.f32.mrf.mxu0
      %v4419 = vadd.f32 %v4047, %v4418
      %v4420 = vpop.f32.mrf.mxu0
      %v4421 = vadd.f32 %v4051, %v4420
      %v4422 = vpop.f32.mrf.mxu0
      %v4423 = vadd.f32 %v4047, %v4422
      %v4424 = vpop.f32.mrf.mxu0
      %v4425 = vadd.f32 %v4051, %v4424
      %4426 = vmatprep.mubr.bf16.mxu0 0
      %4427 = vmatmul.mubr.bf16.gmra.mxu0 %v3988
      %v4428 = vpop.f32.mrf.mxu0
      %v4429 = vadd.f32 %v4047, %v4428
      %v4430 = vpop.f32.mrf.mxu0
      %v4431 = vadd.f32 %v4051, %v4430
      %v4432 = vpop.f32.mrf.mxu0
      %v4433 = vadd.f32 %v4047, %v4432
      %v4434 = vpop.f32.mrf.mxu0
      %v4435 = vadd.f32 %v4051, %v4434
      %4436 = vmatprep.mubr.bf16.mxu0 0
      %4437 = vmatmul.mubr.bf16.gmra.mxu0 %v3989
      %v4438 = vpop.f32.mrf.mxu0
      %v4439 = vadd.f32 %v4047, %v4438
      %v4440 = vpop.f32.mrf.mxu0
      %v4441 = vadd.f32 %v4051, %v4440
      %v4442 = vpop.f32.mrf.mxu0
      %v4443 = vadd.f32 %v4047, %v4442
      %v4444 = vpop.f32.mrf.mxu0
      %v4445 = vadd.f32 %v4051, %v4444
      %4446 = vmatprep.mubr.bf16.mxu0 0
      %4447 = vmatmul.mubr.bf16.gmra.mxu0 %v3990
      %v4448 = vpop.f32.mrf.mxu0
      %v4449 = vadd.f32 %v4047, %v4448
      %v4450 = vpop.f32.mrf.mxu0
      %v4451 = vadd.f32 %v4051, %v4450
      %v4452 = vpop.f32.mrf.mxu0
      %v4453 = vadd.f32 %v4047, %v4452
      %v4454 = vpop.f32.mrf.mxu0
      %v4455 = vadd.f32 %v4051, %v4454
      %4456 = vmatprep.mubr.bf16.mxu0 0
      %4457 = vmatmul.mubr.bf16.gmra.mxu0 %v3991
      %v4458 = vpop.f32.mrf.mxu0
      %v4459 = vadd.f32 %v4047, %v4458
      %v4460 = vpop.f32.mrf.mxu0
      %v4461 = vadd.f32 %v4051, %v4460
      %v4462 = vpop.f32.mrf.mxu0
      %v4463 = vadd.f32 %v4047, %v4462
      %v4464 = vpop.f32.mrf.mxu0
      %v4465 = vadd.f32 %v4051, %v4464
      %4466 = vmatprep.mubr.bf16.mxu0 0
      %4467 = vmatmul.mubr.bf16.gmra.mxu0 %v3992
      %v4468 = vpop.f32.mrf.mxu0
      %v4469 = vadd.f32 %v4047, %v4468
      %v4470 = vpop.f32.mrf.mxu0
      %v4471 = vadd.f32 %v4051, %v4470
      %v4472 = vpop.f32.mrf.mxu0
      %v4473 = vadd.f32 %v4047, %v4472
      %v4474 = vpop.f32.mrf.mxu0
      %v4475 = vadd.f32 %v4051, %v4474
      %4476 = vmatprep.mubr.bf16.mxu0 0
      %4477 = vmatmul.mubr.bf16.gmra.mxu0 %v3993
      %v4478 = vpop.f32.mrf.mxu0
      %v4479 = vadd.f32 %v4047, %v4478
      %v4480 = vpop.f32.mrf.mxu0
      %v4481 = vadd.f32 %v4051, %v4480
      %v4482 = vpop.f32.mrf.mxu0
      %v4483 = vadd.f32 %v4047, %v4482
      %v4484 = vpop.f32.mrf.mxu0
      %v4485 = vadd.f32 %v4051, %v4484
      %4486 = vmatprep.mubr.bf16.mxu0 0
      %4487 = vmatmul.mubr.bf16.gmra.mxu0 %v3994
      %v4488 = vpop.f32.mrf.mxu0
      %v4489 = vadd.f32 %v4047, %v4488
      %v4490 = vpop.f32.mrf.mxu0
      %v4491 = vadd.f32 %v4051, %v4490
      %v4492 = vpop.f32.mrf.mxu0
      %v4493 = vadd.f32 %v4047, %v4492
      %v4494 = vpop.f32.mrf.mxu0
      %v4495 = vadd.f32 %v4051, %v4494
      %4496 = vmatprep.mubr.bf16.mxu0 0
      %4497 = vmatmul.mubr.bf16.gmra.mxu0 %v3995
      %v4498 = vpop.f32.mrf.mxu0
      %v4499 = vadd.f32 %v4047, %v4498
      %v4500 = vpop.f32.mrf.mxu0
      %v4501 = vadd.f32 %v4051, %v4500
      %v4502 = vpop.f32.mrf.mxu0
      %v4503 = vadd.f32 %v4047, %v4502
      %v4504 = vpop.f32.mrf.mxu0
      %v4505 = vadd.f32 %v4051, %v4504
      %4506 = vmatprep.mubr.bf16.mxu0 0
      %4507 = vmatmul.mubr.bf16.gmra.mxu0 %v3996
      %v4508 = vpop.f32.mrf.mxu0
      %v4509 = vadd.f32 %v4047, %v4508
      %v4510 = vpop.f32.mrf.mxu0
      %v4511 = vadd.f32 %v4051, %v4510
      %v4512 = vpop.f32.mrf.mxu0
      %v4513 = vadd.f32 %v4047, %v4512
      %v4514 = vpop.f32.mrf.mxu0
      %v4515 = vadd.f32 %v4051, %v4514
      %4516 = vmatprep.mubr.bf16.mxu0 0
      %4517 = vmatmul.mubr.bf16.gmra.mxu0 %v3997
      %v4518 = vpop.f32.mrf.mxu0
      %v4519 = vadd.f32 %v4047, %v4518
      %v4520 = vpop.f32.mrf.mxu0
      %v4521 = vadd.f32 %v4051, %v4520
      %v4522 = vpop.f32.mrf.mxu0
      %v4523 = vadd.f32 %v4047, %v4522
      %v4524 = vpop.f32.mrf.mxu0
      %v4525 = vadd.f32 %v4051, %v4524
      %4526 = vmatprep.mubr.bf16.mxu0 0
      %4527 = vmatmul.mubr.bf16.gmra.mxu0 %v3998
      %v4528 = vpop.f32.mrf.mxu0
      %v4529 = vadd.f32 %v4047, %v4528
      %v4530 = vpop.f32.mrf.mxu0
      %v4531 = vadd.f32 %v4051, %v4530
      %v4532 = vpop.f32.mrf.mxu0
      %v4533 = vadd.f32 %v4047, %v4532
      %v4534 = vpop.f32.mrf.mxu0
      %v4535 = vadd.f32 %v4051, %v4534
      %4536 = vmatprep.mubr.bf16.mxu0 0
      %4537 = vmatmul.mubr.bf16.gmra.mxu0 %v3999
      %v4538 = vpop.f32.mrf.mxu0
      %v4539 = vadd.f32 %v4047, %v4538
      %v4540 = vpop.f32.mrf.mxu0
      %v4541 = vadd.f32 %v4051, %v4540
      %v4542 = vpop.f32.mrf.mxu0
      %v4543 = vadd.f32 %v4047, %v4542
      %v4544 = vpop.f32.mrf.mxu0
      %v4545 = vadd.f32 %v4051, %v4544
      %4546 = vmatprep.mubr.bf16.mxu0 0
      %4547 = vmatmul.mubr.bf16.gmra.mxu0 %v4000
      %v4548 = vpop.f32.mrf.mxu0
      %v4549 = vadd.f32 %v4047, %v4548
      %v4550 = vpop.f32.mrf.mxu0
      %v4551 = vadd.f32 %v4051, %v4550
      %v4552 = vpop.f32.mrf.mxu0
      %v4553 = vadd.f32 %v4047, %v4552
      %v4554 = vpop.f32.mrf.mxu0
      %v4555 = vadd.f32 %v4051, %v4554
      %4556 = vmatprep.mubr.bf16.mxu0 0
      %4557 = vmatmul.mubr.bf16.gmra.mxu0 %v4001
      %v4558 = vpop.f32.mrf.mxu0
      %v4559 = vadd.f32 %v4047, %v4558
      %v4560 = vpop.f32.mrf.mxu0
      %v4561 = vadd.f32 %v4051, %v4560
      %v4562 = vpop.f32.mrf.mxu0
      %v4563 = vadd.f32 %v4047, %v4562
      %v4564 = vpop.f32.mrf.mxu0
      %v4565 = vadd.f32 %v4051, %v4564
      %4566 = vmatprep.mubr.bf16.mxu0 0
      %4567 = vmatmul.mubr.bf16.gmra.mxu0 %v4002
      %v4568 = vpop.f32.mrf.mxu0
      %v4569 = vadd.f32 %v4047, %v4568
      %v4570 = vpop.f32.mrf.mxu0
      %v4571 = vadd.f32 %v4051, %v4570
      %v4572 = vpop.f32.mrf.mxu0
      %v4573 = vadd.f32 %v4047, %v4572
      %v4574 = vpop.f32.mrf.mxu0
      %v4575 = vadd.f32 %v4051, %v4574
      %4576 = vmatprep.mubr.bf16.mxu0 0
      %4577 = vmatmul.mubr.bf16.gmra.mxu0 %v4003
      %v4578 = vpop.f32.mrf.mxu0
      %v4579 = vadd.f32 %v4047, %v4578
      %v4580 = vpop.f32.mrf.mxu0
      %v4581 = vadd.f32 %v4051, %v4580
      %v4582 = vpop.f32.mrf.mxu0
      %v4583 = vadd.f32 %v4047, %v4582
      %v4584 = vpop.f32.mrf.mxu0
      %v4585 = vadd.f32 %v4051, %v4584
      %4586 = vmatprep.mubr.bf16.mxu0 0
      %4587 = vmatmul.mubr.bf16.gmra.mxu0 %v4004
      %v4588 = vpop.f32.mrf.mxu0
      %v4589 = vadd.f32 %v4047, %v4588
      %v4590 = vpop.f32.mrf.mxu0
      %v4591 = vadd.f32 %v4051, %v4590
      %v4592 = vpop.f32.mrf.mxu0
      %v4593 = vadd.f32 %v4047, %v4592
      %v4594 = vpop.f32.mrf.mxu0
      %v4595 = vadd.f32 %v4051, %v4594
      %4596 = vmatprep.mubr.bf16.mxu0 0
      %4597 = vmatmul.mubr.bf16.gmra.mxu0 %v4005
      %v4598 = vpop.f32.mrf.mxu0
      %v4599 = vadd.f32 %v4047, %v4598
      %v4600 = vpop.f32.mrf.mxu0
      %v4601 = vadd.f32 %v4051, %v4600
      %v4602 = vpop.f32.mrf.mxu0
      %v4603 = vadd.f32 %v4047, %v4602
      %v4604 = vpop.f32.mrf.mxu0
      %v4605 = vadd.f32 %v4051, %v4604
      %4606 = vmatprep.mubr.bf16.mxu0 0
      %4607 = vmatmul.mubr.bf16.gmra.mxu0 %v4006
      %v4608 = vpop.f32.mrf.mxu0
      %v4609 = vadd.f32 %v4047, %v4608
      %v4610 = vpop.f32.mrf.mxu0
      %v4611 = vadd.f32 %v4051, %v4610
      %v4612 = vpop.f32.mrf.mxu0
      %v4613 = vadd.f32 %v4047, %v4612
      %v4614 = vpop.f32.mrf.mxu0
      %v4615 = vadd.f32 %v4051, %v4614
      %4616 = vmatprep.mubr.bf16.mxu0 0
      %4617 = vmatmul.mubr.bf16.gmra.mxu0 %v4007
      %v4618 = vpop.f32.mrf.mxu0
      %v4619 = vadd.f32 %v4047, %v4618
      %v4620 = vpop.f32.mrf.mxu0
      %v4621 = vadd.f32 %v4051, %v4620
      %v4622 = vpop.f32.mrf.mxu0
      %v4623 = vadd.f32 %v4047, %v4622
      %v4624 = vpop.f32.mrf.mxu0
      %v4625 = vadd.f32 %v4051, %v4624
      %4626 = vmatprep.mubr.bf16.mxu0 0
      %4627 = vmatmul.mubr.bf16.gmra.mxu0 %v4008
      %v4628 = vpop.f32.mrf.mxu0
      %v4629 = vadd.f32 %v4047, %v4628
      %v4630 = vpop.f32.mrf.mxu0
      %v4631 = vadd.f32 %v4051, %v4630
      %v4632 = vpop.f32.mrf.mxu0
      %v4633 = vadd.f32 %v4047, %v4632
      %v4634 = vpop.f32.mrf.mxu0
      %v4635 = vadd.f32 %v4051, %v4634
      %4636 = vmatprep.mubr.bf16.mxu0 0
      %4637 = vmatmul.mubr.bf16.gmra.mxu0 %v4009
      %v4638 = vpop.f32.mrf.mxu0
      %v4639 = vadd.f32 %v4047, %v4638
      %v4640 = vpop.f32.mrf.mxu0
      %v4641 = vadd.f32 %v4051, %v4640
      %v4642 = vpop.f32.mrf.mxu0
      %v4643 = vadd.f32 %v4047, %v4642
      %v4644 = vpop.f32.mrf.mxu0
      %v4645 = vadd.f32 %v4051, %v4644
      %4646 = vmatprep.mubr.bf16.mxu0 0
      %4647 = vmatmul.mubr.bf16.gmra.mxu0 %v4010
      %v4648 = vpop.f32.mrf.mxu0
      %v4649 = vadd.f32 %v4047, %v4648
      %v4650 = vpop.f32.mrf.mxu0
      %v4651 = vadd.f32 %v4051, %v4650
      %v4652 = vpop.f32.mrf.mxu0
      %v4653 = vadd.f32 %v4047, %v4652
      %v4654 = vpop.f32.mrf.mxu0
      %v4655 = vadd.f32 %v4051, %v4654
      %4656 = vmatprep.mubr.bf16.mxu0 0
      %4657 = vmatmul.mubr.bf16.gmra.mxu0 %v4011
      %v4658 = vpop.f32.mrf.mxu0
      %v4659 = vadd.f32 %v4047, %v4658
      %v4660 = vpop.f32.mrf.mxu0
      %v4661 = vadd.f32 %v4051, %v4660
      %v4662 = vpop.f32.mrf.mxu0
      %v4663 = vadd.f32 %v4047, %v4662
      %v4664 = vpop.f32.mrf.mxu0
      %v4665 = vadd.f32 %v4051, %v4664
      %4666 = vmatprep.mubr.bf16.mxu0 0
      %4667 = vmatmul.mubr.bf16.gmra.mxu0 %v4012
      %v4668 = vpop.f32.mrf.mxu0
      %v4669 = vadd.f32 %v4047, %v4668
      %v4670 = vpop.f32.mrf.mxu0
      %v4671 = vadd.f32 %v4051, %v4670
      %v4672 = vpop.f32.mrf.mxu0
      %v4673 = vadd.f32 %v4047, %v4672
      %v4674 = vpop.f32.mrf.mxu0
      %v4675 = vadd.f32 %v4051, %v4674
      %4676 = vmatprep.mubr.bf16.mxu0 0
      %4677 = vmatmul.mubr.bf16.gmra.mxu0 %v4013
      %v4678 = vpop.f32.mrf.mxu0
      %v4679 = vadd.f32 %v4047, %v4678
      %v4680 = vpop.f32.mrf.mxu0
      %v4681 = vadd.f32 %v4051, %v4680
      %v4682 = vpop.f32.mrf.mxu0
      %v4683 = vadd.f32 %v4047, %v4682
      %v4684 = vpop.f32.mrf.mxu0
      %v4685 = vadd.f32 %v4051, %v4684
      %4686 = vmatprep.mubr.bf16.mxu0 0
      %4687 = vmatmul.mubr.bf16.gmra.mxu0 %v4014
      %v4688 = vpop.f32.mrf.mxu0
      %v4689 = vadd.f32 %v4047, %v4688
      %v4690 = vpop.f32.mrf.mxu0
      %v4691 = vadd.f32 %v4051, %v4690
      %v4692 = vpop.f32.mrf.mxu0
      %v4693 = vadd.f32 %v4047, %v4692
      %v4694 = vpop.f32.mrf.mxu0
      %v4695 = vadd.f32 %v4051, %v4694
      %4696 = vmatprep.mubr.bf16.mxu0 0
      %4697 = vmatmul.mubr.bf16.gmra.mxu0 %v4015
      %v4698 = vpop.f32.mrf.mxu0
      %v4699 = vadd.f32 %v4047, %v4698
      %v4700 = vpop.f32.mrf.mxu0
      %v4701 = vadd.f32 %v4051, %v4700
      %v4702 = vpop.f32.mrf.mxu0
      %v4703 = vadd.f32 %v4047, %v4702
      %v4704 = vpop.f32.mrf.mxu0
      %v4705 = vadd.f32 %v4051, %v4704
      %4706 = vmatprep.mubr.bf16.mxu0 0
      %4707 = vmatmul.mubr.bf16.gmra.mxu0 %v4016
      %v4708 = vpop.f32.mrf.mxu0
      %v4709 = vadd.f32 %v4047, %v4708
      %v4710 = vpop.f32.mrf.mxu0
      %v4711 = vadd.f32 %v4051, %v4710
      %v4712 = vpop.f32.mrf.mxu0
      %v4713 = vadd.f32 %v4047, %v4712
      %v4714 = vpop.f32.mrf.mxu0
      %v4715 = vadd.f32 %v4051, %v4714
      %4716 = vmatprep.mubr.bf16.mxu0 0
      %4717 = vmatmul.mubr.bf16.gmra.mxu0 %v4017
      %v4718 = vpop.f32.mrf.mxu0
      %v4719 = vadd.f32 %v4047, %v4718
      %v4720 = vpop.f32.mrf.mxu0
      %v4721 = vadd.f32 %v4051, %v4720
      %v4722 = vpop.f32.mrf.mxu0
      %v4723 = vadd.f32 %v4047, %v4722
      %v4724 = vpop.f32.mrf.mxu0
      %v4725 = vadd.f32 %v4051, %v4724
      %4726 = vmatprep.mubr.bf16.mxu0 0
      %4727 = vmatmul.mubr.bf16.gmra.mxu0 %v4018
      %v4728 = vpop.f32.mrf.mxu0
      %v4729 = vadd.f32 %v4047, %v4728
      %v4730 = vpop.f32.mrf.mxu0
      %v4731 = vadd.f32 %v4051, %v4730
      %v4732 = vpop.f32.mrf.mxu0
      %v4733 = vadd.f32 %v4047, %v4732
      %v4734 = vpop.f32.mrf.mxu0
      %v4735 = vadd.f32 %v4051, %v4734
      %4736 = vmatprep.mubr.bf16.mxu0 0
      %4737 = vmatmul.mubr.bf16.gmra.mxu0 %v4019
      %v4738 = vpop.f32.mrf.mxu0
      %v4739 = vadd.f32 %v4047, %v4738
      %v4740 = vpop.f32.mrf.mxu0
      %v4741 = vadd.f32 %v4051, %v4740
      %v4742 = vpop.f32.mrf.mxu0
      %v4743 = vadd.f32 %v4047, %v4742
      %v4744 = vpop.f32.mrf.mxu0
      %v4745 = vadd.f32 %v4051, %v4744
      %4746 = vmatprep.mubr.bf16.mxu0 0
      %4747 = vmatmul.mubr.bf16.gmra.mxu0 %v4020
      %v4748 = vpop.f32.mrf.mxu0
      %v4749 = vadd.f32 %v4047, %v4748
      %v4750 = vpop.f32.mrf.mxu0
      %v4751 = vadd.f32 %v4051, %v4750
      %v4752 = vpop.f32.mrf.mxu0
      %v4753 = vadd.f32 %v4047, %v4752
      %v4754 = vpop.f32.mrf.mxu0
      %v4755 = vadd.f32 %v4051, %v4754
      %4756 = vmatprep.mubr.bf16.mxu0 0
      %4757 = vmatmul.mubr.bf16.gmra.mxu0 %v4021
      %v4758 = vpop.f32.mrf.mxu0
      %v4759 = vadd.f32 %v4047, %v4758
      %v4760 = vpop.f32.mrf.mxu0
      %v4761 = vadd.f32 %v4051, %v4760
      %v4762 = vpop.f32.mrf.mxu0
      %v4763 = vadd.f32 %v4047, %v4762
      %v4764 = vpop.f32.mrf.mxu0
      %v4765 = vadd.f32 %v4051, %v4764
      %4766 = vmatprep.mubr.bf16.mxu0 0
      %4767 = vmatmul.mubr.bf16.gmra.mxu0 %v4022
      %v4768 = vpop.f32.mrf.mxu0
      %v4769 = vadd.f32 %v4047, %v4768
      %v4770 = vpop.f32.mrf.mxu0
      %v4771 = vadd.f32 %v4051, %v4770
      %v4772 = vpop.f32.mrf.mxu0
      %v4773 = vadd.f32 %v4047, %v4772
      %v4774 = vpop.f32.mrf.mxu0
      %v4775 = vadd.f32 %v4051, %v4774
      %4776 = vmatprep.mubr.bf16.mxu0 0
      %4777 = vmatmul.mubr.bf16.gmra.mxu0 %v4023
      %v4778 = vpop.f32.mrf.mxu0
      %v4779 = vadd.f32 %v4047, %v4778
      %v4780 = vpop.f32.mrf.mxu0
      %v4781 = vadd.f32 %v4051, %v4780
      %v4782 = vpop.f32.mrf.mxu0
      %v4783 = vadd.f32 %v4047, %v4782
      %v4784 = vpop.f32.mrf.mxu0
      %v4785 = vadd.f32 %v4051, %v4784
      %4786 = vmatprep.mubr.bf16.mxu0 0
      %4787 = vmatmul.mubr.bf16.gmra.mxu0 %v4024
      %v4788 = vpop.f32.mrf.mxu0
      %v4789 = vadd.f32 %v4047, %v4788
      %v4790 = vpop.f32.mrf.mxu0
      %v4791 = vadd.f32 %v4051, %v4790
      %v4792 = vpop.f32.mrf.mxu0
      %v4793 = vadd.f32 %v4047, %v4792
      %v4794 = vpop.f32.mrf.mxu0
      %v4795 = vadd.f32 %v4051, %v4794
      %4796 = vmatprep.mubr.bf16.mxu0 0
      %4797 = vmatmul.mubr.bf16.gmra.mxu0 %v4025
      %v4798 = vpop.f32.mrf.mxu0
      %v4799 = vadd.f32 %v4047, %v4798
      %v4800 = vpop.f32.mrf.mxu0
      %v4801 = vadd.f32 %v4051, %v4800
      %v4802 = vpop.f32.mrf.mxu0
      %v4803 = vadd.f32 %v4047, %v4802
      %v4804 = vpop.f32.mrf.mxu0
      %v4805 = vadd.f32 %v4051, %v4804
      %4806 = vdwg.mxu0
      %v4807 = vmax.f32 %v4169, 0.0
      %v4808 = vmax.f32 %v4171, 0.0
      %v4809 = vmax.f32 %v4173, 0.0
      %v4810 = vmax.f32 %v4175, 0.0
      %v4811 = vmax.f32 %v4179, 0.0
      %v4812 = vmax.f32 %v4181, 0.0
      %v4813 = vmax.f32 %v4183, 0.0
      %v4814 = vmax.f32 %v4185, 0.0
      %v4815 = vmax.f32 %v4189, 0.0
      %v4816 = vmax.f32 %v4191, 0.0
      %v4817 = vmax.f32 %v4193, 0.0
      %v4818 = vmax.f32 %v4195, 0.0
      %v4819 = vmax.f32 %v4199, 0.0
      %v4820 = vmax.f32 %v4201, 0.0
      %v4821 = vmax.f32 %v4203, 0.0
      %v4822 = vmax.f32 %v4205, 0.0
      %v4823 = vmax.f32 %v4209, 0.0
      %v4824 = vmax.f32 %v4211, 0.0
      %v4825 = vmax.f32 %v4213, 0.0
      %v4826 = vmax.f32 %v4215, 0.0
      %v4827 = vmax.f32 %v4219, 0.0
      %v4828 = vmax.f32 %v4221, 0.0
      %v4829 = vmax.f32 %v4223, 0.0
      %v4830 = vmax.f32 %v4225, 0.0
      %v4831 = vmax.f32 %v4229, 0.0
      %v4832 = vmax.f32 %v4231, 0.0
      %v4833 = vmax.f32 %v4233, 0.0
      %v4834 = vmax.f32 %v4235, 0.0
      %v4835 = vmax.f32 %v4239, 0.0
      %v4836 = vmax.f32 %v4241, 0.0
      %v4837 = vmax.f32 %v4243, 0.0
      %v4838 = vmax.f32 %v4245, 0.0
      %v4839 = vmax.f32 %v4249, 0.0
      %v4840 = vmax.f32 %v4251, 0.0
      %v4841 = vmax.f32 %v4253, 0.0
      %v4842 = vmax.f32 %v4255, 0.0
      %v4843 = vmax.f32 %v4259, 0.0
      %v4844 = vmax.f32 %v4261, 0.0
      %v4845 = vmax.f32 %v4263, 0.0
      %v4846 = vmax.f32 %v4265, 0.0
      %v4847 = vmax.f32 %v4269, 0.0
      %v4848 = vmax.f32 %v4271, 0.0
      %v4849 = vmax.f32 %v4273, 0.0
      %v4850 = vmax.f32 %v4275, 0.0
      %v4851 = vmax.f32 %v4279, 0.0
      %v4852 = vmax.f32 %v4281, 0.0
      %v4853 = vmax.f32 %v4283, 0.0
      %v4854 = vmax.f32 %v4285, 0.0
      %v4855 = vmax.f32 %v4289, 0.0
      %v4856 = vmax.f32 %v4291, 0.0
      %v4857 = vmax.f32 %v4293, 0.0
      %v4858 = vmax.f32 %v4295, 0.0
      %v4859 = vmax.f32 %v4299, 0.0
      %v4860 = vmax.f32 %v4301, 0.0
      %v4861 = vmax.f32 %v4303, 0.0
      %v4862 = vmax.f32 %v4305, 0.0
      %v4863 = vmax.f32 %v4309, 0.0
      %v4864 = vmax.f32 %v4311, 0.0
      %v4865 = vmax.f32 %v4313, 0.0
      %v4866 = vmax.f32 %v4315, 0.0
      %v4867 = vmax.f32 %v4319, 0.0
      %v4868 = vmax.f32 %v4321, 0.0
      %v4869 = vmax.f32 %v4323, 0.0
      %v4870 = vmax.f32 %v4325, 0.0
      %v4871 = vmax.f32 %v4329, 0.0
      %v4872 = vmax.f32 %v4331, 0.0
      %v4873 = vmax.f32 %v4333, 0.0
      %v4874 = vmax.f32 %v4335, 0.0
      %v4875 = vmax.f32 %v4339, 0.0
      %v4876 = vmax.f32 %v4341, 0.0
      %v4877 = vmax.f32 %v4343, 0.0
      %v4878 = vmax.f32 %v4345, 0.0
      %v4879 = vmax.f32 %v4349, 0.0
      %v4880 = vmax.f32 %v4351, 0.0
      %v4881 = vmax.f32 %v4353, 0.0
      %v4882 = vmax.f32 %v4355, 0.0
      %v4883 = vmax.f32 %v4359, 0.0
      %v4884 = vmax.f32 %v4361, 0.0
      %v4885 = vmax.f32 %v4363, 0.0
      %v4886 = vmax.f32 %v4365, 0.0
      %v4887 = vmax.f32 %v4369, 0.0
      %v4888 = vmax.f32 %v4371, 0.0
      %v4889 = vmax.f32 %v4373, 0.0
      %v4890 = vmax.f32 %v4375, 0.0
      %v4891 = vmax.f32 %v4379, 0.0
      %v4892 = vmax.f32 %v4381, 0.0
      %v4893 = vmax.f32 %v4383, 0.0
      %v4894 = vmax.f32 %v4385, 0.0
      %v4895 = vmax.f32 %v4389, 0.0
      %v4896 = vmax.f32 %v4391, 0.0
      %v4897 = vmax.f32 %v4393, 0.0
      %v4898 = vmax.f32 %v4395, 0.0
      %v4899 = vmax.f32 %v4399, 0.0
      %v4900 = vmax.f32 %v4401, 0.0
      %v4901 = vmax.f32 %v4403, 0.0
      %v4902 = vmax.f32 %v4405, 0.0
      %v4903 = vmax.f32 %v4409, 0.0
      %v4904 = vmax.f32 %v4411, 0.0
      %v4905 = vmax.f32 %v4413, 0.0
      %v4906 = vmax.f32 %v4415, 0.0
      %v4907 = vmax.f32 %v4419, 0.0
      %v4908 = vmax.f32 %v4421, 0.0
      %v4909 = vmax.f32 %v4423, 0.0
      %v4910 = vmax.f32 %v4425, 0.0
      %v4911 = vmax.f32 %v4429, 0.0
      %v4912 = vmax.f32 %v4431, 0.0
      %v4913 = vmax.f32 %v4433, 0.0
      %v4914 = vmax.f32 %v4435, 0.0
      %v4915 = vmax.f32 %v4439, 0.0
      %v4916 = vmax.f32 %v4441, 0.0
      %v4917 = vmax.f32 %v4443, 0.0
      %v4918 = vmax.f32 %v4445, 0.0
      %v4919 = vmax.f32 %v4449, 0.0
      %v4920 = vmax.f32 %v4451, 0.0
      %v4921 = vmax.f32 %v4453, 0.0
      %v4922 = vmax.f32 %v4455, 0.0
      %v4923 = vmax.f32 %v4459, 0.0
      %v4924 = vmax.f32 %v4461, 0.0
      %v4925 = vmax.f32 %v4463, 0.0
      %v4926 = vmax.f32 %v4465, 0.0
      %v4927 = vmax.f32 %v4469, 0.0
      %v4928 = vmax.f32 %v4471, 0.0
      %v4929 = vmax.f32 %v4473, 0.0
      %v4930 = vmax.f32 %v4475, 0.0
      %v4931 = vmax.f32 %v4479, 0.0
      %v4932 = vmax.f32 %v4481, 0.0
      %v4933 = vmax.f32 %v4483, 0.0
      %v4934 = vmax.f32 %v4485, 0.0
      %v4935 = vmax.f32 %v4489, 0.0
      %v4936 = vmax.f32 %v4491, 0.0
      %v4937 = vmax.f32 %v4493, 0.0
      %v4938 = vmax.f32 %v4495, 0.0
      %v4939 = vmax.f32 %v4499, 0.0
      %v4940 = vmax.f32 %v4501, 0.0
      %v4941 = vmax.f32 %v4503, 0.0
      %v4942 = vmax.f32 %v4505, 0.0
      %v4943 = vmax.f32 %v4509, 0.0
      %v4944 = vmax.f32 %v4511, 0.0
      %v4945 = vmax.f32 %v4513, 0.0
      %v4946 = vmax.f32 %v4515, 0.0
      %v4947 = vmax.f32 %v4519, 0.0
      %v4948 = vmax.f32 %v4521, 0.0
      %v4949 = vmax.f32 %v4523, 0.0
      %v4950 = vmax.f32 %v4525, 0.0
      %v4951 = vmax.f32 %v4529, 0.0
      %v4952 = vmax.f32 %v4531, 0.0
      %v4953 = vmax.f32 %v4533, 0.0
      %v4954 = vmax.f32 %v4535, 0.0
      %v4955 = vmax.f32 %v4539, 0.0
      %v4956 = vmax.f32 %v4541, 0.0
      %v4957 = vmax.f32 %v4543, 0.0
      %v4958 = vmax.f32 %v4545, 0.0
      %v4959 = vmax.f32 %v4549, 0.0
      %v4960 = vmax.f32 %v4551, 0.0
      %v4961 = vmax.f32 %v4553, 0.0
      %v4962 = vmax.f32 %v4555, 0.0
      %v4963 = vmax.f32 %v4559, 0.0
      %v4964 = vmax.f32 %v4561, 0.0
      %v4965 = vmax.f32 %v4563, 0.0
      %v4966 = vmax.f32 %v4565, 0.0
      %v4967 = vmax.f32 %v4569, 0.0
      %v4968 = vmax.f32 %v4571, 0.0
      %v4969 = vmax.f32 %v4573, 0.0
      %v4970 = vmax.f32 %v4575, 0.0
      %v4971 = vmax.f32 %v4579, 0.0
      %v4972 = vmax.f32 %v4581, 0.0
      %v4973 = vmax.f32 %v4583, 0.0
      %v4974 = vmax.f32 %v4585, 0.0
      %v4975 = vmax.f32 %v4589, 0.0
      %v4976 = vmax.f32 %v4591, 0.0
      %v4977 = vmax.f32 %v4593, 0.0
      %v4978 = vmax.f32 %v4595, 0.0
      %v4979 = vmax.f32 %v4599, 0.0
      %v4980 = vmax.f32 %v4601, 0.0
      %v4981 = vmax.f32 %v4603, 0.0
      %v4982 = vmax.f32 %v4605, 0.0
      %v4983 = vmax.f32 %v4609, 0.0
      %v4984 = vmax.f32 %v4611, 0.0
      %v4985 = vmax.f32 %v4613, 0.0
      %v4986 = vmax.f32 %v4615, 0.0
      %v4987 = vmax.f32 %v4619, 0.0
      %v4988 = vmax.f32 %v4621, 0.0
      %v4989 = vmax.f32 %v4623, 0.0
      %v4990 = vmax.f32 %v4625, 0.0
      %v4991 = vmax.f32 %v4629, 0.0
      %v4992 = vmax.f32 %v4631, 0.0
      %v4993 = vmax.f32 %v4633, 0.0
      %v4994 = vmax.f32 %v4635, 0.0
      %v4995 = vmax.f32 %v4639, 0.0
      %v4996 = vmax.f32 %v4641, 0.0
      %v4997 = vmax.f32 %v4643, 0.0
      %v4998 = vmax.f32 %v4645, 0.0
      %v4999 = vmax.f32 %v4649, 0.0
      %v5000 = vmax.f32 %v4651, 0.0
      %v5001 = vmax.f32 %v4653, 0.0
      %v5002 = vmax.f32 %v4655, 0.0
      %v5003 = vmax.f32 %v4659, 0.0
      %v5004 = vmax.f32 %v4661, 0.0
      %v5005 = vmax.f32 %v4663, 0.0
      %v5006 = vmax.f32 %v4665, 0.0
      %v5007 = vmax.f32 %v4669, 0.0
      %v5008 = vmax.f32 %v4671, 0.0
      %v5009 = vmax.f32 %v4673, 0.0
      %v5010 = vmax.f32 %v4675, 0.0
      %v5011 = vmax.f32 %v4679, 0.0
      %v5012 = vmax.f32 %v4681, 0.0
      %v5013 = vmax.f32 %v4683, 0.0
      %v5014 = vmax.f32 %v4685, 0.0
      %v5015 = vmax.f32 %v4689, 0.0
      %v5016 = vmax.f32 %v4691, 0.0
      %v5017 = vmax.f32 %v4693, 0.0
      %v5018 = vmax.f32 %v4695, 0.0
      %v5019 = vmax.f32 %v4699, 0.0
      %v5020 = vmax.f32 %v4701, 0.0
      %v5021 = vmax.f32 %v4703, 0.0
      %v5022 = vmax.f32 %v4705, 0.0
      %v5023 = vmax.f32 %v4709, 0.0
      %v5024 = vmax.f32 %v4711, 0.0
      %v5025 = vmax.f32 %v4713, 0.0
      %v5026 = vmax.f32 %v4715, 0.0
      %v5027 = vmax.f32 %v4719, 0.0
      %v5028 = vmax.f32 %v4721, 0.0
      %v5029 = vmax.f32 %v4723, 0.0
      %v5030 = vmax.f32 %v4725, 0.0
      %v5031 = vmax.f32 %v4729, 0.0
      %v5032 = vmax.f32 %v4731, 0.0
      %v5033 = vmax.f32 %v4733, 0.0
      %v5034 = vmax.f32 %v4735, 0.0
      %v5035 = vmax.f32 %v4739, 0.0
      %v5036 = vmax.f32 %v4741, 0.0
      %v5037 = vmax.f32 %v4743, 0.0
      %v5038 = vmax.f32 %v4745, 0.0
      %v5039 = vmax.f32 %v4749, 0.0
      %v5040 = vmax.f32 %v4751, 0.0
      %v5041 = vmax.f32 %v4753, 0.0
      %v5042 = vmax.f32 %v4755, 0.0
      %v5043 = vmax.f32 %v4759, 0.0
      %v5044 = vmax.f32 %v4761, 0.0
      %v5045 = vmax.f32 %v4763, 0.0
      %v5046 = vmax.f32 %v4765, 0.0
      %v5047 = vmax.f32 %v4769, 0.0
      %v5048 = vmax.f32 %v4771, 0.0
      %v5049 = vmax.f32 %v4773, 0.0
      %v5050 = vmax.f32 %v4775, 0.0
      %v5051 = vmax.f32 %v4779, 0.0
      %v5052 = vmax.f32 %v4781, 0.0
      %v5053 = vmax.f32 %v4783, 0.0
      %v5054 = vmax.f32 %v4785, 0.0
      %v5055 = vmax.f32 %v4789, 0.0
      %v5056 = vmax.f32 %v4791, 0.0
      %v5057 = vmax.f32 %v4793, 0.0
      %v5058 = vmax.f32 %v4795, 0.0
      %v5059 = vmax.f32 %v4799, 0.0
      %v5060 = vmax.f32 %v4801, 0.0
      %v5061 = vmax.f32 %v4803, 0.0
      %v5062 = vmax.f32 %v4805, 0.0
      %v5063 = vmax.f32 %v4807, %v4809
      %v5064 = vrot.slane %v5063, 4
      %v5065 = vmax.f32 %v5063, %v5064
      %v5066 = vrot.slane %v5065, 2
      %v5067 = vmax.f32 %v5065, %v5066
      %v5068 = vrot.slane %v5067, 1
      %v5069 = vmax.f32 %v5067, %v5068
      %v5070 = vmax.f32 %v4808, %v4810
      %v5071 = vrot.slane %v5070, 4
      %v5072 = vmax.f32 %v5070, %v5071
      %v5073 = vrot.slane %v5072, 2
      %v5074 = vmax.f32 %v5072, %v5073
      %v5075 = vrot.slane %v5074, 1
      %v5076 = vmax.f32 %v5074, %v5075
      %v5077 = vmax.f32 %v4811, %v4813
      %v5078 = vrot.slane %v5077, 4
      %v5079 = vmax.f32 %v5077, %v5078
      %v5080 = vrot.slane %v5079, 2
      %v5081 = vmax.f32 %v5079, %v5080
      %v5082 = vrot.slane %v5081, 1
      %v5083 = vmax.f32 %v5081, %v5082
      %v5084 = vmax.f32 %v4812, %v4814
      %v5085 = vrot.slane %v5084, 4
      %v5086 = vmax.f32 %v5084, %v5085
      %v5087 = vrot.slane %v5086, 2
      %v5088 = vmax.f32 %v5086, %v5087
      %v5089 = vrot.slane %v5088, 1
      %v5090 = vmax.f32 %v5088, %v5089
      %v5091 = vmax.f32 %v4815, %v4817
      %v5092 = vrot.slane %v5091, 4
      %v5093 = vmax.f32 %v5091, %v5092
      %v5094 = vrot.slane %v5093, 2
      %v5095 = vmax.f32 %v5093, %v5094
      %v5096 = vrot.slane %v5095, 1
      %v5097 = vmax.f32 %v5095, %v5096
      %v5098 = vmax.f32 %v4816, %v4818
      %v5099 = vrot.slane %v5098, 4
      %v5100 = vmax.f32 %v5098, %v5099
      %v5101 = vrot.slane %v5100, 2
      %v5102 = vmax.f32 %v5100, %v5101
      %v5103 = vrot.slane %v5102, 1
      %v5104 = vmax.f32 %v5102, %v5103
      %v5105 = vmax.f32 %v4819, %v4821
      %v5106 = vrot.slane %v5105, 4
      %v5107 = vmax.f32 %v5105, %v5106
      %v5108 = vrot.slane %v5107, 2
      %v5109 = vmax.f32 %v5107, %v5108
      %v5110 = vrot.slane %v5109, 1
      %v5111 = vmax.f32 %v5109, %v5110
      %v5112 = vmax.f32 %v4820, %v4822
      %v5113 = vrot.slane %v5112, 4
      %v5114 = vmax.f32 %v5112, %v5113
      %v5115 = vrot.slane %v5114, 2
      %v5116 = vmax.f32 %v5114, %v5115
      %v5117 = vrot.slane %v5116, 1
      %v5118 = vmax.f32 %v5116, %v5117
      %v5119 = vmax.f32 %v4823, %v4825
      %v5120 = vrot.slane %v5119, 4
      %v5121 = vmax.f32 %v5119, %v5120
      %v5122 = vrot.slane %v5121, 2
      %v5123 = vmax.f32 %v5121, %v5122
      %v5124 = vrot.slane %v5123, 1
      %v5125 = vmax.f32 %v5123, %v5124
      %v5126 = vmax.f32 %v4824, %v4826
      %v5127 = vrot.slane %v5126, 4
      %v5128 = vmax.f32 %v5126, %v5127
      %v5129 = vrot.slane %v5128, 2
      %v5130 = vmax.f32 %v5128, %v5129
      %v5131 = vrot.slane %v5130, 1
      %v5132 = vmax.f32 %v5130, %v5131
      %v5133 = vmax.f32 %v4827, %v4829
      %v5134 = vrot.slane %v5133, 4
      %v5135 = vmax.f32 %v5133, %v5134
      %v5136 = vrot.slane %v5135, 2
      %v5137 = vmax.f32 %v5135, %v5136
      %v5138 = vrot.slane %v5137, 1
      %v5139 = vmax.f32 %v5137, %v5138
      %v5140 = vmax.f32 %v4828, %v4830
      %v5141 = vrot.slane %v5140, 4
      %v5142 = vmax.f32 %v5140, %v5141
      %v5143 = vrot.slane %v5142, 2
      %v5144 = vmax.f32 %v5142, %v5143
      %v5145 = vrot.slane %v5144, 1
      %v5146 = vmax.f32 %v5144, %v5145
      %v5147 = vmax.f32 %v4831, %v4833
      %v5148 = vrot.slane %v5147, 4
      %v5149 = vmax.f32 %v5147, %v5148
      %v5150 = vrot.slane %v5149, 2
      %v5151 = vmax.f32 %v5149, %v5150
      %v5152 = vrot.slane %v5151, 1
      %v5153 = vmax.f32 %v5151, %v5152
      %v5154 = vmax.f32 %v4832, %v4834
      %v5155 = vrot.slane %v5154, 4
      %v5156 = vmax.f32 %v5154, %v5155
      %v5157 = vrot.slane %v5156, 2
      %v5158 = vmax.f32 %v5156, %v5157
      %v5159 = vrot.slane %v5158, 1
      %v5160 = vmax.f32 %v5158, %v5159
      %v5161 = vmax.f32 %v4835, %v4837
      %v5162 = vrot.slane %v5161, 4
      %v5163 = vmax.f32 %v5161, %v5162
      %v5164 = vrot.slane %v5163, 2
      %v5165 = vmax.f32 %v5163, %v5164
      %v5166 = vrot.slane %v5165, 1
      %v5167 = vmax.f32 %v5165, %v5166
      %v5168 = vmax.f32 %v4836, %v4838
      %v5169 = vrot.slane %v5168, 4
      %v5170 = vmax.f32 %v5168, %v5169
      %v5171 = vrot.slane %v5170, 2
      %v5172 = vmax.f32 %v5170, %v5171
      %v5173 = vrot.slane %v5172, 1
      %v5174 = vmax.f32 %v5172, %v5173
      %v5175 = vmax.f32 %v4839, %v4841
      %v5176 = vrot.slane %v5175, 4
      %v5177 = vmax.f32 %v5175, %v5176
      %v5178 = vrot.slane %v5177, 2
      %v5179 = vmax.f32 %v5177, %v5178
      %v5180 = vrot.slane %v5179, 1
      %v5181 = vmax.f32 %v5179, %v5180
      %v5182 = vmax.f32 %v4840, %v4842
      %v5183 = vrot.slane %v5182, 4
      %v5184 = vmax.f32 %v5182, %v5183
      %v5185 = vrot.slane %v5184, 2
      %v5186 = vmax.f32 %v5184, %v5185
      %v5187 = vrot.slane %v5186, 1
      %v5188 = vmax.f32 %v5186, %v5187
      %v5189 = vmax.f32 %v4843, %v4845
      %v5190 = vrot.slane %v5189, 4
      %v5191 = vmax.f32 %v5189, %v5190
      %v5192 = vrot.slane %v5191, 2
      %v5193 = vmax.f32 %v5191, %v5192
      %v5194 = vrot.slane %v5193, 1
      %v5195 = vmax.f32 %v5193, %v5194
      %v5196 = vmax.f32 %v4844, %v4846
      %v5197 = vrot.slane %v5196, 4
      %v5198 = vmax.f32 %v5196, %v5197
      %v5199 = vrot.slane %v5198, 2
      %v5200 = vmax.f32 %v5198, %v5199
      %v5201 = vrot.slane %v5200, 1
      %v5202 = vmax.f32 %v5200, %v5201
      %v5203 = vmax.f32 %v4847, %v4849
      %v5204 = vrot.slane %v5203, 4
      %v5205 = vmax.f32 %v5203, %v5204
      %v5206 = vrot.slane %v5205, 2
      %v5207 = vmax.f32 %v5205, %v5206
      %v5208 = vrot.slane %v5207, 1
      %v5209 = vmax.f32 %v5207, %v5208
      %v5210 = vmax.f32 %v4848, %v4850
      %v5211 = vrot.slane %v5210, 4
      %v5212 = vmax.f32 %v5210, %v5211
      %v5213 = vrot.slane %v5212, 2
      %v5214 = vmax.f32 %v5212, %v5213
      %v5215 = vrot.slane %v5214, 1
      %v5216 = vmax.f32 %v5214, %v5215
      %v5217 = vmax.f32 %v4851, %v4853
      %v5218 = vrot.slane %v5217, 4
      %v5219 = vmax.f32 %v5217, %v5218
      %v5220 = vrot.slane %v5219, 2
      %v5221 = vmax.f32 %v5219, %v5220
      %v5222 = vrot.slane %v5221, 1
      %v5223 = vmax.f32 %v5221, %v5222
      %v5224 = vmax.f32 %v4852, %v4854
      %v5225 = vrot.slane %v5224, 4
      %v5226 = vmax.f32 %v5224, %v5225
      %v5227 = vrot.slane %v5226, 2
      %v5228 = vmax.f32 %v5226, %v5227
      %v5229 = vrot.slane %v5228, 1
      %v5230 = vmax.f32 %v5228, %v5229
      %v5231 = vmax.f32 %v4855, %v4857
      %v5232 = vrot.slane %v5231, 4
      %v5233 = vmax.f32 %v5231, %v5232
      %v5234 = vrot.slane %v5233, 2
      %v5235 = vmax.f32 %v5233, %v5234
      %v5236 = vrot.slane %v5235, 1
      %v5237 = vmax.f32 %v5235, %v5236
      %v5238 = vmax.f32 %v4856, %v4858
      %v5239 = vrot.slane %v5238, 4
      %v5240 = vmax.f32 %v5238, %v5239
      %v5241 = vrot.slane %v5240, 2
      %v5242 = vmax.f32 %v5240, %v5241
      %v5243 = vrot.slane %v5242, 1
      %v5244 = vmax.f32 %v5242, %v5243
      %v5245 = vmax.f32 %v4859, %v4861
      %v5246 = vrot.slane %v5245, 4
      %v5247 = vmax.f32 %v5245, %v5246
      %v5248 = vrot.slane %v5247, 2
      %v5249 = vmax.f32 %v5247, %v5248
      %v5250 = vrot.slane %v5249, 1
      %v5251 = vmax.f32 %v5249, %v5250
      %v5252 = vmax.f32 %v4860, %v4862
      %v5253 = vrot.slane %v5252, 4
      %v5254 = vmax.f32 %v5252, %v5253
      %v5255 = vrot.slane %v5254, 2
      %v5256 = vmax.f32 %v5254, %v5255
      %v5257 = vrot.slane %v5256, 1
      %v5258 = vmax.f32 %v5256, %v5257
      %v5259 = vmax.f32 %v4863, %v4865
      %v5260 = vrot.slane %v5259, 4
      %v5261 = vmax.f32 %v5259, %v5260
      %v5262 = vrot.slane %v5261, 2
      %v5263 = vmax.f32 %v5261, %v5262
      %v5264 = vrot.slane %v5263, 1
      %v5265 = vmax.f32 %v5263, %v5264
      %v5266 = vmax.f32 %v4864, %v4866
      %v5267 = vrot.slane %v5266, 4
      %v5268 = vmax.f32 %v5266, %v5267
      %v5269 = vrot.slane %v5268, 2
      %v5270 = vmax.f32 %v5268, %v5269
      %v5271 = vrot.slane %v5270, 1
      %v5272 = vmax.f32 %v5270, %v5271
      %v5273 = vmax.f32 %v4867, %v4869
      %v5274 = vrot.slane %v5273, 4
      %v5275 = vmax.f32 %v5273, %v5274
      %v5276 = vrot.slane %v5275, 2
      %v5277 = vmax.f32 %v5275, %v5276
      %v5278 = vrot.slane %v5277, 1
      %v5279 = vmax.f32 %v5277, %v5278
      %v5280 = vmax.f32 %v4868, %v4870
      %v5281 = vrot.slane %v5280, 4
      %v5282 = vmax.f32 %v5280, %v5281
      %v5283 = vrot.slane %v5282, 2
      %v5284 = vmax.f32 %v5282, %v5283
      %v5285 = vrot.slane %v5284, 1
      %v5286 = vmax.f32 %v5284, %v5285
      %v5287 = vmax.f32 %v4871, %v4873
      %v5288 = vrot.slane %v5287, 4
      %v5289 = vmax.f32 %v5287, %v5288
      %v5290 = vrot.slane %v5289, 2
      %v5291 = vmax.f32 %v5289, %v5290
      %v5292 = vrot.slane %v5291, 1
      %v5293 = vmax.f32 %v5291, %v5292
      %v5294 = vmax.f32 %v4872, %v4874
      %v5295 = vrot.slane %v5294, 4
      %v5296 = vmax.f32 %v5294, %v5295
      %v5297 = vrot.slane %v5296, 2
      %v5298 = vmax.f32 %v5296, %v5297
      %v5299 = vrot.slane %v5298, 1
      %v5300 = vmax.f32 %v5298, %v5299
      %v5301 = vmax.f32 %v4875, %v4877
      %v5302 = vrot.slane %v5301, 4
      %v5303 = vmax.f32 %v5301, %v5302
      %v5304 = vrot.slane %v5303, 2
      %v5305 = vmax.f32 %v5303, %v5304
      %v5306 = vrot.slane %v5305, 1
      %v5307 = vmax.f32 %v5305, %v5306
      %v5308 = vmax.f32 %v4876, %v4878
      %v5309 = vrot.slane %v5308, 4
      %v5310 = vmax.f32 %v5308, %v5309
      %v5311 = vrot.slane %v5310, 2
      %v5312 = vmax.f32 %v5310, %v5311
      %v5313 = vrot.slane %v5312, 1
      %v5314 = vmax.f32 %v5312, %v5313
      %v5315 = vmax.f32 %v4879, %v4881
      %v5316 = vrot.slane %v5315, 4
      %v5317 = vmax.f32 %v5315, %v5316
      %v5318 = vrot.slane %v5317, 2
      %v5319 = vmax.f32 %v5317, %v5318
      %v5320 = vrot.slane %v5319, 1
      %v5321 = vmax.f32 %v5319, %v5320
      %v5322 = vmax.f32 %v4880, %v4882
      %v5323 = vrot.slane %v5322, 4
      %v5324 = vmax.f32 %v5322, %v5323
      %v5325 = vrot.slane %v5324, 2
      %v5326 = vmax.f32 %v5324, %v5325
      %v5327 = vrot.slane %v5326, 1
      %v5328 = vmax.f32 %v5326, %v5327
      %v5329 = vmax.f32 %v4883, %v4885
      %v5330 = vrot.slane %v5329, 4
      %v5331 = vmax.f32 %v5329, %v5330
      %v5332 = vrot.slane %v5331, 2
      %v5333 = vmax.f32 %v5331, %v5332
      %v5334 = vrot.slane %v5333, 1
      %v5335 = vmax.f32 %v5333, %v5334
      %v5336 = vmax.f32 %v4884, %v4886
      %v5337 = vrot.slane %v5336, 4
      %v5338 = vmax.f32 %v5336, %v5337
      %v5339 = vrot.slane %v5338, 2
      %v5340 = vmax.f32 %v5338, %v5339
      %v5341 = vrot.slane %v5340, 1
      %v5342 = vmax.f32 %v5340, %v5341
      %v5343 = vmax.f32 %v4887, %v4889
      %v5344 = vrot.slane %v5343, 4
      %v5345 = vmax.f32 %v5343, %v5344
      %v5346 = vrot.slane %v5345, 2
      %v5347 = vmax.f32 %v5345, %v5346
      %v5348 = vrot.slane %v5347, 1
      %v5349 = vmax.f32 %v5347, %v5348
      %v5350 = vmax.f32 %v4888, %v4890
      %v5351 = vrot.slane %v5350, 4
      %v5352 = vmax.f32 %v5350, %v5351
      %v5353 = vrot.slane %v5352, 2
      %v5354 = vmax.f32 %v5352, %v5353
      %v5355 = vrot.slane %v5354, 1
      %v5356 = vmax.f32 %v5354, %v5355
      %v5357 = vmax.f32 %v4891, %v4893
      %v5358 = vrot.slane %v5357, 4
      %v5359 = vmax.f32 %v5357, %v5358
      %v5360 = vrot.slane %v5359, 2
      %v5361 = vmax.f32 %v5359, %v5360
      %v5362 = vrot.slane %v5361, 1
      %v5363 = vmax.f32 %v5361, %v5362
      %v5364 = vmax.f32 %v4892, %v4894
      %v5365 = vrot.slane %v5364, 4
      %v5366 = vmax.f32 %v5364, %v5365
      %v5367 = vrot.slane %v5366, 2
      %v5368 = vmax.f32 %v5366, %v5367
      %v5369 = vrot.slane %v5368, 1
      %v5370 = vmax.f32 %v5368, %v5369
      %v5371 = vmax.f32 %v4895, %v4897
      %v5372 = vrot.slane %v5371, 4
      %v5373 = vmax.f32 %v5371, %v5372
      %v5374 = vrot.slane %v5373, 2
      %v5375 = vmax.f32 %v5373, %v5374
      %v5376 = vrot.slane %v5375, 1
      %v5377 = vmax.f32 %v5375, %v5376
      %v5378 = vmax.f32 %v4896, %v4898
      %v5379 = vrot.slane %v5378, 4
      %v5380 = vmax.f32 %v5378, %v5379
      %v5381 = vrot.slane %v5380, 2
      %v5382 = vmax.f32 %v5380, %v5381
      %v5383 = vrot.slane %v5382, 1
      %v5384 = vmax.f32 %v5382, %v5383
      %v5385 = vmax.f32 %v4899, %v4901
      %v5386 = vrot.slane %v5385, 4
      %v5387 = vmax.f32 %v5385, %v5386
      %v5388 = vrot.slane %v5387, 2
      %v5389 = vmax.f32 %v5387, %v5388
      %v5390 = vrot.slane %v5389, 1
      %v5391 = vmax.f32 %v5389, %v5390
      %v5392 = vmax.f32 %v4900, %v4902
      %v5393 = vrot.slane %v5392, 4
      %v5394 = vmax.f32 %v5392, %v5393
      %v5395 = vrot.slane %v5394, 2
      %v5396 = vmax.f32 %v5394, %v5395
      %v5397 = vrot.slane %v5396, 1
      %v5398 = vmax.f32 %v5396, %v5397
      %v5399 = vmax.f32 %v4903, %v4905
      %v5400 = vrot.slane %v5399, 4
      %v5401 = vmax.f32 %v5399, %v5400
      %v5402 = vrot.slane %v5401, 2
      %v5403 = vmax.f32 %v5401, %v5402
      %v5404 = vrot.slane %v5403, 1
      %v5405 = vmax.f32 %v5403, %v5404
      %v5406 = vmax.f32 %v4904, %v4906
      %v5407 = vrot.slane %v5406, 4
      %v5408 = vmax.f32 %v5406, %v5407
      %v5409 = vrot.slane %v5408, 2
      %v5410 = vmax.f32 %v5408, %v5409
      %v5411 = vrot.slane %v5410, 1
      %v5412 = vmax.f32 %v5410, %v5411
      %v5413 = vmax.f32 %v4907, %v4909
      %v5414 = vrot.slane %v5413, 4
      %v5415 = vmax.f32 %v5413, %v5414
      %v5416 = vrot.slane %v5415, 2
      %v5417 = vmax.f32 %v5415, %v5416
      %v5418 = vrot.slane %v5417, 1
      %v5419 = vmax.f32 %v5417, %v5418
      %v5420 = vmax.f32 %v4908, %v4910
      %v5421 = vrot.slane %v5420, 4
      %v5422 = vmax.f32 %v5420, %v5421
      %v5423 = vrot.slane %v5422, 2
      %v5424 = vmax.f32 %v5422, %v5423
      %v5425 = vrot.slane %v5424, 1
      %v5426 = vmax.f32 %v5424, %v5425
      %v5427 = vmax.f32 %v4911, %v4913
      %v5428 = vrot.slane %v5427, 4
      %v5429 = vmax.f32 %v5427, %v5428
      %v5430 = vrot.slane %v5429, 2
      %v5431 = vmax.f32 %v5429, %v5430
      %v5432 = vrot.slane %v5431, 1
      %v5433 = vmax.f32 %v5431, %v5432
      %v5434 = vmax.f32 %v4912, %v4914
      %v5435 = vrot.slane %v5434, 4
      %v5436 = vmax.f32 %v5434, %v5435
      %v5437 = vrot.slane %v5436, 2
      %v5438 = vmax.f32 %v5436, %v5437
      %v5439 = vrot.slane %v5438, 1
      %v5440 = vmax.f32 %v5438, %v5439
      %v5441 = vmax.f32 %v4915, %v4917
      %v5442 = vrot.slane %v5441, 4
      %v5443 = vmax.f32 %v5441, %v5442
      %v5444 = vrot.slane %v5443, 2
      %v5445 = vmax.f32 %v5443, %v5444
      %v5446 = vrot.slane %v5445, 1
      %v5447 = vmax.f32 %v5445, %v5446
      %v5448 = vmax.f32 %v4916, %v4918
      %v5449 = vrot.slane %v5448, 4
      %v5450 = vmax.f32 %v5448, %v5449
      %v5451 = vrot.slane %v5450, 2
      %v5452 = vmax.f32 %v5450, %v5451
      %v5453 = vrot.slane %v5452, 1
      %v5454 = vmax.f32 %v5452, %v5453
      %v5455 = vmax.f32 %v4919, %v4921
      %v5456 = vrot.slane %v5455, 4
      %v5457 = vmax.f32 %v5455, %v5456
      %v5458 = vrot.slane %v5457, 2
      %v5459 = vmax.f32 %v5457, %v5458
      %v5460 = vrot.slane %v5459, 1
      %v5461 = vmax.f32 %v5459, %v5460
      %v5462 = vmax.f32 %v4920, %v4922
      %v5463 = vrot.slane %v5462, 4
      %v5464 = vmax.f32 %v5462, %v5463
      %v5465 = vrot.slane %v5464, 2
      %v5466 = vmax.f32 %v5464, %v5465
      %v5467 = vrot.slane %v5466, 1
      %v5468 = vmax.f32 %v5466, %v5467
      %v5469 = vmax.f32 %v4923, %v4925
      %v5470 = vrot.slane %v5469, 4
      %v5471 = vmax.f32 %v5469, %v5470
      %v5472 = vrot.slane %v5471, 2
      %v5473 = vmax.f32 %v5471, %v5472
      %v5474 = vrot.slane %v5473, 1
      %v5475 = vmax.f32 %v5473, %v5474
      %v5476 = vmax.f32 %v4924, %v4926
      %v5477 = vrot.slane %v5476, 4
      %v5478 = vmax.f32 %v5476, %v5477
      %v5479 = vrot.slane %v5478, 2
      %v5480 = vmax.f32 %v5478, %v5479
      %v5481 = vrot.slane %v5480, 1
      %v5482 = vmax.f32 %v5480, %v5481
      %v5483 = vmax.f32 %v4927, %v4929
      %v5484 = vrot.slane %v5483, 4
      %v5485 = vmax.f32 %v5483, %v5484
      %v5486 = vrot.slane %v5485, 2
      %v5487 = vmax.f32 %v5485, %v5486
      %v5488 = vrot.slane %v5487, 1
      %v5489 = vmax.f32 %v5487, %v5488
      %v5490 = vmax.f32 %v4928, %v4930
      %v5491 = vrot.slane %v5490, 4
      %v5492 = vmax.f32 %v5490, %v5491
      %v5493 = vrot.slane %v5492, 2
      %v5494 = vmax.f32 %v5492, %v5493
      %v5495 = vrot.slane %v5494, 1
      %v5496 = vmax.f32 %v5494, %v5495
      %v5497 = vmax.f32 %v4931, %v4933
      %v5498 = vrot.slane %v5497, 4
      %v5499 = vmax.f32 %v5497, %v5498
      %v5500 = vrot.slane %v5499, 2
      %v5501 = vmax.f32 %v5499, %v5500
      %v5502 = vrot.slane %v5501, 1
      %v5503 = vmax.f32 %v5501, %v5502
      %v5504 = vmax.f32 %v4932, %v4934
      %v5505 = vrot.slane %v5504, 4
      %v5506 = vmax.f32 %v5504, %v5505
      %v5507 = vrot.slane %v5506, 2
      %v5508 = vmax.f32 %v5506, %v5507
      %v5509 = vrot.slane %v5508, 1
      %v5510 = vmax.f32 %v5508, %v5509
      %v5511 = vmax.f32 %v4935, %v4937
      %v5512 = vrot.slane %v5511, 4
      %v5513 = vmax.f32 %v5511, %v5512
      %v5514 = vrot.slane %v5513, 2
      %v5515 = vmax.f32 %v5513, %v5514
      %v5516 = vrot.slane %v5515, 1
      %v5517 = vmax.f32 %v5515, %v5516
      %v5518 = vmax.f32 %v4936, %v4938
      %v5519 = vrot.slane %v5518, 4
      %v5520 = vmax.f32 %v5518, %v5519
      %v5521 = vrot.slane %v5520, 2
      %v5522 = vmax.f32 %v5520, %v5521
      %v5523 = vrot.slane %v5522, 1
      %v5524 = vmax.f32 %v5522, %v5523
      %v5525 = vmax.f32 %v4939, %v4941
      %v5526 = vrot.slane %v5525, 4
      %v5527 = vmax.f32 %v5525, %v5526
      %v5528 = vrot.slane %v5527, 2
      %v5529 = vmax.f32 %v5527, %v5528
      %v5530 = vrot.slane %v5529, 1
      %v5531 = vmax.f32 %v5529, %v5530
      %v5532 = vmax.f32 %v4940, %v4942
      %v5533 = vrot.slane %v5532, 4
      %v5534 = vmax.f32 %v5532, %v5533
      %v5535 = vrot.slane %v5534, 2
      %v5536 = vmax.f32 %v5534, %v5535
      %v5537 = vrot.slane %v5536, 1
      %v5538 = vmax.f32 %v5536, %v5537
      %v5539 = vmax.f32 %v4943, %v4945
      %v5540 = vrot.slane %v5539, 4
      %v5541 = vmax.f32 %v5539, %v5540
      %v5542 = vrot.slane %v5541, 2
      %v5543 = vmax.f32 %v5541, %v5542
      %v5544 = vrot.slane %v5543, 1
      %v5545 = vmax.f32 %v5543, %v5544
      %v5546 = vmax.f32 %v4944, %v4946
      %v5547 = vrot.slane %v5546, 4
      %v5548 = vmax.f32 %v5546, %v5547
      %v5549 = vrot.slane %v5548, 2
      %v5550 = vmax.f32 %v5548, %v5549
      %v5551 = vrot.slane %v5550, 1
      %v5552 = vmax.f32 %v5550, %v5551
      %v5553 = vmax.f32 %v4947, %v4949
      %v5554 = vrot.slane %v5553, 4
      %v5555 = vmax.f32 %v5553, %v5554
      %v5556 = vrot.slane %v5555, 2
      %v5557 = vmax.f32 %v5555, %v5556
      %v5558 = vrot.slane %v5557, 1
      %v5559 = vmax.f32 %v5557, %v5558
      %v5560 = vmax.f32 %v4948, %v4950
      %v5561 = vrot.slane %v5560, 4
      %v5562 = vmax.f32 %v5560, %v5561
      %v5563 = vrot.slane %v5562, 2
      %v5564 = vmax.f32 %v5562, %v5563
      %v5565 = vrot.slane %v5564, 1
      %v5566 = vmax.f32 %v5564, %v5565
      %v5567 = vmax.f32 %v4951, %v4953
      %v5568 = vrot.slane %v5567, 4
      %v5569 = vmax.f32 %v5567, %v5568
      %v5570 = vrot.slane %v5569, 2
      %v5571 = vmax.f32 %v5569, %v5570
      %v5572 = vrot.slane %v5571, 1
      %v5573 = vmax.f32 %v5571, %v5572
      %v5574 = vmax.f32 %v4952, %v4954
      %v5575 = vrot.slane %v5574, 4
      %v5576 = vmax.f32 %v5574, %v5575
      %v5577 = vrot.slane %v5576, 2
      %v5578 = vmax.f32 %v5576, %v5577
      %v5579 = vrot.slane %v5578, 1
      %v5580 = vmax.f32 %v5578, %v5579
      %v5581 = vmax.f32 %v4955, %v4957
      %v5582 = vrot.slane %v5581, 4
      %v5583 = vmax.f32 %v5581, %v5582
      %v5584 = vrot.slane %v5583, 2
      %v5585 = vmax.f32 %v5583, %v5584
      %v5586 = vrot.slane %v5585, 1
      %v5587 = vmax.f32 %v5585, %v5586
      %v5588 = vmax.f32 %v4956, %v4958
      %v5589 = vrot.slane %v5588, 4
      %v5590 = vmax.f32 %v5588, %v5589
      %v5591 = vrot.slane %v5590, 2
      %v5592 = vmax.f32 %v5590, %v5591
      %v5593 = vrot.slane %v5592, 1
      %v5594 = vmax.f32 %v5592, %v5593
      %v5595 = vmax.f32 %v4959, %v4961
      %v5596 = vrot.slane %v5595, 4
      %v5597 = vmax.f32 %v5595, %v5596
      %v5598 = vrot.slane %v5597, 2
      %v5599 = vmax.f32 %v5597, %v5598
      %v5600 = vrot.slane %v5599, 1
      %v5601 = vmax.f32 %v5599, %v5600
      %v5602 = vmax.f32 %v4960, %v4962
      %v5603 = vrot.slane %v5602, 4
      %v5604 = vmax.f32 %v5602, %v5603
      %v5605 = vrot.slane %v5604, 2
      %v5606 = vmax.f32 %v5604, %v5605
      %v5607 = vrot.slane %v5606, 1
      %v5608 = vmax.f32 %v5606, %v5607
      %v5609 = vmax.f32 %v4963, %v4965
      %v5610 = vrot.slane %v5609, 4
      %v5611 = vmax.f32 %v5609, %v5610
      %v5612 = vrot.slane %v5611, 2
      %v5613 = vmax.f32 %v5611, %v5612
      %v5614 = vrot.slane %v5613, 1
      %v5615 = vmax.f32 %v5613, %v5614
      %v5616 = vmax.f32 %v4964, %v4966
      %v5617 = vrot.slane %v5616, 4
      %v5618 = vmax.f32 %v5616, %v5617
      %v5619 = vrot.slane %v5618, 2
      %v5620 = vmax.f32 %v5618, %v5619
      %v5621 = vrot.slane %v5620, 1
      %v5622 = vmax.f32 %v5620, %v5621
      %v5623 = vmax.f32 %v4967, %v4969
      %v5624 = vrot.slane %v5623, 4
      %v5625 = vmax.f32 %v5623, %v5624
      %v5626 = vrot.slane %v5625, 2
      %v5627 = vmax.f32 %v5625, %v5626
      %v5628 = vrot.slane %v5627, 1
      %v5629 = vmax.f32 %v5627, %v5628
      %v5630 = vmax.f32 %v4968, %v4970
      %v5631 = vrot.slane %v5630, 4
      %v5632 = vmax.f32 %v5630, %v5631
      %v5633 = vrot.slane %v5632, 2
      %v5634 = vmax.f32 %v5632, %v5633
      %v5635 = vrot.slane %v5634, 1
      %v5636 = vmax.f32 %v5634, %v5635
      %v5637 = vmax.f32 %v4971, %v4973
      %v5638 = vrot.slane %v5637, 4
      %v5639 = vmax.f32 %v5637, %v5638
      %v5640 = vrot.slane %v5639, 2
      %v5641 = vmax.f32 %v5639, %v5640
      %v5642 = vrot.slane %v5641, 1
      %v5643 = vmax.f32 %v5641, %v5642
      %v5644 = vmax.f32 %v4972, %v4974
      %v5645 = vrot.slane %v5644, 4
      %v5646 = vmax.f32 %v5644, %v5645
      %v5647 = vrot.slane %v5646, 2
      %v5648 = vmax.f32 %v5646, %v5647
      %v5649 = vrot.slane %v5648, 1
      %v5650 = vmax.f32 %v5648, %v5649
      %v5651 = vmax.f32 %v4975, %v4977
      %v5652 = vrot.slane %v5651, 4
      %v5653 = vmax.f32 %v5651, %v5652
      %v5654 = vrot.slane %v5653, 2
      %v5655 = vmax.f32 %v5653, %v5654
      %v5656 = vrot.slane %v5655, 1
      %v5657 = vmax.f32 %v5655, %v5656
      %v5658 = vmax.f32 %v4976, %v4978
      %v5659 = vrot.slane %v5658, 4
      %v5660 = vmax.f32 %v5658, %v5659
      %v5661 = vrot.slane %v5660, 2
      %v5662 = vmax.f32 %v5660, %v5661
      %v5663 = vrot.slane %v5662, 1
      %v5664 = vmax.f32 %v5662, %v5663
      %v5665 = vmax.f32 %v4979, %v4981
      %v5666 = vrot.slane %v5665, 4
      %v5667 = vmax.f32 %v5665, %v5666
      %v5668 = vrot.slane %v5667, 2
      %v5669 = vmax.f32 %v5667, %v5668
      %v5670 = vrot.slane %v5669, 1
      %v5671 = vmax.f32 %v5669, %v5670
      %v5672 = vmax.f32 %v4980, %v4982
      %v5673 = vrot.slane %v5672, 4
      %v5674 = vmax.f32 %v5672, %v5673
      %v5675 = vrot.slane %v5674, 2
      %v5676 = vmax.f32 %v5674, %v5675
      %v5677 = vrot.slane %v5676, 1
      %v5678 = vmax.f32 %v5676, %v5677
      %v5679 = vmax.f32 %v4983, %v4985
      %v5680 = vrot.slane %v5679, 4
      %v5681 = vmax.f32 %v5679, %v5680
      %v5682 = vrot.slane %v5681, 2
      %v5683 = vmax.f32 %v5681, %v5682
      %v5684 = vrot.slane %v5683, 1
      %v5685 = vmax.f32 %v5683, %v5684
      %v5686 = vmax.f32 %v4984, %v4986
      %v5687 = vrot.slane %v5686, 4
      %v5688 = vmax.f32 %v5686, %v5687
      %v5689 = vrot.slane %v5688, 2
      %v5690 = vmax.f32 %v5688, %v5689
      %v5691 = vrot.slane %v5690, 1
      %v5692 = vmax.f32 %v5690, %v5691
      %v5693 = vmax.f32 %v4987, %v4989
      %v5694 = vrot.slane %v5693, 4
      %v5695 = vmax.f32 %v5693, %v5694
      %v5696 = vrot.slane %v5695, 2
      %v5697 = vmax.f32 %v5695, %v5696
      %v5698 = vrot.slane %v5697, 1
      %v5699 = vmax.f32 %v5697, %v5698
      %v5700 = vmax.f32 %v4988, %v4990
      %v5701 = vrot.slane %v5700, 4
      %v5702 = vmax.f32 %v5700, %v5701
      %v5703 = vrot.slane %v5702, 2
      %v5704 = vmax.f32 %v5702, %v5703
      %v5705 = vrot.slane %v5704, 1
      %v5706 = vmax.f32 %v5704, %v5705
      %v5707 = vmax.f32 %v4991, %v4993
      %v5708 = vrot.slane %v5707, 4
      %v5709 = vmax.f32 %v5707, %v5708
      %v5710 = vrot.slane %v5709, 2
      %v5711 = vmax.f32 %v5709, %v5710
      %v5712 = vrot.slane %v5711, 1
      %v5713 = vmax.f32 %v5711, %v5712
      %v5714 = vmax.f32 %v4992, %v4994
      %v5715 = vrot.slane %v5714, 4
      %v5716 = vmax.f32 %v5714, %v5715
      %v5717 = vrot.slane %v5716, 2
      %v5718 = vmax.f32 %v5716, %v5717
      %v5719 = vrot.slane %v5718, 1
      %v5720 = vmax.f32 %v5718, %v5719
      %v5721 = vmax.f32 %v4995, %v4997
      %v5722 = vrot.slane %v5721, 4
      %v5723 = vmax.f32 %v5721, %v5722
      %v5724 = vrot.slane %v5723, 2
      %v5725 = vmax.f32 %v5723, %v5724
      %v5726 = vrot.slane %v5725, 1
      %v5727 = vmax.f32 %v5725, %v5726
      %v5728 = vmax.f32 %v4996, %v4998
      %v5729 = vrot.slane %v5728, 4
      %v5730 = vmax.f32 %v5728, %v5729
      %v5731 = vrot.slane %v5730, 2
      %v5732 = vmax.f32 %v5730, %v5731
      %v5733 = vrot.slane %v5732, 1
      %v5734 = vmax.f32 %v5732, %v5733
      %v5735 = vmax.f32 %v4999, %v5001
      %v5736 = vrot.slane %v5735, 4
      %v5737 = vmax.f32 %v5735, %v5736
      %v5738 = vrot.slane %v5737, 2
      %v5739 = vmax.f32 %v5737, %v5738
      %v5740 = vrot.slane %v5739, 1
      %v5741 = vmax.f32 %v5739, %v5740
      %v5742 = vmax.f32 %v5000, %v5002
      %v5743 = vrot.slane %v5742, 4
      %v5744 = vmax.f32 %v5742, %v5743
      %v5745 = vrot.slane %v5744, 2
      %v5746 = vmax.f32 %v5744, %v5745
      %v5747 = vrot.slane %v5746, 1
      %v5748 = vmax.f32 %v5746, %v5747
      %v5749 = vmax.f32 %v5003, %v5005
      %v5750 = vrot.slane %v5749, 4
      %v5751 = vmax.f32 %v5749, %v5750
      %v5752 = vrot.slane %v5751, 2
      %v5753 = vmax.f32 %v5751, %v5752
      %v5754 = vrot.slane %v5753, 1
      %v5755 = vmax.f32 %v5753, %v5754
      %v5756 = vmax.f32 %v5004, %v5006
      %v5757 = vrot.slane %v5756, 4
      %v5758 = vmax.f32 %v5756, %v5757
      %v5759 = vrot.slane %v5758, 2
      %v5760 = vmax.f32 %v5758, %v5759
      %v5761 = vrot.slane %v5760, 1
      %v5762 = vmax.f32 %v5760, %v5761
      %v5763 = vmax.f32 %v5007, %v5009
      %v5764 = vrot.slane %v5763, 4
      %v5765 = vmax.f32 %v5763, %v5764
      %v5766 = vrot.slane %v5765, 2
      %v5767 = vmax.f32 %v5765, %v5766
      %v5768 = vrot.slane %v5767, 1
      %v5769 = vmax.f32 %v5767, %v5768
      %v5770 = vmax.f32 %v5008, %v5010
      %v5771 = vrot.slane %v5770, 4
      %v5772 = vmax.f32 %v5770, %v5771
      %v5773 = vrot.slane %v5772, 2
      %v5774 = vmax.f32 %v5772, %v5773
      %v5775 = vrot.slane %v5774, 1
      %v5776 = vmax.f32 %v5774, %v5775
      %v5777 = vmax.f32 %v5011, %v5013
      %v5778 = vrot.slane %v5777, 4
      %v5779 = vmax.f32 %v5777, %v5778
      %v5780 = vrot.slane %v5779, 2
      %v5781 = vmax.f32 %v5779, %v5780
      %v5782 = vrot.slane %v5781, 1
      %v5783 = vmax.f32 %v5781, %v5782
      %v5784 = vmax.f32 %v5012, %v5014
      %v5785 = vrot.slane %v5784, 4
      %v5786 = vmax.f32 %v5784, %v5785
      %v5787 = vrot.slane %v5786, 2
      %v5788 = vmax.f32 %v5786, %v5787
      %v5789 = vrot.slane %v5788, 1
      %v5790 = vmax.f32 %v5788, %v5789
      %v5791 = vmax.f32 %v5015, %v5017
      %v5792 = vrot.slane %v5791, 4
      %v5793 = vmax.f32 %v5791, %v5792
      %v5794 = vrot.slane %v5793, 2
      %v5795 = vmax.f32 %v5793, %v5794
      %v5796 = vrot.slane %v5795, 1
      %v5797 = vmax.f32 %v5795, %v5796
      %v5798 = vmax.f32 %v5016, %v5018
      %v5799 = vrot.slane %v5798, 4
      %v5800 = vmax.f32 %v5798, %v5799
      %v5801 = vrot.slane %v5800, 2
      %v5802 = vmax.f32 %v5800, %v5801
      %v5803 = vrot.slane %v5802, 1
      %v5804 = vmax.f32 %v5802, %v5803
      %v5805 = vmax.f32 %v5019, %v5021
      %v5806 = vrot.slane %v5805, 4
      %v5807 = vmax.f32 %v5805, %v5806
      %v5808 = vrot.slane %v5807, 2
      %v5809 = vmax.f32 %v5807, %v5808
      %v5810 = vrot.slane %v5809, 1
      %v5811 = vmax.f32 %v5809, %v5810
      %v5812 = vmax.f32 %v5020, %v5022
      %v5813 = vrot.slane %v5812, 4
      %v5814 = vmax.f32 %v5812, %v5813
      %v5815 = vrot.slane %v5814, 2
      %v5816 = vmax.f32 %v5814, %v5815
      %v5817 = vrot.slane %v5816, 1
      %v5818 = vmax.f32 %v5816, %v5817
      %v5819 = vmax.f32 %v5023, %v5025
      %v5820 = vrot.slane %v5819, 4
      %v5821 = vmax.f32 %v5819, %v5820
      %v5822 = vrot.slane %v5821, 2
      %v5823 = vmax.f32 %v5821, %v5822
      %v5824 = vrot.slane %v5823, 1
      %v5825 = vmax.f32 %v5823, %v5824
      %v5826 = vmax.f32 %v5024, %v5026
      %v5827 = vrot.slane %v5826, 4
      %v5828 = vmax.f32 %v5826, %v5827
      %v5829 = vrot.slane %v5828, 2
      %v5830 = vmax.f32 %v5828, %v5829
      %v5831 = vrot.slane %v5830, 1
      %v5832 = vmax.f32 %v5830, %v5831
      %v5833 = vmax.f32 %v5027, %v5029
      %v5834 = vrot.slane %v5833, 4
      %v5835 = vmax.f32 %v5833, %v5834
      %v5836 = vrot.slane %v5835, 2
      %v5837 = vmax.f32 %v5835, %v5836
      %v5838 = vrot.slane %v5837, 1
      %v5839 = vmax.f32 %v5837, %v5838
      %v5840 = vmax.f32 %v5028, %v5030
      %v5841 = vrot.slane %v5840, 4
      %v5842 = vmax.f32 %v5840, %v5841
      %v5843 = vrot.slane %v5842, 2
      %v5844 = vmax.f32 %v5842, %v5843
      %v5845 = vrot.slane %v5844, 1
      %v5846 = vmax.f32 %v5844, %v5845
      %v5847 = vmax.f32 %v5031, %v5033
      %v5848 = vrot.slane %v5847, 4
      %v5849 = vmax.f32 %v5847, %v5848
      %v5850 = vrot.slane %v5849, 2
      %v5851 = vmax.f32 %v5849, %v5850
      %v5852 = vrot.slane %v5851, 1
      %v5853 = vmax.f32 %v5851, %v5852
      %v5854 = vmax.f32 %v5032, %v5034
      %v5855 = vrot.slane %v5854, 4
      %v5856 = vmax.f32 %v5854, %v5855
      %v5857 = vrot.slane %v5856, 2
      %v5858 = vmax.f32 %v5856, %v5857
      %v5859 = vrot.slane %v5858, 1
      %v5860 = vmax.f32 %v5858, %v5859
      %v5861 = vmax.f32 %v5035, %v5037
      %v5862 = vrot.slane %v5861, 4
      %v5863 = vmax.f32 %v5861, %v5862
      %v5864 = vrot.slane %v5863, 2
      %v5865 = vmax.f32 %v5863, %v5864
      %v5866 = vrot.slane %v5865, 1
      %v5867 = vmax.f32 %v5865, %v5866
      %v5868 = vmax.f32 %v5036, %v5038
      %v5869 = vrot.slane %v5868, 4
      %v5870 = vmax.f32 %v5868, %v5869
      %v5871 = vrot.slane %v5870, 2
      %v5872 = vmax.f32 %v5870, %v5871
      %v5873 = vrot.slane %v5872, 1
      %v5874 = vmax.f32 %v5872, %v5873
      %v5875 = vmax.f32 %v5039, %v5041
      %v5876 = vrot.slane %v5875, 4
      %v5877 = vmax.f32 %v5875, %v5876
      %v5878 = vrot.slane %v5877, 2
      %v5879 = vmax.f32 %v5877, %v5878
      %v5880 = vrot.slane %v5879, 1
      %v5881 = vmax.f32 %v5879, %v5880
      %v5882 = vmax.f32 %v5040, %v5042
      %v5883 = vrot.slane %v5882, 4
      %v5884 = vmax.f32 %v5882, %v5883
      %v5885 = vrot.slane %v5884, 2
      %v5886 = vmax.f32 %v5884, %v5885
      %v5887 = vrot.slane %v5886, 1
      %v5888 = vmax.f32 %v5886, %v5887
      %v5889 = vmax.f32 %v5043, %v5045
      %v5890 = vrot.slane %v5889, 4
      %v5891 = vmax.f32 %v5889, %v5890
      %v5892 = vrot.slane %v5891, 2
      %v5893 = vmax.f32 %v5891, %v5892
      %v5894 = vrot.slane %v5893, 1
      %v5895 = vmax.f32 %v5893, %v5894
      %v5896 = vmax.f32 %v5044, %v5046
      %v5897 = vrot.slane %v5896, 4
      %v5898 = vmax.f32 %v5896, %v5897
      %v5899 = vrot.slane %v5898, 2
      %v5900 = vmax.f32 %v5898, %v5899
      %v5901 = vrot.slane %v5900, 1
      %v5902 = vmax.f32 %v5900, %v5901
      %v5903 = vmax.f32 %v5047, %v5049
      %v5904 = vrot.slane %v5903, 4
      %v5905 = vmax.f32 %v5903, %v5904
      %v5906 = vrot.slane %v5905, 2
      %v5907 = vmax.f32 %v5905, %v5906
      %v5908 = vrot.slane %v5907, 1
      %v5909 = vmax.f32 %v5907, %v5908
      %v5910 = vmax.f32 %v5048, %v5050
      %v5911 = vrot.slane %v5910, 4
      %v5912 = vmax.f32 %v5910, %v5911
      %v5913 = vrot.slane %v5912, 2
      %v5914 = vmax.f32 %v5912, %v5913
      %v5915 = vrot.slane %v5914, 1
      %v5916 = vmax.f32 %v5914, %v5915
      %v5917 = vmax.f32 %v5051, %v5053
      %v5918 = vrot.slane %v5917, 4
      %v5919 = vmax.f32 %v5917, %v5918
      %v5920 = vrot.slane %v5919, 2
      %v5921 = vmax.f32 %v5919, %v5920
      %v5922 = vrot.slane %v5921, 1
      %v5923 = vmax.f32 %v5921, %v5922
      %v5924 = vmax.f32 %v5052, %v5054
      %v5925 = vrot.slane %v5924, 4
      %v5926 = vmax.f32 %v5924, %v5925
      %v5927 = vrot.slane %v5926, 2
      %v5928 = vmax.f32 %v5926, %v5927
      %v5929 = vrot.slane %v5928, 1
      %v5930 = vmax.f32 %v5928, %v5929
      %v5931 = vmax.f32 %v5055, %v5057
      %v5932 = vrot.slane %v5931, 4
      %v5933 = vmax.f32 %v5931, %v5932
      %v5934 = vrot.slane %v5933, 2
      %v5935 = vmax.f32 %v5933, %v5934
      %v5936 = vrot.slane %v5935, 1
      %v5937 = vmax.f32 %v5935, %v5936
      %v5938 = vmax.f32 %v5056, %v5058
      %v5939 = vrot.slane %v5938, 4
      %v5940 = vmax.f32 %v5938, %v5939
      %v5941 = vrot.slane %v5940, 2
      %v5942 = vmax.f32 %v5940, %v5941
      %v5943 = vrot.slane %v5942, 1
      %v5944 = vmax.f32 %v5942, %v5943
      %v5945 = vmax.f32 %v5059, %v5061
      %v5946 = vrot.slane %v5945, 4
      %v5947 = vmax.f32 %v5945, %v5946
      %v5948 = vrot.slane %v5947, 2
      %v5949 = vmax.f32 %v5947, %v5948
      %v5950 = vrot.slane %v5949, 1
      %v5951 = vmax.f32 %v5949, %v5950
      %v5952 = vmax.f32 %v5060, %v5062
      %v5953 = vrot.slane %v5952, 4
      %v5954 = vmax.f32 %v5952, %v5953
      %v5955 = vrot.slane %v5954, 2
      %v5956 = vmax.f32 %v5954, %v5955
      %v5957 = vrot.slane %v5956, 1
      %v5958 = vmax.f32 %v5956, %v5957
      %vm6087 = vcmask 1041409
      %v6088 = vsel %vm6087, %v5083, %v5069
      %vm6089 = vcmask 1042434
      %v6090 = vsel %vm6089, %v5097, %v6088
      %vm6091 = vcmask 1043459
      %v6092 = vsel %vm6091, %v5111, %v6090
      %vm6093 = vcmask 1044484
      %v6094 = vsel %vm6093, %v5125, %v6092
      %vm6095 = vcmask 1045509
      %v6096 = vsel %vm6095, %v5139, %v6094
      %vm6097 = vcmask 1046534
      %v6098 = vsel %vm6097, %v5153, %v6096
      %vm6099 = vcmask 1047559
      %v6100 = vsel %vm6099, %v5167, %v6098
      %v6101 = vsel %vm6087, %v5090, %v5076
      %v6102 = vsel %vm6089, %v5104, %v6101
      %v6103 = vsel %vm6091, %v5118, %v6102
      %v6104 = vsel %vm6093, %v5132, %v6103
      %v6105 = vsel %vm6095, %v5146, %v6104
      %v6106 = vsel %vm6097, %v5160, %v6105
      %v6107 = vsel %vm6099, %v5174, %v6106
      %v6108 = vsel %vm6087, %v5195, %v5181
      %v6109 = vsel %vm6089, %v5209, %v6108
      %v6110 = vsel %vm6091, %v5223, %v6109
      %v6111 = vsel %vm6093, %v5237, %v6110
      %v6112 = vsel %vm6095, %v5251, %v6111
      %v6113 = vsel %vm6097, %v5265, %v6112
      %v6114 = vsel %vm6099, %v5279, %v6113
      %v6115 = vsel %vm6087, %v5202, %v5188
      %v6116 = vsel %vm6089, %v5216, %v6115
      %v6117 = vsel %vm6091, %v5230, %v6116
      %v6118 = vsel %vm6093, %v5244, %v6117
      %v6119 = vsel %vm6095, %v5258, %v6118
      %v6120 = vsel %vm6097, %v5272, %v6119
      %v6121 = vsel %vm6099, %v5286, %v6120
      %v6122 = vsel %vm6087, %v5307, %v5293
      %v6123 = vsel %vm6089, %v5321, %v6122
      %v6124 = vsel %vm6091, %v5335, %v6123
      %v6125 = vsel %vm6093, %v5349, %v6124
      %v6126 = vsel %vm6095, %v5363, %v6125
      %v6127 = vsel %vm6097, %v5377, %v6126
      %v6128 = vsel %vm6099, %v5391, %v6127
      %v6129 = vsel %vm6087, %v5314, %v5300
      %v6130 = vsel %vm6089, %v5328, %v6129
      %v6131 = vsel %vm6091, %v5342, %v6130
      %v6132 = vsel %vm6093, %v5356, %v6131
      %v6133 = vsel %vm6095, %v5370, %v6132
      %v6134 = vsel %vm6097, %v5384, %v6133
      %v6135 = vsel %vm6099, %v5398, %v6134
      %v6136 = vsel %vm6087, %v5419, %v5405
      %v6137 = vsel %vm6089, %v5433, %v6136
      %v6138 = vsel %vm6091, %v5447, %v6137
      %v6139 = vsel %vm6093, %v5461, %v6138
      %v6140 = vsel %vm6095, %v5475, %v6139
      %v6141 = vsel %vm6097, %v5489, %v6140
      %v6142 = vsel %vm6099, %v5503, %v6141
      %v6143 = vsel %vm6087, %v5426, %v5412
      %v6144 = vsel %vm6089, %v5440, %v6143
      %v6145 = vsel %vm6091, %v5454, %v6144
      %v6146 = vsel %vm6093, %v5468, %v6145
      %v6147 = vsel %vm6095, %v5482, %v6146
      %v6148 = vsel %vm6097, %v5496, %v6147
      %v6149 = vsel %vm6099, %v5510, %v6148
      %v6150 = vsel %vm6087, %v5531, %v5517
      %v6151 = vsel %vm6089, %v5545, %v6150
      %v6152 = vsel %vm6091, %v5559, %v6151
      %v6153 = vsel %vm6093, %v5573, %v6152
      %v6154 = vsel %vm6095, %v5587, %v6153
      %v6155 = vsel %vm6097, %v5601, %v6154
      %v6156 = vsel %vm6099, %v5615, %v6155
      %v6157 = vsel %vm6087, %v5538, %v5524
      %v6158 = vsel %vm6089, %v5552, %v6157
      %v6159 = vsel %vm6091, %v5566, %v6158
      %v6160 = vsel %vm6093, %v5580, %v6159
      %v6161 = vsel %vm6095, %v5594, %v6160
      %v6162 = vsel %vm6097, %v5608, %v6161
      %v6163 = vsel %vm6099, %v5622, %v6162
      %v6164 = vsel %vm6087, %v5643, %v5629
      %v6165 = vsel %vm6089, %v5657, %v6164
      %v6166 = vsel %vm6091, %v5671, %v6165
      %v6167 = vsel %vm6093, %v5685, %v6166
      %v6168 = vsel %vm6095, %v5699, %v6167
      %v6169 = vsel %vm6097, %v5713, %v6168
      %v6170 = vsel %vm6099, %v5727, %v6169
      %v6171 = vsel %vm6087, %v5650, %v5636
      %v6172 = vsel %vm6089, %v5664, %v6171
      %v6173 = vsel %vm6091, %v5678, %v6172
      %v6174 = vsel %vm6093, %v5692, %v6173
      %v6175 = vsel %vm6095, %v5706, %v6174
      %v6176 = vsel %vm6097, %v5720, %v6175
      %v6177 = vsel %vm6099, %v5734, %v6176
      %v6178 = vsel %vm6087, %v5755, %v5741
      %v6179 = vsel %vm6089, %v5769, %v6178
      %v6180 = vsel %vm6091, %v5783, %v6179
      %v6181 = vsel %vm6093, %v5797, %v6180
      %v6182 = vsel %vm6095, %v5811, %v6181
      %v6183 = vsel %vm6097, %v5825, %v6182
      %v6184 = vsel %vm6099, %v5839, %v6183
      %v6185 = vsel %vm6087, %v5762, %v5748
      %v6186 = vsel %vm6089, %v5776, %v6185
      %v6187 = vsel %vm6091, %v5790, %v6186
      %v6188 = vsel %vm6093, %v5804, %v6187
      %v6189 = vsel %vm6095, %v5818, %v6188
      %v6190 = vsel %vm6097, %v5832, %v6189
      %v6191 = vsel %vm6099, %v5846, %v6190
      %v6192 = vsel %vm6087, %v5867, %v5853
      %v6193 = vsel %vm6089, %v5881, %v6192
      %v6194 = vsel %vm6091, %v5895, %v6193
      %v6195 = vsel %vm6093, %v5909, %v6194
      %v6196 = vsel %vm6095, %v5923, %v6195
      %v6197 = vsel %vm6097, %v5937, %v6196
      %v6198 = vsel %vm6099, %v5951, %v6197
      %v6199 = vsel %vm6087, %v5874, %v5860
      %v6200 = vsel %vm6089, %v5888, %v6199
      %v6201 = vsel %vm6091, %v5902, %v6200
      %v6202 = vsel %vm6093, %v5916, %v6201
      %v6203 = vsel %vm6095, %v5930, %v6202
      %v6204 = vsel %vm6097, %v5944, %v6203
      %v6205 = vsel %vm6099, %v5958, %v6204
      %6222 = vst [vmem:[%s282] sm:$0xff] %v6100
      %6223 = vst [vmem:[%s282 + $0x8] sm:$0xff] %v6107
      %6224 = vst [vmem:[%s282 + $0x10] sm:$0xff] %v6114
      %6225 = vst [vmem:[%s282 + $0x18] sm:$0xff] %v6121
      %6226 = vst [vmem:[%s282 + $0x20] sm:$0xff] %v6128
      %6227 = vst [vmem:[%s282 + $0x28] sm:$0xff] %v6135
      %6228 = vst [vmem:[%s282 + $0x30] sm:$0xff] %v6142
      %6229 = vst [vmem:[%s282 + $0x38] sm:$0xff] %v6149
      %6230 = vst [vmem:[%s282 + $0x40] sm:$0xff] %v6156
      %6231 = vst [vmem:[%s282 + $0x48] sm:$0xff] %v6163
      %6232 = vst [vmem:[%s282 + $0x50] sm:$0xff] %v6170
      %6233 = vst [vmem:[%s282 + $0x58] sm:$0xff] %v6177
      %6234 = vst [vmem:[%s282 + $0x60] sm:$0xff] %v6184
      %6235 = vst [vmem:[%s282 + $0x68] sm:$0xff] %v6191
      %6236 = vst [vmem:[%s282 + $0x70] sm:$0xff] %v6198
      %6237 = vst [vmem:[%s282 + $0x78] sm:$0xff] %v6205
      %s6238 = smul.u32 8, %s18
      %p6239 = scmp.lt.s32.totalorder %s6238, 63
      %s6240 = scalar_select %p6239, %s6238, 63
      %s6241 = smul.addr %s6240, 2
      %s6242 = smul.addr %s6241, 8
      %s6243 = scalar_lea.vmem %s7, %s6242
      // Predicated region
      $region49: #{_lambda_.1} parent=47 // pred_check
        %p6244 = pneg %p188
      $region50: #{_lambda_.1} parent=47 // pred_check_branch
        %6246 = sbr.rel (%p6244) target = $region52
      $region51: #{_lambda_.1} parent=47 // pred_region
        %s6247 = smul.u32 8, %s18
      $region52: #{_lambda_.1} parent=47 // pred_fallthru
        _
    $region48: #{_lambda_.1} parent=5 // pred_fallthru
      _
    %p6248 = scmp.le.s32.totalorder 2, %s13
    // Predicated region
    $region53: #{_lambda_.1} parent=5 // pred_check
      %p6249 = pneg %p6248
    $region54: #{_lambda_.1} parent=5 // pred_check_branch
      %6251 = sbr.rel (%p6249) target = $region56
    $region55: #{_lambda_.1} parent=5 // pred_region
      %s6252 = ssub.s32 %s13, 2
      // Predicated region
      $region57: #{_lambda_.1} parent=55 // pred_check
        %p6253 = pneg %p194
      $region58: #{_lambda_.1} parent=55 // pred_check_branch
        %6255 = sbr.rel (%p6253) target = $region60
      $region59: #{_lambda_.1} parent=55 // pred_region
        %s6256 = smul.u32 8, %s19
        %p6257 = scmp.lt.s32.totalorder %s6256, 63
        %s6258 = scalar_select %p6257, %s6256, 63
        %s6259 = smul.addr %s6258, 2
        %s6260 = smul.addr %s6259, 8
        %s6261 = scalar_lea.vmem %s7, %s6260
      $region60: #{_lambda_.1} parent=55 // pred_fallthru
        _
    $region56: #{_lambda_.1} parent=5 // pred_fallthru
      _
  $region6: #{_lambda_.1} parent=0 // loop_footer
    %s17 = sadd.s32 1, %s13
  $region7: #{_lambda_.1} parent=0 // loop_footer_branch
    %12 = sbr.rel target = $region3
  $region8: #{_lambda_.1} parent=0 // loop_exit
    _

</llo_original>
